<compile_context>
chip_gen: v7x
topology: tpu7x:2x2x1
jax: 0.10.0
libtpu: 0.0.40
codegen_flags: <defaults>
</compile_context>

<pallas_src>
import jax
import jax.numpy as jnp
from jax import lax
from jax.experimental import pallas as pl
from jax.experimental.pallas import tpu as pltpu

LANE = 128


def _round_up(x, m):
    return ((x + m - 1) // m) * m


@jax.jit
def iclassifier_forward(x_nchw, wconv_hwio, bconv, wfc, bfc):
    """x_nchw: [N,C,H,W] f32 (PyTorch layout). Returns (feats [N,F], c [N,OUT])."""
    x_nhwc = jnp.transpose(x_nchw, (0, 2, 3, 1))
    n, h, w, c = x_nhwc.shape
    k = wconv_hwio.shape[0]
    assert k == 3, "feature extractor instantiated as a 3x3 SAME conv"
    f = wconv_hwio.shape[-1]
    out = wfc.shape[-1]

    c_pad = _round_up(c, 8)          # contraction dim: 8-sublane aligned, NOT 128
    f_pad = _round_up(f, LANE)       # lane-dense conv output / feats
    out_pad = _round_up(out, LANE)   # lane-dense classifier output

    # Halo-padded flattened image.  Rows padded (1 top, 2 bottom), cols (1, 1):
    # the extra bottom row lets every one of the 9 shifted slices have the
    # same static length H*T without running off the end of the buffer.
    t = w + 2                        # padded width
    s_rows = h + 3                   # padded height (+1 extra zero row)
    st = s_rows * t
    ht = h * t                       # rows per shifted matmul (>=256 for MXU)
    inv_hw = 1.0 / float(h * w)

    # ---- operand prep (cheap plain-JAX glue; no 9x im2col blow-up) ----------
    # Image kept f32 (tiny stream); the 9 unaligned sublane slices are taken in
    # f32 inside the kernel and cast to bf16 right before each MXU matmul.
    xp = jnp.pad(x_nhwc, ((0, 0), (1, 2), (1, 1), (0, c_pad - c)))
    xp = xp.reshape(n, st, c_pad)                                  # [N, S*T, Cp] f32

    # Conv weight as 9 [Cp, Fp] bf16 slices, slice s = dy*3 + dx.
    wc = jnp.pad(wconv_hwio, ((0, 0), (0, 0), (0, c_pad - c), (0, f_pad - f)))
    wc = wc.reshape(9, c_pad, f_pad).astype(jnp.bfloat16)          # [9, Cp, Fp]
    bconv2d = jnp.pad(bconv.reshape(1, f), ((0, 0), (0, f_pad - f)))        # f32
    wfc_p = jnp.pad(wfc, ((0, f_pad - f), (0, out_pad - out))).astype(jnp.bfloat16)
    bfc2d = jnp.pad(bfc.reshape(1, out), ((0, 0), (0, out_pad - out)))      # f32

    # --------------------------- Pallas kernel -------------------------------
    def kernel(x_ref, wconv_ref, bconv_ref, wfc_ref, bfc_ref, feats_ref, c_ref):
        xp_v = x_ref[0]                                        # [S*T, Cp] f32

        # On-chip im2col: 9 statically-shifted bf16 matmuls, f32 accumulation.
        # convp[r] for r = y*T + x (x < W) equals the SAME-conv output at (y,x);
        # r with (r mod T) >= W are wrap-around garbage and get masked below.
        acc = jnp.zeros((ht, f_pad), jnp.float32)
        for s in range(9):
            dy, dx = divmod(s, 3)
            off = dy * t + dx
            lhs = xp_v[off:off + ht, :].astype(jnp.bfloat16)   # [HT, Cp] bf16
            acc = acc + jnp.dot(lhs, wconv_ref[s],
                                preferred_element_type=jnp.float32)

        # bias + ReLU in f32 (VPU).
        hact = jnp.maximum(acc + bconv_ref[...], 0.0)

        # Mask the wrap-around padded columns of the flattened grid, then pool.
        col = lax.broadcasted_iota(jnp.int32, (ht, f_pad), 0) % t
        hact = jnp.where(col < w, hact, 0.0)
        feats = jnp.sum(hact, axis=0, keepdims=True) * inv_hw  # [1, Fp] f32
        feats_ref[0] = feats

        # fc head: single bf16 MXU pass, f32 accumulation + f32 bias.
        c_ref[0] = (jnp.dot(feats.astype(jnp.bfloat16), wfc_ref[...],
                            preferred_element_type=jnp.float32)
                    + bfc_ref[...])

    flops = n * (2 * 9 * ht * c_pad * f_pad + 2 * f_pad * out_pad)
    bytes_accessed = (xp.size * 4 + wc.size * 2 + bconv2d.size * 4
                      + wfc_p.size * 2 + bfc2d.size * 4
                      + n * f_pad * 4 + n * out_pad * 4)

    feats_pad, cls_pad = pl.pallas_call(
        kernel,
        out_shape=(jax.ShapeDtypeStruct((n, 1, f_pad), jnp.float32),
                   jax.ShapeDtypeStruct((n, 1, out_pad), jnp.float32)),
        grid_spec=pltpu.PrefetchScalarGridSpec(
            num_scalar_prefetch=0,
            grid=(n,),
            in_specs=[
                pl.BlockSpec((1, st, c_pad), lambda i: (i, 0, 0)),
                pl.BlockSpec((9, c_pad, f_pad), lambda i: (0, 0, 0)),
                pl.BlockSpec((1, f_pad), lambda i: (0, 0)),
                pl.BlockSpec((f_pad, out_pad), lambda i: (0, 0)),
                pl.BlockSpec((1, out_pad), lambda i: (0, 0)),
            ],
            out_specs=(
                pl.BlockSpec((1, 1, f_pad), lambda i: (i, 0, 0)),
                pl.BlockSpec((1, 1, out_pad), lambda i: (i, 0, 0)),
            ),
        ),
        compiler_params=pltpu.CompilerParams(
            dimension_semantics=("parallel",),   # batch -> v7x 2-TC sharding
        ),
        cost_estimate=pl.CostEstimate(
            flops=flops, transcendentals=0, bytes_accessed=bytes_accessed),
    )(xp, wc, bconv2d, wfc_p, bfc2d)

    feats = feats_pad[:, 0, :f]        # strip lane padding
    cls = cls_pad[:, 0, :out]
    return feats, cls


# --------------------------------- main ---------------------------------------
if __name__ == "__main__":
    # Small shapes consistent with the module's forward:
    N, C, H, W = 2, 4, 16, 16          # input image batch (NCHW like PyTorch)
    K = 3                              # conv kernel
    FEATURE_SIZE = 32                  # feature_size
    OUTPUT_CLASS = 2                   # output_class

    key = jax.random.PRNGKey(0)
    kx, kw1, kb1, kw2, kb2 = jax.random.split(key, 5)

    x = jax.random.normal(kx, (N, C, H, W), dtype=jnp.float32)
    # feature extractor params (Conv2d weights, HWIO layout)
    wconv = jax.random.normal(kw1, (K, K, C, FEATURE_SIZE), jnp.float32) * 0.1
    bconv = jax.random.normal(kb1, (FEATURE_SIZE,), jnp.float32) * 0.1
    # fc = nn.Linear(feature_size, output_class); stored here as [F, OUT]
    wfc = jax.random.normal(kw2, (FEATURE_SIZE, OUTPUT_CLASS), jnp.float32) * 0.1
    bfc = jax.random.normal(kb2, (OUTPUT_CLASS,), jnp.float32) * 0.1

    feats, cls = jax.block_until_ready(
        iclassifier_forward(x, wconv, bconv, wfc, bfc))

    # Pure-JAX f32 reference (conv -> relu -> GAP -> linear).  Kernel runs the
    # conv / fc matmuls in bf16 (deliberate precision trade) -> relaxed tol.
    x_nhwc = jnp.transpose(x, (0, 2, 3, 1))
    conv = lax.conv_general_dilated(
        x_nhwc, wconv, window_strides=(1, 1), padding="SAME",
        dimension_numbers=("NHWC", "HWIO", "NHWC"))
    ref_feats = jnp.mean(jax.nn.relu(conv + bconv), axis=(1, 2))   # [N, F]
    ref_cls = ref_feats @ wfc + bfc                                 # [N, OUT]

    assert feats.shape == (N, FEATURE_SIZE) and cls.shape == (N, OUTPUT_CLASS)
    assert jnp.allclose(feats, ref_feats, atol=2e-2, rtol=2e-2)
    assert jnp.allclose(cls, ref_cls, atol=2e-2, rtol=2e-2)

    print("KERNEL_OK")
</pallas_src>

<mosaic_0001>
module attributes {stable_mosaic.version = 11 : i64} {
  func.func @kernel(%arg0: i32, %arg1: memref<1x342x8xf32, #tpu.memory_space<vmem>>, %arg2: memref<9x8x128xbf16, #tpu.memory_space<vmem>>, %arg3: memref<1x128xf32, #tpu.memory_space<vmem>>, %arg4: memref<128x128xbf16, #tpu.memory_space<vmem>>, %arg5: memref<1x128xf32, #tpu.memory_space<vmem>>, %arg6: memref<1x1x128xf32, #tpu.memory_space<vmem>>, %arg7: memref<1x1x128xf32, #tpu.memory_space<vmem>>) attributes {dimension_semantics = [#tpu.dimension_semantics<parallel>], iteration_bounds = array<i64: 2>, scalar_prefetch = 0 : i64, scratch_operands = 0 : i64, tpu.core_type = #tpu.core_type<tc>, window_params = [{transform_indices = @transform_0, window_bounds = array<i64: 1, 342, 8>}, {pipeline_mode = #tpu.pipeline_mode<synchronous>, transform_indices = @transform_1, window_bounds = array<i64: 9, 8, 128>}, {pipeline_mode = #tpu.pipeline_mode<synchronous>, transform_indices = @transform_2, window_bounds = array<i64: 1, 128>}, {pipeline_mode = #tpu.pipeline_mode<synchronous>, transform_indices = @transform_3, window_bounds = array<i64: 128, 128>}, {pipeline_mode = #tpu.pipeline_mode<synchronous>, transform_indices = @transform_4, window_bounds = array<i64: 1, 128>}, {transform_indices = @transform_5, window_bounds = array<i64: 1, 1, 128>}, {transform_indices = @transform_6, window_bounds = array<i64: 1, 1, 128>}]} {
    %c0 = arith.constant 0 : index
    %c0_0 = arith.constant 0 : index
    %c0_1 = arith.constant 0 : index
    %0 = vector.load %arg1[%c0, %c0_0, %c0_1] : memref<1x342x8xf32, #tpu.memory_space<vmem>>, vector<1x342x8xf32>
    %1 = vector.shape_cast %0 : vector<1x342x8xf32> to vector<342x8xf32>
    %cst = arith.constant 0.000000e+00 : f32
    %2 = vector.broadcast %cst : f32 to vector<288x128xf32>
    %3 = vector.extract_strided_slice %1 {offsets = [0, 0], sizes = [288, 8], strides = [1, 1]} : vector<342x8xf32> to vector<288x8xf32>
    %4 = arith.truncf %3 : vector<288x8xf32> to vector<288x8xbf16>
    %c0_2 = arith.constant 0 : index
    %c0_3 = arith.constant 0 : index
    %c0_4 = arith.constant 0 : index
    %5 = vector.load %arg2[%c0_2, %c0_3, %c0_4] : memref<9x8x128xbf16, #tpu.memory_space<vmem>>, vector<1x8x128xbf16>
    %6 = vector.shape_cast %5 : vector<1x8x128xbf16> to vector<8x128xbf16>
    %cst_5 = arith.constant dense<0.000000e+00> : vector<288x128xf32>
    %7 = tpu.matmul %4, %6, %cst_5 {dimension_numbers = #tpu.dot_dimension_numbers<[1], [0], [0], [1], [0, 0, 1, 1], [], []>} : vector<288x8xbf16>, vector<8x128xbf16>, vector<288x128xf32> -> vector<288x128xf32>
    %8 = arith.addf %2, %7 : vector<288x128xf32>
    %9 = vector.extract_strided_slice %1 {offsets = [1, 0], sizes = [288, 8], strides = [1, 1]} : vector<342x8xf32> to vector<288x8xf32>
    %10 = arith.truncf %9 : vector<288x8xf32> to vector<288x8xbf16>
    %c1 = arith.constant 1 : index
    %c0_6 = arith.constant 0 : index
    %c0_7 = arith.constant 0 : index
    %11 = vector.load %arg2[%c1, %c0_6, %c0_7] : memref<9x8x128xbf16, #tpu.memory_space<vmem>>, vector<1x8x128xbf16>
    %12 = vector.shape_cast %11 : vector<1x8x128xbf16> to vector<8x128xbf16>
    %cst_8 = arith.constant dense<0.000000e+00> : vector<288x128xf32>
    %13 = tpu.matmul %10, %12, %cst_8 {dimension_numbers = #tpu.dot_dimension_numbers<[1], [0], [0], [1], [0, 0, 1, 1], [], []>} : vector<288x8xbf16>, vector<8x128xbf16>, vector<288x128xf32> -> vector<288x128xf32>
    %14 = arith.addf %8, %13 : vector<288x128xf32>
    %15 = vector.extract_strided_slice %1 {offsets = [2, 0], sizes = [288, 8], strides = [1, 1]} : vector<342x8xf32> to vector<288x8xf32>
    %16 = arith.truncf %15 : vector<288x8xf32> to vector<288x8xbf16>
    %c2 = arith.constant 2 : index
    %c0_9 = arith.constant 0 : index
    %c0_10 = arith.constant 0 : index
    %17 = vector.load %arg2[%c2, %c0_9, %c0_10] : memref<9x8x128xbf16, #tpu.memory_space<vmem>>, vector<1x8x128xbf16>
    %18 = vector.shape_cast %17 : vector<1x8x128xbf16> to vector<8x128xbf16>
    %cst_11 = arith.constant dense<0.000000e+00> : vector<288x128xf32>
    %19 = tpu.matmul %16, %18, %cst_11 {dimension_numbers = #tpu.dot_dimension_numbers<[1], [0], [0], [1], [0, 0, 1, 1], [], []>} : vector<288x8xbf16>, vector<8x128xbf16>, vector<288x128xf32> -> vector<288x128xf32>
    %20 = arith.addf %14, %19 : vector<288x128xf32>
    %21 = vector.extract_strided_slice %1 {offsets = [18, 0], sizes = [288, 8], strides = [1, 1]} : vector<342x8xf32> to vector<288x8xf32>
    %22 = arith.truncf %21 : vector<288x8xf32> to vector<288x8xbf16>
    %c3 = arith.constant 3 : index
    %c0_12 = arith.constant 0 : index
    %c0_13 = arith.constant 0 : index
    %23 = vector.load %arg2[%c3, %c0_12, %c0_13] : memref<9x8x128xbf16, #tpu.memory_space<vmem>>, vector<1x8x128xbf16>
    %24 = vector.shape_cast %23 : vector<1x8x128xbf16> to vector<8x128xbf16>
    %cst_14 = arith.constant dense<0.000000e+00> : vector<288x128xf32>
    %25 = tpu.matmul %22, %24, %cst_14 {dimension_numbers = #tpu.dot_dimension_numbers<[1], [0], [0], [1], [0, 0, 1, 1], [], []>} : vector<288x8xbf16>, vector<8x128xbf16>, vector<288x128xf32> -> vector<288x128xf32>
    %26 = arith.addf %20, %25 : vector<288x128xf32>
    %27 = vector.extract_strided_slice %1 {offsets = [19, 0], sizes = [288, 8], strides = [1, 1]} : vector<342x8xf32> to vector<288x8xf32>
    %28 = arith.truncf %27 : vector<288x8xf32> to vector<288x8xbf16>
    %c4 = arith.constant 4 : index
    %c0_15 = arith.constant 0 : index
    %c0_16 = arith.constant 0 : index
    %29 = vector.load %arg2[%c4, %c0_15, %c0_16] : memref<9x8x128xbf16, #tpu.memory_space<vmem>>, vector<1x8x128xbf16>
    %30 = vector.shape_cast %29 : vector<1x8x128xbf16> to vector<8x128xbf16>
    %cst_17 = arith.constant dense<0.000000e+00> : vector<288x128xf32>
    %31 = tpu.matmul %28, %30, %cst_17 {dimension_numbers = #tpu.dot_dimension_numbers<[1], [0], [0], [1], [0, 0, 1, 1], [], []>} : vector<288x8xbf16>, vector<8x128xbf16>, vector<288x128xf32> -> vector<288x128xf32>
    %32 = arith.addf %26, %31 : vector<288x128xf32>
    %33 = vector.extract_strided_slice %1 {offsets = [20, 0], sizes = [288, 8], strides = [1, 1]} : vector<342x8xf32> to vector<288x8xf32>
    %34 = arith.truncf %33 : vector<288x8xf32> to vector<288x8xbf16>
    %c5 = arith.constant 5 : index
    %c0_18 = arith.constant 0 : index
    %c0_19 = arith.constant 0 : index
    %35 = vector.load %arg2[%c5, %c0_18, %c0_19] : memref<9x8x128xbf16, #tpu.memory_space<vmem>>, vector<1x8x128xbf16>
    %36 = vector.shape_cast %35 : vector<1x8x128xbf16> to vector<8x128xbf16>
    %cst_20 = arith.constant dense<0.000000e+00> : vector<288x128xf32>
    %37 = tpu.matmul %34, %36, %cst_20 {dimension_numbers = #tpu.dot_dimension_numbers<[1], [0], [0], [1], [0, 0, 1, 1], [], []>} : vector<288x8xbf16>, vector<8x128xbf16>, vector<288x128xf32> -> vector<288x128xf32>
    %38 = arith.addf %32, %37 : vector<288x128xf32>
    %39 = vector.extract_strided_slice %1 {offsets = [36, 0], sizes = [288, 8], strides = [1, 1]} : vector<342x8xf32> to vector<288x8xf32>
    %40 = arith.truncf %39 : vector<288x8xf32> to vector<288x8xbf16>
    %c6 = arith.constant 6 : index
    %c0_21 = arith.constant 0 : index
    %c0_22 = arith.constant 0 : index
    %41 = vector.load %arg2[%c6, %c0_21, %c0_22] : memref<9x8x128xbf16, #tpu.memory_space<vmem>>, vector<1x8x128xbf16>
    %42 = vector.shape_cast %41 : vector<1x8x128xbf16> to vector<8x128xbf16>
    %cst_23 = arith.constant dense<0.000000e+00> : vector<288x128xf32>
    %43 = tpu.matmul %40, %42, %cst_23 {dimension_numbers = #tpu.dot_dimension_numbers<[1], [0], [0], [1], [0, 0, 1, 1], [], []>} : vector<288x8xbf16>, vector<8x128xbf16>, vector<288x128xf32> -> vector<288x128xf32>
    %44 = arith.addf %38, %43 : vector<288x128xf32>
    %45 = vector.extract_strided_slice %1 {offsets = [37, 0], sizes = [288, 8], strides = [1, 1]} : vector<342x8xf32> to vector<288x8xf32>
    %46 = arith.truncf %45 : vector<288x8xf32> to vector<288x8xbf16>
    %c7 = arith.constant 7 : index
    %c0_24 = arith.constant 0 : index
    %c0_25 = arith.constant 0 : index
    %47 = vector.load %arg2[%c7, %c0_24, %c0_25] : memref<9x8x128xbf16, #tpu.memory_space<vmem>>, vector<1x8x128xbf16>
    %48 = vector.shape_cast %47 : vector<1x8x128xbf16> to vector<8x128xbf16>
    %cst_26 = arith.constant dense<0.000000e+00> : vector<288x128xf32>
    %49 = tpu.matmul %46, %48, %cst_26 {dimension_numbers = #tpu.dot_dimension_numbers<[1], [0], [0], [1], [0, 0, 1, 1], [], []>} : vector<288x8xbf16>, vector<8x128xbf16>, vector<288x128xf32> -> vector<288x128xf32>
    %50 = arith.addf %44, %49 : vector<288x128xf32>
    %51 = vector.extract_strided_slice %1 {offsets = [38, 0], sizes = [288, 8], strides = [1, 1]} : vector<342x8xf32> to vector<288x8xf32>
    %52 = arith.truncf %51 : vector<288x8xf32> to vector<288x8xbf16>
    %c8 = arith.constant 8 : index
    %c0_27 = arith.constant 0 : index
    %c0_28 = arith.constant 0 : index
    %53 = vector.load %arg2[%c8, %c0_27, %c0_28] : memref<9x8x128xbf16, #tpu.memory_space<vmem>>, vector<1x8x128xbf16>
    %54 = vector.shape_cast %53 : vector<1x8x128xbf16> to vector<8x128xbf16>
    %cst_29 = arith.constant dense<0.000000e+00> : vector<288x128xf32>
    %55 = tpu.matmul %52, %54, %cst_29 {dimension_numbers = #tpu.dot_dimension_numbers<[1], [0], [0], [1], [0, 0, 1, 1], [], []>} : vector<288x8xbf16>, vector<8x128xbf16>, vector<288x128xf32> -> vector<288x128xf32>
    %56 = arith.addf %50, %55 : vector<288x128xf32>
    %c0_30 = arith.constant 0 : index
    %c0_31 = arith.constant 0 : index
    %57 = vector.load %arg3[%c0_30, %c0_31] : memref<1x128xf32, #tpu.memory_space<vmem>>, vector<1x128xf32>
    %58 = vector.broadcast %57 : vector<1x128xf32> to vector<288x128xf32>
    %59 = arith.addf %56, %58 : vector<288x128xf32>
    %cst_32 = arith.constant 0.000000e+00 : f32
    %60 = vector.broadcast %cst_32 : f32 to vector<288x128xf32>
    %61 = arith.maximumf %59, %60 : vector<288x128xf32>
    %62 = tpu.iota {dimensions = array<i32: 0>} : vector<288x128xi32>
    %c18_i32 = arith.constant 18 : i32
    %c0_i32 = arith.constant 0 : i32
    %63 = arith.cmpi eq, %c18_i32, %c0_i32 : i32
    %c1_i32 = arith.constant 1 : i32
    %64 = arith.select %63, %c1_i32, %c18_i32 : i32
    %65 = vector.broadcast %64 : i32 to vector<288x128xi32>
    %66 = arith.remsi %62, %65 : vector<288x128xi32>
    %c0_i32_33 = arith.constant 0 : i32
    %67 = vector.broadcast %c0_i32_33 : i32 to vector<288x128xi32>
    %68 = arith.cmpi ne, %66, %67 : vector<288x128xi32>
    %c0_i32_34 = arith.constant 0 : i32
    %69 = vector.broadcast %c0_i32_34 : i32 to vector<288x128xi32>
    %70 = arith.cmpi slt, %66, %69 : vector<288x128xi32>
    %c0_i32_35 = arith.constant 0 : i32
    %71 = arith.cmpi slt, %64, %c0_i32_35 : i32
    %72 = vector.broadcast %71 : i1 to vector<288x128xi1>
    %73 = vector.broadcast %72 : vector<288x128xi1> to vector<288x128xi1>
    %74 = arith.xori %70, %73 : vector<288x128xi1>
    %75 = arith.andi %74, %68 : vector<288x128xi1>
    %76 = vector.broadcast %64 : i32 to vector<288x128xi32>
    %77 = arith.addi %66, %76 : vector<288x128xi32>
    %78 = arith.select %75, %77, %66 : vector<288x128xi1>, vector<288x128xi32>
    %c16_i32 = arith.constant 16 : i32
    %79 = vector.broadcast %c16_i32 : i32 to vector<288x128xi32>
    %80 = arith.cmpi slt, %78, %79 : vector<288x128xi32>
    %cst_36 = arith.constant 0.000000e+00 : f32
    %81 = vector.broadcast %cst_36 : f32 to vector<288x128xf32>
    %82 = arith.select %80, %61, %81 : vector<288x128xi1>, vector<288x128xf32>
    %cst_37 = arith.constant dense<0.000000e+00> : vector<128xf32>
    %83 = vector.multi_reduction <add>, %82, %cst_37 [0] : vector<288x128xf32> to vector<128xf32>
    %84 = vector.shape_cast %83 : vector<128xf32> to vector<1x128xf32>
    %cst_38 = arith.constant 3.906250e-03 : f32
    %85 = vector.broadcast %cst_38 : f32 to vector<1x128xf32>
    %86 = arith.mulf %84, %85 : vector<1x128xf32>
    %c0_39 = arith.constant 0 : index
    %c0_40 = arith.constant 0 : index
    %c0_41 = arith.constant 0 : index
    %87 = vector.load %arg6[%c0_39, %c0_40, %c0_41] : memref<1x1x128xf32, #tpu.memory_space<vmem>>, vector<1x1x128xf32>
    %88 = vector.shape_cast %87 : vector<1x1x128xf32> to vector<1x128xf32>
    %89 = vector.shape_cast %86 : vector<1x128xf32> to vector<1x1x128xf32>
    tpu.vector_store %arg6[%c0_39, %c0_40, %c0_41], %89 {strides = array<i32>} : memref<1x1x128xf32, #tpu.memory_space<vmem>>, vector<1x1x128xf32>,
    %90 = arith.truncf %86 : vector<1x128xf32> to vector<1x128xbf16>
    %c0_42 = arith.constant 0 : index
    %c0_43 = arith.constant 0 : index
    %91 = vector.load %arg4[%c0_42, %c0_43] : memref<128x128xbf16, #tpu.memory_space<vmem>>, vector<128x128xbf16>
    %cst_44 = arith.constant dense<0.000000e+00> : vector<1x128xf32>
    %92 = tpu.matmul %90, %91, %cst_44 {dimension_numbers = #tpu.dot_dimension_numbers<[1], [0], [0], [1], [0, 0, 1, 1], [], []>} : vector<1x128xbf16>, vector<128x128xbf16>, vector<1x128xf32> -> vector<1x128xf32>
    %c0_45 = arith.constant 0 : index
    %c0_46 = arith.constant 0 : index
    %93 = vector.load %arg5[%c0_45, %c0_46] : memref<1x128xf32, #tpu.memory_space<vmem>>, vector<1x128xf32>
    %94 = arith.addf %92, %93 : vector<1x128xf32>
    %c0_47 = arith.constant 0 : index
    %c0_48 = arith.constant 0 : index
    %c0_49 = arith.constant 0 : index
    %95 = vector.load %arg7[%c0_47, %c0_48, %c0_49] : memref<1x1x128xf32, #tpu.memory_space<vmem>>, vector<1x1x128xf32>
    %96 = vector.shape_cast %95 : vector<1x1x128xf32> to vector<1x128xf32>
    %97 = vector.shape_cast %94 : vector<1x128xf32> to vector<1x1x128xf32>
    tpu.vector_store %arg7[%c0_47, %c0_48, %c0_49], %97 {strides = array<i32>} : memref<1x1x128xf32, #tpu.memory_space<vmem>>, vector<1x1x128xf32>,
    return
  }
  func.func @transform_0(%arg0: i32) -> (i32, i32, i32) {
    %c0_i32 = arith.constant 0 : i32
    %c0_i32_0 = arith.constant 0 : i32
    %c0_i32_1 = arith.constant 0 : i32
    return %arg0, %c0_i32, %c0_i32_0 : i32, i32, i32
  }
  func.func @transform_1(%arg0: i32) -> (i32, i32, i32) {
    %c0_i32 = arith.constant 0 : i32
    %c0_i32_0 = arith.constant 0 : i32
    %c0_i32_1 = arith.constant 0 : i32
    %c0_i32_2 = arith.constant 0 : i32
    return %c0_i32, %c0_i32_0, %c0_i32_1 : i32, i32, i32
  }
  func.func @transform_2(%arg0: i32) -> (i32, i32) {
    %c0_i32 = arith.constant 0 : i32
    %c0_i32_0 = arith.constant 0 : i32
    %c0_i32_1 = arith.constant 0 : i32
    return %c0_i32, %c0_i32_0 : i32, i32
  }
  func.func @transform_3(%arg0: i32) -> (i32, i32) {
    %c0_i32 = arith.constant 0 : i32
    %c0_i32_0 = arith.constant 0 : i32
    %c0_i32_1 = arith.constant 0 : i32
    return %c0_i32, %c0_i32_0 : i32, i32
  }
  func.func @transform_4(%arg0: i32) -> (i32, i32) {
    %c0_i32 = arith.constant 0 : i32
    %c0_i32_0 = arith.constant 0 : i32
    %c0_i32_1 = arith.constant 0 : i32
    return %c0_i32, %c0_i32_0 : i32, i32
  }
  func.func @transform_5(%arg0: i32) -> (i32, i32, i32) {
    %c0_i32 = arith.constant 0 : i32
    %c0_i32_0 = arith.constant 0 : i32
    %c0_i32_1 = arith.constant 0 : i32
    return %arg0, %c0_i32, %c0_i32_0 : i32, i32, i32
  }
  func.func @transform_6(%arg0: i32) -> (i32, i32, i32) {
    %c0_i32 = arith.constant 0 : i32
    %c0_i32_0 = arith.constant 0 : i32
    %c0_i32_1 = arith.constant 0 : i32
    return %arg0, %c0_i32, %c0_i32_0 : i32, i32, i32
  }
}

</mosaic_0001>

<llo_original>
// kernel: iclassifier_forward.1
$region0: #{iclassifier_forward.1}
  #allocation0 [shape = 'u32[]', space=smem, size = 0x4, offset = 0x4, fixed_abs, tag = 'smem constant byte address 0x4 - core index']
  #allocation1 [shape = 'u32[144,128]{1,0:T(1,128)}', space=vmem, size = 0x12000, scoped, tag = 'internal scratch']
  %s0 = inlined_call_operand.vmem [shape: f32[2,342,8], index: 0, kind: input, shape index: {}]
  %s1 = inlined_call_operand.vmem [shape: bf16[9,8,128], index: 1, kind: input, shape index: {}]
  %s2 = inlined_call_operand.vmem [shape: f32[1,128], index: 2, kind: input, shape index: {}]
  %s3 = inlined_call_operand.vmem [shape: bf16[128,128], index: 3, kind: input, shape index: {}]
  %s4 = inlined_call_operand.vmem [shape: f32[1,128], index: 4, kind: input, shape index: {}]
  %s5 = inlined_call_operand.hbm [shape: f32[2,1,128], index: 5, kind: output, shape index: {0}]
  %s6 = inlined_call_operand.hbm [shape: f32[2,1,128], index: 6, kind: output, shape index: {1}]
  %7 = xla_tuple %s5, %s6
  %s8 = sld [smem:[#allocation0]]
  $region61: #{iclassifier_forward.1} parent=0
    _
  %s10 = ssub.s32 1, %s8
  %s11 = scalar_select 0, %s10, %s8
  $region1: #{iclassifier_forward.1} parent=0
    #allocation2 [shape = 'u8[1024]{0}', space=vmem, size = 0x400, scoped, tag = 'output window, operand 0']
    #allocation3 [shape = 's32[2]{0}', space=sflag, size = 0x8, scoped, tag = 'scoped memory for iclassifier_forward.1']
    #allocation4 [shape = 'u8[1024]{0}', space=vmem, size = 0x400, scoped, tag = 'output window, operand 1']
    #allocation5 [shape = 's32[2]{0}', space=sflag, size = 0x8, scoped, tag = 'scoped memory for iclassifier_forward.1']
    %12 = vsyncpa [#allocation3], 0
    %s13 = scalar_lea.sflag [#allocation3], 1
    %14 = vsyncpa %s13, 0
    %15 = vsyncpa [#allocation5], 0
    %s16 = scalar_lea.sflag [#allocation5], 1
    %17 = vsyncpa %s16, 0
    loop: start=0, step=1, limit=4
    $region2: #{iclassifier_forward.1} parent=1 // loop_pre_header
      _
    $region3: #{iclassifier_forward.1} parent=1 // loop_header
      %s19 = sphi 0, %s23
      %p20 = scmp.ge.s32.totalorder %s19, 4
      %s29 = sphi 0, %s31
      %s32 = sphi 0, %s29
      %s33 = sphi 0, %s32
      %s49 = sphi 0, %s33
      %s53 = sphi 0, %s53
      %s55 = sphi 0, %s53
      %s56 = sphi 0, %s55
      %s70 = sphi 0, %s56
      %s74 = sphi 0, %s74
      %s76 = sphi 0, %s74
      %s77 = sphi 0, %s76
      %s91 = sphi 0, %s77
      %s95 = sphi 0, %s95
      %s97 = sphi 0, %s95
      %s98 = sphi 0, %s97
      %s112 = sphi 0, %s98
      %s116 = sphi 0, %s116
      %s118 = sphi 0, %s116
      %s119 = sphi 0, %s118
      %s133 = sphi 0, %s119
      %s139 = sphi 0, %s141
      %s142 = sphi 0, %s139
      %s143 = sphi 0, %s142
      %s159 = sphi 0, %s143
      %s165 = sphi 0, %s167
      %s168 = sphi 0, %s165
      %s169 = sphi 0, %s168
      %s185 = sphi 0, %s169
    $region4: #{iclassifier_forward.1} parent=1 // loop_header_branch
      %22 = sbr.rel (%p20) target = $region8
    $region5: #{iclassifier_forward.1} parent=1 // loop_body
      %s24 = ssub.s32 %s19, 1
      %s25 = ssub.s32 %s19, 2
      %s26 = sadd.s32 %s19, 1
      %s27 = ssub.s32 %s19, %s26
      %p28 = scmp.eq.s32.totalorder %s27, 0
      %s30 = sadd.s32 %s29, 1
      %s31 = scalar_select %p28, %s29, %s30
      %p34 = pneg %p28
      %p35 = scmp.eq.s32.totalorder %s19, 1
      %p36 = por %p34, %p35
      %p37 = scmp.ne.s32.totalorder %s29, %s32
      %p38 = scmp.eq.s32.totalorder %s19, 0
      %p39 = por %p37, %p38
      %p40 = scmp.ne.s32.totalorder %s29, %s32
      %p41 = scmp.eq.s32.totalorder %s24, 1
      %p42 = por %p40, %p41
      %p43 = scmp.ne.s32.totalorder %s32, %s33
      %p44 = scmp.eq.s32.totalorder %s24, 0
      %p45 = por %p43, %p44
      %p46 = scmp.ne.s32.totalorder %s32, %s33
      %p47 = scmp.eq.s32.totalorder %s25, 1
      %p48 = por %p46, %p47
      %p50 = scmp.ne.s32.totalorder %s33, %s49
      %p51 = scmp.eq.s32.totalorder %s25, 0
      %p52 = por %p50, %p51
      %s54 = sadd.s32 %s53, 1
      %p57 = scmp.eq.s32.totalorder %s19, 1
      %p58 = scmp.ne.s32.totalorder %s53, %s55
      %p59 = scmp.eq.s32.totalorder %s19, 0
      %p60 = por %p58, %p59
      %p61 = scmp.ne.s32.totalorder %s53, %s55
      %p62 = scmp.eq.s32.totalorder %s24, 1
      %p63 = por %p61, %p62
      %p64 = scmp.ne.s32.totalorder %s55, %s56
      %p65 = scmp.eq.s32.totalorder %s24, 0
      %p66 = por %p64, %p65
      %p67 = scmp.ne.s32.totalorder %s55, %s56
      %p68 = scmp.eq.s32.totalorder %s25, 1
      %p69 = por %p67, %p68
      %p71 = scmp.ne.s32.totalorder %s56, %s70
      %p72 = scmp.eq.s32.totalorder %s25, 0
      %p73 = por %p71, %p72
      %s75 = sadd.s32 %s74, 1
      %p78 = scmp.eq.s32.totalorder %s19, 1
      %p79 = scmp.ne.s32.totalorder %s74, %s76
      %p80 = scmp.eq.s32.totalorder %s19, 0
      %p81 = por %p79, %p80
      %p82 = scmp.ne.s32.totalorder %s74, %s76
      %p83 = scmp.eq.s32.totalorder %s24, 1
      %p84 = por %p82, %p83
      %p85 = scmp.ne.s32.totalorder %s76, %s77
      %p86 = scmp.eq.s32.totalorder %s24, 0
      %p87 = por %p85, %p86
      %p88 = scmp.ne.s32.totalorder %s76, %s77
      %p89 = scmp.eq.s32.totalorder %s25, 1
      %p90 = por %p88, %p89
      %p92 = scmp.ne.s32.totalorder %s77, %s91
      %p93 = scmp.eq.s32.totalorder %s25, 0
      %p94 = por %p92, %p93
      %s96 = sadd.s32 %s95, 1
      %p99 = scmp.eq.s32.totalorder %s19, 1
      %p100 = scmp.ne.s32.totalorder %s95, %s97
      %p101 = scmp.eq.s32.totalorder %s19, 0
      %p102 = por %p100, %p101
      %p103 = scmp.ne.s32.totalorder %s95, %s97
      %p104 = scmp.eq.s32.totalorder %s24, 1
      %p105 = por %p103, %p104
      %p106 = scmp.ne.s32.totalorder %s97, %s98
      %p107 = scmp.eq.s32.totalorder %s24, 0
      %p108 = por %p106, %p107
      %p109 = scmp.ne.s32.totalorder %s97, %s98
      %p110 = scmp.eq.s32.totalorder %s25, 1
      %p111 = por %p109, %p110
      %p113 = scmp.ne.s32.totalorder %s98, %s112
      %p114 = scmp.eq.s32.totalorder %s25, 0
      %p115 = por %p113, %p114
      %s117 = sadd.s32 %s116, 1
      %p120 = scmp.eq.s32.totalorder %s19, 1
      %p121 = scmp.ne.s32.totalorder %s116, %s118
      %p122 = scmp.eq.s32.totalorder %s19, 0
      %p123 = por %p121, %p122
      %p124 = scmp.ne.s32.totalorder %s116, %s118
      %p125 = scmp.eq.s32.totalorder %s24, 1
      %p126 = por %p124, %p125
      %p127 = scmp.ne.s32.totalorder %s118, %s119
      %p128 = scmp.eq.s32.totalorder %s24, 0
      %p129 = por %p127, %p128
      %p130 = scmp.ne.s32.totalorder %s118, %s119
      %p131 = scmp.eq.s32.totalorder %s25, 1
      %p132 = por %p130, %p131
      %p134 = scmp.ne.s32.totalorder %s119, %s133
      %p135 = scmp.eq.s32.totalorder %s25, 0
      %p136 = por %p134, %p135
      %s137 = ssub.s32 %s19, %s26
      %p138 = scmp.eq.s32.totalorder %s137, 0
      %s140 = sadd.s32 %s139, 1
      %s141 = scalar_select %p138, %s139, %s140
      %p144 = pneg %p138
      %p145 = scmp.eq.s32.totalorder %s19, 1
      %p146 = por %p144, %p145
      %p147 = scmp.ne.s32.totalorder %s139, %s142
      %p148 = scmp.eq.s32.totalorder %s19, 0
      %p149 = por %p147, %p148
      %p150 = scmp.ne.s32.totalorder %s139, %s142
      %p151 = scmp.eq.s32.totalorder %s24, 1
      %p152 = por %p150, %p151
      %p153 = scmp.ne.s32.totalorder %s142, %s143
      %p154 = scmp.eq.s32.totalorder %s24, 0
      %p155 = por %p153, %p154
      %p156 = scmp.ne.s32.totalorder %s142, %s143
      %p157 = scmp.eq.s32.totalorder %s25, 1
      %p158 = por %p156, %p157
      %p160 = scmp.ne.s32.totalorder %s143, %s159
      %p161 = scmp.eq.s32.totalorder %s25, 0
      %p162 = por %p160, %p161
      %s163 = ssub.s32 %s19, %s26
      %p164 = scmp.eq.s32.totalorder %s163, 0
      %s166 = sadd.s32 %s165, 1
      %s167 = scalar_select %p164, %s165, %s166
      %p170 = pneg %p164
      %p171 = scmp.eq.s32.totalorder %s19, 1
      %p172 = por %p170, %p171
      %p173 = scmp.ne.s32.totalorder %s165, %s168
      %p174 = scmp.eq.s32.totalorder %s19, 0
      %p175 = por %p173, %p174
      %p176 = scmp.ne.s32.totalorder %s165, %s168
      %p177 = scmp.eq.s32.totalorder %s24, 1
      %p178 = por %p176, %p177
      %p179 = scmp.ne.s32.totalorder %s168, %s169
      %p180 = scmp.eq.s32.totalorder %s24, 0
      %p181 = por %p179, %p180
      %p182 = scmp.ne.s32.totalorder %s168, %s169
      %p183 = scmp.eq.s32.totalorder %s25, 1
      %p184 = por %p182, %p183
      %p186 = scmp.ne.s32.totalorder %s169, %s185
      %p187 = scmp.eq.s32.totalorder %s25, 0
      %p188 = por %p186, %p187
      %p189 = scmp.le.s32.totalorder 1, %s19
      %p190 = scmp.lt.s32.totalorder %s19, 3
      %p191 = pnand %p189, %p190
      %p192 = pneg %p191
      // Predicated region
      $region9: #{iclassifier_forward.1} parent=5 // pred_check
        _
      $region10: #{iclassifier_forward.1} parent=5 // pred_check_branch
        %194 = sbr.rel (%p191) target = $region12
      $region11: #{iclassifier_forward.1} parent=5 // pred_region
        %s195 = ssub.s32 %s19, 1
        // Predicated region
        $region13: #{iclassifier_forward.1} parent=11 // pred_check
          %p196 = pneg %p66
        $region14: #{iclassifier_forward.1} parent=11 // pred_check_branch
          %198 = sbr.rel (%p196) target = $region16
        $region15: #{iclassifier_forward.1} parent=11 // pred_region
          _
        $region16: #{iclassifier_forward.1} parent=11 // pred_fallthru
          _
        // Predicated region
        $region17: #{iclassifier_forward.1} parent=11 // pred_check
          %p199 = pneg %p87
        $region18: #{iclassifier_forward.1} parent=11 // pred_check_branch
          %201 = sbr.rel (%p199) target = $region20
        $region19: #{iclassifier_forward.1} parent=11 // pred_region
          _
        $region20: #{iclassifier_forward.1} parent=11 // pred_fallthru
          _
        // Predicated region
        $region21: #{iclassifier_forward.1} parent=11 // pred_check
          %p202 = pneg %p108
        $region22: #{iclassifier_forward.1} parent=11 // pred_check_branch
          %204 = sbr.rel (%p202) target = $region24
        $region23: #{iclassifier_forward.1} parent=11 // pred_region
          _
        $region24: #{iclassifier_forward.1} parent=11 // pred_fallthru
          _
        // Predicated region
        $region25: #{iclassifier_forward.1} parent=11 // pred_check
          %p205 = pneg %p129
        $region26: #{iclassifier_forward.1} parent=11 // pred_check_branch
          %207 = sbr.rel (%p205) target = $region28
        $region27: #{iclassifier_forward.1} parent=11 // pred_region
          _
        $region28: #{iclassifier_forward.1} parent=11 // pred_fallthru
          _
      $region12: #{iclassifier_forward.1} parent=5 // pred_fallthru
        _
      %p208 = scmp.lt.s32.totalorder %s19, 2
      // Predicated region
      $region29: #{iclassifier_forward.1} parent=5 // pred_check
        %p209 = pneg %p208
      $region30: #{iclassifier_forward.1} parent=5 // pred_check_branch
        %211 = sbr.rel (%p209) target = $region32
      $region31: #{iclassifier_forward.1} parent=5 // pred_region
        // Predicated region
        $region33: #{iclassifier_forward.1} parent=31 // pred_check
          %p212 = pneg %p39
        $region34: #{iclassifier_forward.1} parent=31 // pred_check_branch
          %214 = sbr.rel (%p212) target = $region36
        $region35: #{iclassifier_forward.1} parent=31 // pred_region
          %p215 = scmp.lt.s32.totalorder %s19, 1
          %s216 = scalar_select %p215, %s19, 1
          %s217 = smul.addr %s216, 43
          %s218 = smul.addr %s217, 8
          %s219 = scalar_lea.vmem %s0, %s218
        $region36: #{iclassifier_forward.1} parent=31 // pred_fallthru
          _
      $region32: #{iclassifier_forward.1} parent=5 // pred_fallthru
        _
      %p220 = scmp.le.s32.totalorder 1, %s19
      %p221 = scmp.lt.s32.totalorder %s19, 3
      %p222 = pnand %p220, %p221
      %p223 = pneg %p222
      // Predicated region
      $region37: #{iclassifier_forward.1} parent=5 // pred_check
        _
      $region38: #{iclassifier_forward.1} parent=5 // pred_check_branch
        %225 = sbr.rel (%p222) target = $region40
      $region39: #{iclassifier_forward.1} parent=5 // pred_region
        %s226 = ssub.s32 %s19, 1
        %p227 = scmp.lt.s32.totalorder %s24, 1
        %s228 = scalar_select %p227, %s24, 1
        %s229 = smul.addr %s228, 43
        %s230 = smul.addr %s229, 8
        %s231 = scalar_lea.vmem %s0, %s230
        %p232 = pneg %p45
        %p233 = pneg %p42
        %p234 = pneg %p66
        %p235 = pneg %p63
        %p236 = pneg %p87
        %p237 = pneg %p84
        %p238 = pneg %p108
        %p239 = pneg %p105
        %p240 = pneg %p129
        %p241 = pneg %p126
        %p242 = pneg %p155
        %p243 = pneg %p152
        %s244 = sand.u32 %s142, 1
        %s245 = scalar_lea.sflag [#allocation3], %s244
        %s246 = sand.u32 %s142, 1
        %s247 = scalar_lea.vmem [#allocation2], %s246
        %p248 = pneg %p181
        %p249 = pneg %p178
        %s250 = sand.u32 %s168, 1
        %s251 = scalar_lea.sflag [#allocation5], %s250
        %s252 = sand.u32 %s168, 1
        %s253 = scalar_lea.vmem [#allocation4], %s252
        %p254 = scmp.lt.s32.totalorder %s24, 1
        %s255 = scalar_select %p254, %s24, 1
        %s256 = smul.addr %s255, 43
        %s257 = smul.addr %s256, 8
        %s258 = scalar_lea.vmem %s0, %s257
        %v260 = vld [vmem:[%s258] sm:$0xff]
        %v261 = vld [vmem:[%s258 + $0x8] sm:$0xff]
        %v262 = vld [vmem:[%s258 + $0x10] sm:$0xff]
        %v263 = vld [vmem:[%s258 + $0x18] sm:$0xff]
        %v264 = vld [vmem:[%s258 + $0x20] sm:$0xff]
        %v265 = vld [vmem:[%s258 + $0x28] sm:$0xff]
        %v266 = vld [vmem:[%s258 + $0x30] sm:$0xff]
        %v267 = vld [vmem:[%s258 + $0x38] sm:$0xff]
        %v268 = vld [vmem:[%s258 + $0x40] sm:$0xff]
        %v269 = vld [vmem:[%s258 + $0x48] sm:$0xff]
        %v270 = vld [vmem:[%s258 + $0x50] sm:$0xff]
        %v271 = vld [vmem:[%s258 + $0x58] sm:$0xff]
        %v272 = vld [vmem:[%s258 + $0x60] sm:$0xff]
        %v273 = vld [vmem:[%s258 + $0x68] sm:$0xff]
        %v274 = vld [vmem:[%s258 + $0x70] sm:$0xff]
        %v275 = vld [vmem:[%s258 + $0x78] sm:$0xff]
        %v276 = vld [vmem:[%s258 + $0x80] sm:$0xff]
        %v277 = vld [vmem:[%s258 + $0x88] sm:$0xff]
        %v278 = vld [vmem:[%s258 + $0x90] sm:$0xff]
        %v279 = vld [vmem:[%s258 + $0x98] sm:$0xff]
        %v280 = vld [vmem:[%s258 + $0xa0] sm:$0xff]
        %v281 = vld [vmem:[%s258 + $0xa8] sm:$0xff]
        %v282 = vld [vmem:[%s258 + $0xb0] sm:$0xff]
        %v283 = vld [vmem:[%s258 + $0xb8] sm:$0xff]
        %v284 = vld [vmem:[%s258 + $0xc0] sm:$0xff]
        %v285 = vld [vmem:[%s258 + $0xc8] sm:$0xff]
        %v286 = vld [vmem:[%s258 + $0xd0] sm:$0xff]
        %v287 = vld [vmem:[%s258 + $0xd8] sm:$0xff]
        %v288 = vld [vmem:[%s258 + $0xe0] sm:$0xff]
        %v289 = vld [vmem:[%s258 + $0xe8] sm:$0xff]
        %v290 = vld [vmem:[%s258 + $0xf0] sm:$0xff]
        %v291 = vld [vmem:[%s258 + $0xf8] sm:$0xff]
        %v292 = vld [vmem:[%s258 + $0x100] sm:$0xff]
        %v293 = vld [vmem:[%s258 + $0x108] sm:$0xff]
        %v294 = vld [vmem:[%s258 + $0x110] sm:$0xff]
        %v295 = vld [vmem:[%s258 + $0x118] sm:$0xff]
        %v296 = vld [vmem:[%s258 + $0x120] sm:$0xff]
        %v297 = vld [vmem:[%s258 + $0x128] sm:$0xff]
        %v298 = vld [vmem:[%s258 + $0x130] sm:$0xff]
        %v299 = vld [vmem:[%s258 + $0x138] sm:$0xff]
        %v300 = vld [vmem:[%s258 + $0x140] sm:$0xff]
        %v301 = vpack.c.bf16 %v261, %v260
        %v302 = vpack.c.bf16 %v263, %v262
        %v303 = vpack.c.bf16 %v265, %v264
        %v304 = vpack.c.bf16 %v267, %v266
        %v305 = vpack.c.bf16 %v269, %v268
        %v306 = vpack.c.bf16 %v271, %v270
        %v307 = vpack.c.bf16 %v273, %v272
        %v308 = vpack.c.bf16 %v275, %v274
        %v309 = vpack.c.bf16 %v277, %v276
        %v310 = vpack.c.bf16 %v279, %v278
        %v311 = vpack.c.bf16 %v281, %v280
        %v312 = vpack.c.bf16 %v283, %v282
        %v313 = vpack.c.bf16 %v285, %v284
        %v314 = vpack.c.bf16 %v287, %v286
        %v315 = vpack.c.bf16 %v289, %v288
        %v316 = vpack.c.bf16 %v291, %v290
        %v317 = vpack.c.bf16 %v293, %v292
        %v318 = vpack.c.bf16 %v295, %v294
        %v319 = vld [vmem:[%s1] sm:$0xf]
        %v320 = vpack.c.bf16 %v296, %v296
        %s321 = scalar_lea.vmem %s1, 4
        %v322 = vld [vmem:[%s321] sm:$0xf]
        %vm323 = vsmask.f32 7424
        %v325 = vshrl.u32 %v301, 16
        %v327 = vshll.u32 %v301, 16
        %v329 = vrot.slane %v327, 1
        %v330 = vor.u32 %v325, %v329
        %v332 = vshll.u32 %v302, 16
        %v334 = vrot.slane %v332, 1
        %v335 = vsel %vm323, %v330, %v334
        %v336 = vshrl.u32 %v302, 16
        %v338 = vor.u32 %v336, %v334
        %v340 = vshll.u32 %v303, 16
        %v342 = vrot.slane %v340, 1
        %v343 = vsel %vm323, %v338, %v342
        %v344 = vshrl.u32 %v303, 16
        %v346 = vor.u32 %v344, %v342
        %v348 = vshll.u32 %v304, 16
        %v350 = vrot.slane %v348, 1
        %v351 = vsel %vm323, %v346, %v350
        %v352 = vshrl.u32 %v304, 16
        %v354 = vor.u32 %v352, %v350
        %v356 = vshll.u32 %v305, 16
        %v358 = vrot.slane %v356, 1
        %v359 = vsel %vm323, %v354, %v358
        %v360 = vshrl.u32 %v305, 16
        %v362 = vor.u32 %v360, %v358
        %v364 = vshll.u32 %v306, 16
        %v366 = vrot.slane %v364, 1
        %v367 = vsel %vm323, %v362, %v366
        %v368 = vshrl.u32 %v306, 16
        %v370 = vor.u32 %v368, %v366
        %v372 = vshll.u32 %v307, 16
        %v374 = vrot.slane %v372, 1
        %v375 = vsel %vm323, %v370, %v374
        %v376 = vshrl.u32 %v307, 16
        %v378 = vor.u32 %v376, %v374
        %v380 = vshll.u32 %v308, 16
        %v382 = vrot.slane %v380, 1
        %v383 = vsel %vm323, %v378, %v382
        %v384 = vshrl.u32 %v308, 16
        %v386 = vor.u32 %v384, %v382
        %v388 = vshll.u32 %v309, 16
        %v390 = vrot.slane %v388, 1
        %v391 = vsel %vm323, %v386, %v390
        %v392 = vshrl.u32 %v309, 16
        %v394 = vor.u32 %v392, %v390
        %v396 = vshll.u32 %v310, 16
        %v398 = vrot.slane %v396, 1
        %v399 = vsel %vm323, %v394, %v398
        %v400 = vshrl.u32 %v310, 16
        %v402 = vor.u32 %v400, %v398
        %v404 = vshll.u32 %v311, 16
        %v406 = vrot.slane %v404, 1
        %v407 = vsel %vm323, %v402, %v406
        %v408 = vshrl.u32 %v311, 16
        %v410 = vor.u32 %v408, %v406
        %v412 = vshll.u32 %v312, 16
        %v414 = vrot.slane %v412, 1
        %v415 = vsel %vm323, %v410, %v414
        %v416 = vshrl.u32 %v312, 16
        %v418 = vor.u32 %v416, %v414
        %v420 = vshll.u32 %v313, 16
        %v422 = vrot.slane %v420, 1
        %v423 = vsel %vm323, %v418, %v422
        %v424 = vshrl.u32 %v313, 16
        %v426 = vor.u32 %v424, %v422
        %v428 = vshll.u32 %v314, 16
        %v430 = vrot.slane %v428, 1
        %v431 = vsel %vm323, %v426, %v430
        %v432 = vshrl.u32 %v314, 16
        %v434 = vor.u32 %v432, %v430
        %v436 = vshll.u32 %v315, 16
        %v438 = vrot.slane %v436, 1
        %v439 = vsel %vm323, %v434, %v438
        %v440 = vshrl.u32 %v315, 16
        %v442 = vor.u32 %v440, %v438
        %v444 = vshll.u32 %v316, 16
        %v446 = vrot.slane %v444, 1
        %v447 = vsel %vm323, %v442, %v446
        %v448 = vshrl.u32 %v316, 16
        %v450 = vor.u32 %v448, %v446
        %v452 = vshll.u32 %v317, 16
        %v454 = vrot.slane %v452, 1
        %v455 = vsel %vm323, %v450, %v454
        %v456 = vshrl.u32 %v317, 16
        %v458 = vor.u32 %v456, %v454
        %v460 = vshll.u32 %v318, 16
        %v462 = vrot.slane %v460, 1
        %v463 = vsel %vm323, %v458, %v462
        %v464 = vshrl.u32 %v318, 16
        %v466 = vor.u32 %v464, %v462
        %v468 = vshll.u32 %v320, 16
        %v470 = vrot.slane %v468, 1
        %v471 = vsel %vm323, %v466, %v470
        %vm472 = vcmask 64512
        %v474 = vsel %vm472, %v335, 0
        %v477 = vsel %vm472, %v343, 0
        %v480 = vsel %vm472, %v351, 0
        %v483 = vsel %vm472, %v359, 0
        %v486 = vsel %vm472, %v367, 0
        %v489 = vsel %vm472, %v375, 0
        %v492 = vsel %vm472, %v383, 0
        %v495 = vsel %vm472, %v391, 0
        %v498 = vsel %vm472, %v399, 0
        %v501 = vsel %vm472, %v407, 0
        %v504 = vsel %vm472, %v415, 0
        %v507 = vsel %vm472, %v423, 0
        %v510 = vsel %vm472, %v431, 0
        %v513 = vsel %vm472, %v439, 0
        %v516 = vsel %vm472, %v447, 0
        %v519 = vsel %vm472, %v455, 0
        %v522 = vsel %vm472, %v463, 0
        %v525 = vsel %vm472, %v471, 0
        %vm527 = vcmask 1043456
        %v529 = vsel %vm527, %v322, 0
        %531 = vmatprep.subr.bf16.mxu0 0
        %532 = vmatpush1.bf16.msra.mxu0 %v529
        %533 = vmatprep.subr.bf16.mxu0 0
        %534 = vmatpush1.bf16.msra.mxu0 0
        %535 = vmatprep.subr.bf16.mxu0 0
        %536 = vmatpush1.bf16.msra.mxu0 0
        %537 = vmatprep.subr.bf16.mxu0 0
        %538 = vmatpush1.bf16.msra.mxu0 0
        %539 = vmatprep.subr.bf16.mxu0 0
        %540 = vmatpush1.bf16.msra.mxu0 0
        %541 = vmatprep.subr.bf16.mxu0 0
        %542 = vmatpush1.bf16.msra.mxu0 0
        %543 = vmatprep.subr.bf16.mxu0 0
        %544 = vmatpush1.bf16.msra.mxu0 0
        %545 = vmatprep.subr.bf16.mxu0 0
        %546 = vmatpush1.bf16.msra.mxu0 0
        %547 = vmatprep.subr.bf16.mxu0 0
        %548 = vmatpush1.bf16.msra.mxu0 0
        %549 = vmatprep.subr.bf16.mxu0 0
        %550 = vmatpush1.bf16.msra.mxu0 0
        %551 = vmatprep.subr.bf16.mxu0 0
        %552 = vmatpush1.bf16.msra.mxu0 0
        %553 = vmatprep.subr.bf16.mxu0 0
        %554 = vmatpush1.bf16.msra.mxu0 0
        %555 = vmatprep.subr.bf16.mxu0 0
        %556 = vmatpush1.bf16.msra.mxu0 0
        %557 = vmatprep.subr.bf16.mxu0 0
        %558 = vmatpush1.bf16.msra.mxu0 0
        %559 = vmatprep.subr.bf16.mxu0 0
        %560 = vmatpush1.bf16.msra.mxu0 0
        %561 = vmatprep.subr.bf16.mxu0 0
        %562 = vmatpush1.bf16.msra.mxu0 0
        %563 = vmatprep.mubr.bf16.mxu0 0
        %564 = vmatmul.mubr.bf16.gmra.mrb[0].mxu0 %v474
        %v565 = vpop.f32.mrb[0].mxu0
        %v566 = vadd.f32 0.0, %v565
        %v567 = vpop.f32.mrb[0].mxu0
        %v568 = vpop.f32.mrb[0].mxu0
        %v569 = vadd.f32 0.0, %v568
        %v570 = vpop.f32.mrb[0].mxu0
        %571 = vmatprep.mubr.bf16.mxu0 0
        %572 = vmatmul.mubr.bf16.gmra.mrb[0].mxu0 %v477
        %v573 = vpop.f32.mrb[0].mxu0
        %v574 = vadd.f32 0.0, %v573
        %v575 = vpop.f32.mrb[0].mxu0
        %v576 = vpop.f32.mrb[0].mxu0
        %v577 = vadd.f32 0.0, %v576
        %v578 = vpop.f32.mrb[0].mxu0
        %579 = vmatprep.mubr.bf16.mxu0 0
        %580 = vmatmul.mubr.bf16.gmra.mrb[0].mxu0 %v480
        %v581 = vpop.f32.mrb[0].mxu0
        %v582 = vadd.f32 0.0, %v581
        %v583 = vpop.f32.mrb[0].mxu0
        %v584 = vpop.f32.mrb[0].mxu0
        %v585 = vadd.f32 0.0, %v584
        %v586 = vpop.f32.mrb[0].mxu0
        %587 = vmatprep.mubr.bf16.mxu0 0
        %588 = vmatmul.mubr.bf16.gmra.mrb[0].mxu0 %v483
        %v589 = vpop.f32.mrb[0].mxu0
        %v590 = vadd.f32 0.0, %v589
        %v591 = vpop.f32.mrb[0].mxu0
        %v592 = vpop.f32.mrb[0].mxu0
        %v593 = vadd.f32 0.0, %v592
        %v594 = vpop.f32.mrb[0].mxu0
        %595 = vmatprep.mubr.bf16.mxu0 0
        %596 = vmatmul.mubr.bf16.gmra.mrb[0].mxu0 %v486
        %v597 = vpop.f32.mrb[0].mxu0
        %v598 = vadd.f32 0.0, %v597
        %v599 = vpop.f32.mrb[0].mxu0
        %v600 = vpop.f32.mrb[0].mxu0
        %v601 = vadd.f32 0.0, %v600
        %v602 = vpop.f32.mrb[0].mxu0
        %603 = vmatprep.mubr.bf16.mxu0 0
        %604 = vmatmul.mubr.bf16.gmra.mrb[0].mxu0 %v489
        %v605 = vpop.f32.mrb[0].mxu0
        %v606 = vadd.f32 0.0, %v605
        %v607 = vpop.f32.mrb[0].mxu0
        %v608 = vpop.f32.mrb[0].mxu0
        %v609 = vadd.f32 0.0, %v608
        %v610 = vpop.f32.mrb[0].mxu0
        %611 = vmatprep.mubr.bf16.mxu0 0
        %612 = vmatmul.mubr.bf16.gmra.mrb[0].mxu0 %v492
        %v613 = vpop.f32.mrb[0].mxu0
        %v614 = vadd.f32 0.0, %v613
        %v615 = vpop.f32.mrb[0].mxu0
        %v616 = vpop.f32.mrb[0].mxu0
        %v617 = vadd.f32 0.0, %v616
        %v618 = vpop.f32.mrb[0].mxu0
        %619 = vmatprep.mubr.bf16.mxu0 0
        %620 = vmatmul.mubr.bf16.gmra.mrb[0].mxu0 %v495
        %v621 = vpop.f32.mrb[0].mxu0
        %v622 = vadd.f32 0.0, %v621
        %v623 = vpop.f32.mrb[0].mxu0
        %v624 = vpop.f32.mrb[0].mxu0
        %v625 = vadd.f32 0.0, %v624
        %v626 = vpop.f32.mrb[0].mxu0
        %627 = vmatprep.mubr.bf16.mxu0 0
        %628 = vmatmul.mubr.bf16.gmra.mrb[0].mxu0 %v498
        %v629 = vpop.f32.mrb[0].mxu0
        %v630 = vadd.f32 0.0, %v629
        %v631 = vpop.f32.mrb[0].mxu0
        %v632 = vpop.f32.mrb[0].mxu0
        %v633 = vadd.f32 0.0, %v632
        %v634 = vpop.f32.mrb[0].mxu0
        %635 = vmatprep.mubr.bf16.mxu0 0
        %636 = vmatmul.mubr.bf16.gmra.mrb[0].mxu0 %v501
        %v637 = vpop.f32.mrb[0].mxu0
        %v638 = vadd.f32 0.0, %v637
        %v639 = vpop.f32.mrb[0].mxu0
        %v640 = vpop.f32.mrb[0].mxu0
        %v641 = vadd.f32 0.0, %v640
        %v642 = vpop.f32.mrb[0].mxu0
        %643 = vmatprep.mubr.bf16.mxu0 0
        %644 = vmatmul.mubr.bf16.gmra.mrb[0].mxu0 %v504
        %v645 = vpop.f32.mrb[0].mxu0
        %v646 = vadd.f32 0.0, %v645
        %v647 = vpop.f32.mrb[0].mxu0
        %v648 = vpop.f32.mrb[0].mxu0
        %v649 = vadd.f32 0.0, %v648
        %v650 = vpop.f32.mrb[0].mxu0
        %651 = vmatprep.mubr.bf16.mxu0 0
        %652 = vmatmul.mubr.bf16.gmra.mrb[0].mxu0 %v507
        %v653 = vpop.f32.mrb[0].mxu0
        %v654 = vadd.f32 0.0, %v653
        %v655 = vpop.f32.mrb[0].mxu0
        %v656 = vpop.f32.mrb[0].mxu0
        %v657 = vadd.f32 0.0, %v656
        %v658 = vpop.f32.mrb[0].mxu0
        %659 = vmatprep.mubr.bf16.mxu0 0
        %660 = vmatmul.mubr.bf16.gmra.mrb[0].mxu0 %v510
        %v661 = vpop.f32.mrb[0].mxu0
        %v662 = vadd.f32 0.0, %v661
        %v663 = vpop.f32.mrb[0].mxu0
        %v664 = vpop.f32.mrb[0].mxu0
        %v665 = vadd.f32 0.0, %v664
        %v666 = vpop.f32.mrb[0].mxu0
        %667 = vmatprep.mubr.bf16.mxu0 0
        %668 = vmatmul.mubr.bf16.gmra.mrb[0].mxu0 %v513
        %v669 = vpop.f32.mrb[0].mxu0
        %v670 = vadd.f32 0.0, %v669
        %v671 = vpop.f32.mrb[0].mxu0
        %v672 = vpop.f32.mrb[0].mxu0
        %v673 = vadd.f32 0.0, %v672
        %v674 = vpop.f32.mrb[0].mxu0
        %675 = vmatprep.mubr.bf16.mxu0 0
        %676 = vmatmul.mubr.bf16.gmra.mrb[0].mxu0 %v516
        %v677 = vpop.f32.mrb[0].mxu0
        %v678 = vadd.f32 0.0, %v677
        %v679 = vpop.f32.mrb[0].mxu0
        %v680 = vpop.f32.mrb[0].mxu0
        %v681 = vadd.f32 0.0, %v680
        %v682 = vpop.f32.mrb[0].mxu0
        %683 = vmatprep.mubr.bf16.mxu0 0
        %684 = vmatmul.mubr.bf16.gmra.mrb[0].mxu0 %v519
        %v685 = vpop.f32.mrb[0].mxu0
        %v686 = vadd.f32 0.0, %v685
        %v687 = vpop.f32.mrb[0].mxu0
        %v688 = vpop.f32.mrb[0].mxu0
        %v689 = vadd.f32 0.0, %v688
        %v690 = vpop.f32.mrb[0].mxu0
        %691 = vmatprep.mubr.bf16.mxu0 0
        %692 = vmatmul.mubr.bf16.gmra.mrb[0].mxu0 %v522
        %v693 = vpop.f32.mrb[0].mxu0
        %v694 = vadd.f32 0.0, %v693
        %v695 = vpop.f32.mrb[0].mxu0
        %v696 = vpop.f32.mrb[0].mxu0
        %v697 = vadd.f32 0.0, %v696
        %v698 = vpop.f32.mrb[0].mxu0
        %699 = vmatprep.mubr.bf16.mxu0 0
        %700 = vmatmul.mubr.bf16.gmra.mrb[0].mxu0 %v525
        %v701 = vpop.f32.mrb[0].mxu0
        %v702 = vadd.f32 0.0, %v701
        %v703 = vpop.f32.mrb[0].mxu0
        %v704 = vpop.f32.mrb[0].mxu0
        %v705 = vadd.f32 0.0, %v704
        %v706 = vpop.f32.mrb[0].mxu0
        %707 = vdwg.mxu0
        %v708 = vsel %vm472, %v301, 0
        %v710 = vsel %vm472, %v302, 0
        %v712 = vsel %vm472, %v303, 0
        %v714 = vsel %vm472, %v304, 0
        %v716 = vsel %vm472, %v305, 0
        %v718 = vsel %vm472, %v306, 0
        %v720 = vsel %vm472, %v307, 0
        %v722 = vsel %vm472, %v308, 0
        %v724 = vsel %vm472, %v309, 0
        %v726 = vsel %vm472, %v310, 0
        %v728 = vsel %vm472, %v311, 0
        %v730 = vsel %vm472, %v312, 0
        %v732 = vsel %vm472, %v313, 0
        %v734 = vsel %vm472, %v314, 0
        %v736 = vsel %vm472, %v315, 0
        %v738 = vsel %vm472, %v316, 0
        %v740 = vsel %vm472, %v317, 0
        %v742 = vsel %vm472, %v318, 0
        %v745 = vsel %vm527, %v319, 0
        %747 = vmatprep.subr.bf16.mxu0 0
        %748 = vmatpush1.bf16.msra.mxu0 %v745
        %749 = vmatprep.subr.bf16.mxu0 0
        %750 = vmatpush1.bf16.msra.mxu0 0
        %751 = vmatprep.subr.bf16.mxu0 0
        %752 = vmatpush1.bf16.msra.mxu0 0
        %753 = vmatprep.subr.bf16.mxu0 0
        %754 = vmatpush1.bf16.msra.mxu0 0
        %755 = vmatprep.subr.bf16.mxu0 0
        %756 = vmatpush1.bf16.msra.mxu0 0
        %757 = vmatprep.subr.bf16.mxu0 0
        %758 = vmatpush1.bf16.msra.mxu0 0
        %759 = vmatprep.subr.bf16.mxu0 0
        %760 = vmatpush1.bf16.msra.mxu0 0
        %761 = vmatprep.subr.bf16.mxu0 0
        %762 = vmatpush1.bf16.msra.mxu0 0
        %763 = vmatprep.subr.bf16.mxu0 0
        %764 = vmatpush1.bf16.msra.mxu0 0
        %765 = vmatprep.subr.bf16.mxu0 0
        %766 = vmatpush1.bf16.msra.mxu0 0
        %767 = vmatprep.subr.bf16.mxu0 0
        %768 = vmatpush1.bf16.msra.mxu0 0
        %769 = vmatprep.subr.bf16.mxu0 0
        %770 = vmatpush1.bf16.msra.mxu0 0
        %771 = vmatprep.subr.bf16.mxu0 0
        %772 = vmatpush1.bf16.msra.mxu0 0
        %773 = vmatprep.subr.bf16.mxu0 0
        %774 = vmatpush1.bf16.msra.mxu0 0
        %775 = vmatprep.subr.bf16.mxu0 0
        %776 = vmatpush1.bf16.msra.mxu0 0
        %777 = vmatprep.subr.bf16.mxu0 0
        %778 = vmatpush1.bf16.msra.mxu0 0
        %779 = vmatprep.mubr.bf16.mxu0 0
        %780 = vmatmul.mubr.bf16.gmra.mrb[0].mxu0 %v708
        %v781 = vpop.f32.mrb[0].mxu0
        %v782 = vadd.f32 %v566, %v781
        %v783 = vpop.f32.mrb[0].mxu0
        %v784 = vpop.f32.mrb[0].mxu0
        %v785 = vadd.f32 %v569, %v784
        %v786 = vpop.f32.mrb[0].mxu0
        %787 = vmatprep.mubr.bf16.mxu0 0
        %788 = vmatmul.mubr.bf16.gmra.mrb[0].mxu0 %v710
        %v789 = vpop.f32.mrb[0].mxu0
        %v790 = vadd.f32 %v574, %v789
        %v791 = vpop.f32.mrb[0].mxu0
        %v792 = vpop.f32.mrb[0].mxu0
        %v793 = vadd.f32 %v577, %v792
        %v794 = vpop.f32.mrb[0].mxu0
        %795 = vmatprep.mubr.bf16.mxu0 0
        %796 = vmatmul.mubr.bf16.gmra.mrb[0].mxu0 %v712
        %v797 = vpop.f32.mrb[0].mxu0
        %v798 = vadd.f32 %v582, %v797
        %v799 = vpop.f32.mrb[0].mxu0
        %v800 = vpop.f32.mrb[0].mxu0
        %v801 = vadd.f32 %v585, %v800
        %v802 = vpop.f32.mrb[0].mxu0
        %803 = vmatprep.mubr.bf16.mxu0 0
        %804 = vmatmul.mubr.bf16.gmra.mrb[0].mxu0 %v714
        %v805 = vpop.f32.mrb[0].mxu0
        %v806 = vadd.f32 %v590, %v805
        %v807 = vpop.f32.mrb[0].mxu0
        %v808 = vpop.f32.mrb[0].mxu0
        %v809 = vadd.f32 %v593, %v808
        %v810 = vpop.f32.mrb[0].mxu0
        %811 = vmatprep.mubr.bf16.mxu0 0
        %812 = vmatmul.mubr.bf16.gmra.mrb[0].mxu0 %v716
        %v813 = vpop.f32.mrb[0].mxu0
        %v814 = vadd.f32 %v598, %v813
        %v815 = vpop.f32.mrb[0].mxu0
        %v816 = vpop.f32.mrb[0].mxu0
        %v817 = vadd.f32 %v601, %v816
        %v818 = vpop.f32.mrb[0].mxu0
        %819 = vmatprep.mubr.bf16.mxu0 0
        %820 = vmatmul.mubr.bf16.gmra.mrb[0].mxu0 %v718
        %v821 = vpop.f32.mrb[0].mxu0
        %v822 = vadd.f32 %v606, %v821
        %v823 = vpop.f32.mrb[0].mxu0
        %v824 = vpop.f32.mrb[0].mxu0
        %v825 = vadd.f32 %v609, %v824
        %v826 = vpop.f32.mrb[0].mxu0
        %827 = vmatprep.mubr.bf16.mxu0 0
        %828 = vmatmul.mubr.bf16.gmra.mrb[0].mxu0 %v720
        %v829 = vpop.f32.mrb[0].mxu0
        %v830 = vadd.f32 %v614, %v829
        %v831 = vpop.f32.mrb[0].mxu0
        %v832 = vpop.f32.mrb[0].mxu0
        %v833 = vadd.f32 %v617, %v832
        %v834 = vpop.f32.mrb[0].mxu0
        %835 = vmatprep.mubr.bf16.mxu0 0
        %836 = vmatmul.mubr.bf16.gmra.mrb[0].mxu0 %v722
        %v837 = vpop.f32.mrb[0].mxu0
        %v838 = vadd.f32 %v622, %v837
        %v839 = vpop.f32.mrb[0].mxu0
        %v840 = vpop.f32.mrb[0].mxu0
        %v841 = vadd.f32 %v625, %v840
        %v842 = vpop.f32.mrb[0].mxu0
        %843 = vmatprep.mubr.bf16.mxu0 0
        %844 = vmatmul.mubr.bf16.gmra.mrb[0].mxu0 %v724
        %v845 = vpop.f32.mrb[0].mxu0
        %v846 = vadd.f32 %v630, %v845
        %v847 = vpop.f32.mrb[0].mxu0
        %v848 = vpop.f32.mrb[0].mxu0
        %v849 = vadd.f32 %v633, %v848
        %v850 = vpop.f32.mrb[0].mxu0
        %851 = vmatprep.mubr.bf16.mxu0 0
        %852 = vmatmul.mubr.bf16.gmra.mrb[0].mxu0 %v726
        %v853 = vpop.f32.mrb[0].mxu0
        %v854 = vadd.f32 %v638, %v853
        %v855 = vpop.f32.mrb[0].mxu0
        %v856 = vpop.f32.mrb[0].mxu0
        %v857 = vadd.f32 %v641, %v856
        %v858 = vpop.f32.mrb[0].mxu0
        %859 = vmatprep.mubr.bf16.mxu0 0
        %860 = vmatmul.mubr.bf16.gmra.mrb[0].mxu0 %v728
        %v861 = vpop.f32.mrb[0].mxu0
        %v862 = vadd.f32 %v646, %v861
        %v863 = vpop.f32.mrb[0].mxu0
        %v864 = vpop.f32.mrb[0].mxu0
        %v865 = vadd.f32 %v649, %v864
        %v866 = vpop.f32.mrb[0].mxu0
        %867 = vmatprep.mubr.bf16.mxu0 0
        %868 = vmatmul.mubr.bf16.gmra.mrb[0].mxu0 %v730
        %v869 = vpop.f32.mrb[0].mxu0
        %v870 = vadd.f32 %v654, %v869
        %v871 = vpop.f32.mrb[0].mxu0
        %v872 = vpop.f32.mrb[0].mxu0
        %v873 = vadd.f32 %v657, %v872
        %v874 = vpop.f32.mrb[0].mxu0
        %875 = vmatprep.mubr.bf16.mxu0 0
        %876 = vmatmul.mubr.bf16.gmra.mrb[0].mxu0 %v732
        %v877 = vpop.f32.mrb[0].mxu0
        %v878 = vadd.f32 %v662, %v877
        %v879 = vpop.f32.mrb[0].mxu0
        %v880 = vpop.f32.mrb[0].mxu0
        %v881 = vadd.f32 %v665, %v880
        %v882 = vpop.f32.mrb[0].mxu0
        %883 = vmatprep.mubr.bf16.mxu0 0
        %884 = vmatmul.mubr.bf16.gmra.mrb[0].mxu0 %v734
        %v885 = vpop.f32.mrb[0].mxu0
        %v886 = vadd.f32 %v670, %v885
        %v887 = vpop.f32.mrb[0].mxu0
        %v888 = vpop.f32.mrb[0].mxu0
        %v889 = vadd.f32 %v673, %v888
        %v890 = vpop.f32.mrb[0].mxu0
        %891 = vmatprep.mubr.bf16.mxu0 0
        %892 = vmatmul.mubr.bf16.gmra.mrb[0].mxu0 %v736
        %v893 = vpop.f32.mrb[0].mxu0
        %v894 = vadd.f32 %v678, %v893
        %v895 = vpop.f32.mrb[0].mxu0
        %v896 = vpop.f32.mrb[0].mxu0
        %v897 = vadd.f32 %v681, %v896
        %v898 = vpop.f32.mrb[0].mxu0
        %899 = vmatprep.mubr.bf16.mxu0 0
        %900 = vmatmul.mubr.bf16.gmra.mrb[0].mxu0 %v738
        %v901 = vpop.f32.mrb[0].mxu0
        %v902 = vadd.f32 %v686, %v901
        %v903 = vpop.f32.mrb[0].mxu0
        %v904 = vpop.f32.mrb[0].mxu0
        %v905 = vadd.f32 %v689, %v904
        %v906 = vpop.f32.mrb[0].mxu0
        %907 = vmatprep.mubr.bf16.mxu0 0
        %908 = vmatmul.mubr.bf16.gmra.mrb[0].mxu0 %v740
        %v909 = vpop.f32.mrb[0].mxu0
        %v910 = vadd.f32 %v694, %v909
        %v911 = vpop.f32.mrb[0].mxu0
        %v912 = vpop.f32.mrb[0].mxu0
        %v913 = vadd.f32 %v697, %v912
        %v914 = vpop.f32.mrb[0].mxu0
        %915 = vmatprep.mubr.bf16.mxu0 0
        %916 = vmatmul.mubr.bf16.gmra.mrb[0].mxu0 %v742
        %v917 = vpop.f32.mrb[0].mxu0
        %v918 = vadd.f32 %v702, %v917
        %v919 = vpop.f32.mrb[0].mxu0
        %v920 = vpop.f32.mrb[0].mxu0
        %v921 = vadd.f32 %v705, %v920
        %v922 = vpop.f32.mrb[0].mxu0
        %923 = vdwg.mxu0
        %s924 = scalar_lea.vmem %s1, 8
        %v925 = vld [vmem:[%s924] sm:$0xf]
        %vm945 = vcmask 1046528
        %v946 = vrot.slane %v301, 1
        %v947 = vrot.slane %v302, 1
        %v948 = vsel %vm945, %v946, %v947
        %v949 = vrot.slane %v303, 1
        %v950 = vsel %vm945, %v947, %v949
        %v951 = vrot.slane %v304, 1
        %v952 = vsel %vm945, %v949, %v951
        %v953 = vrot.slane %v305, 1
        %v954 = vsel %vm945, %v951, %v953
        %v955 = vrot.slane %v306, 1
        %v956 = vsel %vm945, %v953, %v955
        %v957 = vrot.slane %v307, 1
        %v958 = vsel %vm945, %v955, %v957
        %v959 = vrot.slane %v308, 1
        %v960 = vsel %vm945, %v957, %v959
        %v961 = vrot.slane %v309, 1
        %v962 = vsel %vm945, %v959, %v961
        %v963 = vrot.slane %v310, 1
        %v964 = vsel %vm945, %v961, %v963
        %v965 = vrot.slane %v311, 1
        %v966 = vsel %vm945, %v963, %v965
        %v967 = vrot.slane %v312, 1
        %v968 = vsel %vm945, %v965, %v967
        %v969 = vrot.slane %v313, 1
        %v970 = vsel %vm945, %v967, %v969
        %v971 = vrot.slane %v314, 1
        %v972 = vsel %vm945, %v969, %v971
        %v973 = vrot.slane %v315, 1
        %v974 = vsel %vm945, %v971, %v973
        %v975 = vrot.slane %v316, 1
        %v976 = vsel %vm945, %v973, %v975
        %v977 = vrot.slane %v317, 1
        %v978 = vsel %vm945, %v975, %v977
        %v979 = vrot.slane %v318, 1
        %v980 = vsel %vm945, %v977, %v979
        %v981 = vrot.slane %v320, 1
        %v982 = vsel %vm945, %v979, %v981
        %v984 = vsel %vm472, %v948, 0
        %v987 = vsel %vm472, %v950, 0
        %v990 = vsel %vm472, %v952, 0
        %v993 = vsel %vm472, %v954, 0
        %v996 = vsel %vm472, %v956, 0
        %v999 = vsel %vm472, %v958, 0
        %v1002 = vsel %vm472, %v960, 0
        %v1005 = vsel %vm472, %v962, 0
        %v1008 = vsel %vm472, %v964, 0
        %v1011 = vsel %vm472, %v966, 0
        %v1014 = vsel %vm472, %v968, 0
        %v1017 = vsel %vm472, %v970, 0
        %v1020 = vsel %vm472, %v972, 0
        %v1023 = vsel %vm472, %v974, 0
        %v1026 = vsel %vm472, %v976, 0
        %v1029 = vsel %vm472, %v978, 0
        %v1032 = vsel %vm472, %v980, 0
        %v1035 = vsel %vm472, %v982, 0
        %v1038 = vsel %vm527, %v925, 0
        %1040 = vmatprep.subr.bf16.mxu0 0
        %1041 = vmatpush1.bf16.msra.mxu0 %v1038
        %1042 = vmatprep.subr.bf16.mxu0 0
        %1043 = vmatpush1.bf16.msra.mxu0 0
        %1044 = vmatprep.subr.bf16.mxu0 0
        %1045 = vmatpush1.bf16.msra.mxu0 0
        %1046 = vmatprep.subr.bf16.mxu0 0
        %1047 = vmatpush1.bf16.msra.mxu0 0
        %1048 = vmatprep.subr.bf16.mxu0 0
        %1049 = vmatpush1.bf16.msra.mxu0 0
        %1050 = vmatprep.subr.bf16.mxu0 0
        %1051 = vmatpush1.bf16.msra.mxu0 0
        %1052 = vmatprep.subr.bf16.mxu0 0
        %1053 = vmatpush1.bf16.msra.mxu0 0
        %1054 = vmatprep.subr.bf16.mxu0 0
        %1055 = vmatpush1.bf16.msra.mxu0 0
        %1056 = vmatprep.subr.bf16.mxu0 0
        %1057 = vmatpush1.bf16.msra.mxu0 0
        %1058 = vmatprep.subr.bf16.mxu0 0
        %1059 = vmatpush1.bf16.msra.mxu0 0
        %1060 = vmatprep.subr.bf16.mxu0 0
        %1061 = vmatpush1.bf16.msra.mxu0 0
        %1062 = vmatprep.subr.bf16.mxu0 0
        %1063 = vmatpush1.bf16.msra.mxu0 0
        %1064 = vmatprep.subr.bf16.mxu0 0
        %1065 = vmatpush1.bf16.msra.mxu0 0
        %1066 = vmatprep.subr.bf16.mxu0 0
        %1067 = vmatpush1.bf16.msra.mxu0 0
        %1068 = vmatprep.subr.bf16.mxu0 0
        %1069 = vmatpush1.bf16.msra.mxu0 0
        %1070 = vmatprep.subr.bf16.mxu0 0
        %1071 = vmatpush1.bf16.msra.mxu0 0
        %1072 = vmatprep.mubr.bf16.mxu0 0
        %1073 = vmatmul.mubr.bf16.gmra.mrb[0].mxu0 %v984
        %v1074 = vpop.f32.mrb[0].mxu0
        %v1075 = vadd.f32 0.0, %v1074
        %v1076 = vpop.f32.mrb[0].mxu0
        %v1077 = vpop.f32.mrb[0].mxu0
        %v1078 = vadd.f32 0.0, %v1077
        %v1079 = vpop.f32.mrb[0].mxu0
        %1080 = vmatprep.mubr.bf16.mxu0 0
        %1081 = vmatmul.mubr.bf16.gmra.mrb[0].mxu0 %v987
        %v1082 = vpop.f32.mrb[0].mxu0
        %v1083 = vadd.f32 0.0, %v1082
        %v1084 = vpop.f32.mrb[0].mxu0
        %v1085 = vpop.f32.mrb[0].mxu0
        %v1086 = vadd.f32 0.0, %v1085
        %v1087 = vpop.f32.mrb[0].mxu0
        %1088 = vmatprep.mubr.bf16.mxu0 0
        %1089 = vmatmul.mubr.bf16.gmra.mrb[0].mxu0 %v990
        %v1090 = vpop.f32.mrb[0].mxu0
        %v1091 = vadd.f32 0.0, %v1090
        %v1092 = vpop.f32.mrb[0].mxu0
        %v1093 = vpop.f32.mrb[0].mxu0
        %v1094 = vadd.f32 0.0, %v1093
        %v1095 = vpop.f32.mrb[0].mxu0
        %1096 = vmatprep.mubr.bf16.mxu0 0
        %1097 = vmatmul.mubr.bf16.gmra.mrb[0].mxu0 %v993
        %v1098 = vpop.f32.mrb[0].mxu0
        %v1099 = vadd.f32 0.0, %v1098
        %v1100 = vpop.f32.mrb[0].mxu0
        %v1101 = vpop.f32.mrb[0].mxu0
        %v1102 = vadd.f32 0.0, %v1101
        %v1103 = vpop.f32.mrb[0].mxu0
        %1104 = vmatprep.mubr.bf16.mxu0 0
        %1105 = vmatmul.mubr.bf16.gmra.mrb[0].mxu0 %v996
        %v1106 = vpop.f32.mrb[0].mxu0
        %v1107 = vadd.f32 0.0, %v1106
        %v1108 = vpop.f32.mrb[0].mxu0
        %v1109 = vpop.f32.mrb[0].mxu0
        %v1110 = vadd.f32 0.0, %v1109
        %v1111 = vpop.f32.mrb[0].mxu0
        %1112 = vmatprep.mubr.bf16.mxu0 0
        %1113 = vmatmul.mubr.bf16.gmra.mrb[0].mxu0 %v999
        %v1114 = vpop.f32.mrb[0].mxu0
        %v1115 = vadd.f32 0.0, %v1114
        %v1116 = vpop.f32.mrb[0].mxu0
        %v1117 = vpop.f32.mrb[0].mxu0
        %v1118 = vadd.f32 0.0, %v1117
        %v1119 = vpop.f32.mrb[0].mxu0
        %1120 = vmatprep.mubr.bf16.mxu0 0
        %1121 = vmatmul.mubr.bf16.gmra.mrb[0].mxu0 %v1002
        %v1122 = vpop.f32.mrb[0].mxu0
        %v1123 = vadd.f32 0.0, %v1122
        %v1124 = vpop.f32.mrb[0].mxu0
        %v1125 = vpop.f32.mrb[0].mxu0
        %v1126 = vadd.f32 0.0, %v1125
        %v1127 = vpop.f32.mrb[0].mxu0
        %1128 = vmatprep.mubr.bf16.mxu0 0
        %1129 = vmatmul.mubr.bf16.gmra.mrb[0].mxu0 %v1005
        %v1130 = vpop.f32.mrb[0].mxu0
        %v1131 = vadd.f32 0.0, %v1130
        %v1132 = vpop.f32.mrb[0].mxu0
        %v1133 = vpop.f32.mrb[0].mxu0
        %v1134 = vadd.f32 0.0, %v1133
        %v1135 = vpop.f32.mrb[0].mxu0
        %1136 = vmatprep.mubr.bf16.mxu0 0
        %1137 = vmatmul.mubr.bf16.gmra.mrb[0].mxu0 %v1008
        %v1138 = vpop.f32.mrb[0].mxu0
        %v1139 = vadd.f32 0.0, %v1138
        %v1140 = vpop.f32.mrb[0].mxu0
        %v1141 = vpop.f32.mrb[0].mxu0
        %v1142 = vadd.f32 0.0, %v1141
        %v1143 = vpop.f32.mrb[0].mxu0
        %1144 = vmatprep.mubr.bf16.mxu0 0
        %1145 = vmatmul.mubr.bf16.gmra.mrb[0].mxu0 %v1011
        %v1146 = vpop.f32.mrb[0].mxu0
        %v1147 = vadd.f32 0.0, %v1146
        %v1148 = vpop.f32.mrb[0].mxu0
        %v1149 = vpop.f32.mrb[0].mxu0
        %v1150 = vadd.f32 0.0, %v1149
        %v1151 = vpop.f32.mrb[0].mxu0
        %1152 = vmatprep.mubr.bf16.mxu0 0
        %1153 = vmatmul.mubr.bf16.gmra.mrb[0].mxu0 %v1014
        %v1154 = vpop.f32.mrb[0].mxu0
        %v1155 = vadd.f32 0.0, %v1154
        %v1156 = vpop.f32.mrb[0].mxu0
        %v1157 = vpop.f32.mrb[0].mxu0
        %v1158 = vadd.f32 0.0, %v1157
        %v1159 = vpop.f32.mrb[0].mxu0
        %1160 = vmatprep.mubr.bf16.mxu0 0
        %1161 = vmatmul.mubr.bf16.gmra.mrb[0].mxu0 %v1017
        %v1162 = vpop.f32.mrb[0].mxu0
        %v1163 = vadd.f32 0.0, %v1162
        %v1164 = vpop.f32.mrb[0].mxu0
        %v1165 = vpop.f32.mrb[0].mxu0
        %v1166 = vadd.f32 0.0, %v1165
        %v1167 = vpop.f32.mrb[0].mxu0
        %1168 = vmatprep.mubr.bf16.mxu0 0
        %1169 = vmatmul.mubr.bf16.gmra.mrb[0].mxu0 %v1020
        %v1170 = vpop.f32.mrb[0].mxu0
        %v1171 = vadd.f32 0.0, %v1170
        %v1172 = vpop.f32.mrb[0].mxu0
        %v1173 = vpop.f32.mrb[0].mxu0
        %v1174 = vadd.f32 0.0, %v1173
        %v1175 = vpop.f32.mrb[0].mxu0
        %1176 = vmatprep.mubr.bf16.mxu0 0
        %1177 = vmatmul.mubr.bf16.gmra.mrb[0].mxu0 %v1023
        %v1178 = vpop.f32.mrb[0].mxu0
        %v1179 = vadd.f32 0.0, %v1178
        %v1180 = vpop.f32.mrb[0].mxu0
        %v1181 = vpop.f32.mrb[0].mxu0
        %v1182 = vadd.f32 0.0, %v1181
        %v1183 = vpop.f32.mrb[0].mxu0
        %1184 = vmatprep.mubr.bf16.mxu0 0
        %1185 = vmatmul.mubr.bf16.gmra.mrb[0].mxu0 %v1026
        %v1186 = vpop.f32.mrb[0].mxu0
        %v1187 = vadd.f32 0.0, %v1186
        %v1188 = vpop.f32.mrb[0].mxu0
        %v1189 = vpop.f32.mrb[0].mxu0
        %v1190 = vadd.f32 0.0, %v1189
        %v1191 = vpop.f32.mrb[0].mxu0
        %1192 = vmatprep.mubr.bf16.mxu0 0
        %1193 = vmatmul.mubr.bf16.gmra.mrb[0].mxu0 %v1029
        %v1194 = vpop.f32.mrb[0].mxu0
        %v1195 = vadd.f32 0.0, %v1194
        %v1196 = vpop.f32.mrb[0].mxu0
        %v1197 = vpop.f32.mrb[0].mxu0
        %v1198 = vadd.f32 0.0, %v1197
        %v1199 = vpop.f32.mrb[0].mxu0
        %1200 = vmatprep.mubr.bf16.mxu0 0
        %1201 = vmatmul.mubr.bf16.gmra.mrb[0].mxu0 %v1032
        %v1202 = vpop.f32.mrb[0].mxu0
        %v1203 = vadd.f32 0.0, %v1202
        %v1204 = vpop.f32.mrb[0].mxu0
        %v1205 = vpop.f32.mrb[0].mxu0
        %v1206 = vadd.f32 0.0, %v1205
        %v1207 = vpop.f32.mrb[0].mxu0
        %1208 = vmatprep.mubr.bf16.mxu0 0
        %1209 = vmatmul.mubr.bf16.gmra.mrb[0].mxu0 %v1035
        %v1210 = vpop.f32.mrb[0].mxu0
        %v1211 = vadd.f32 0.0, %v1210
        %v1212 = vpop.f32.mrb[0].mxu0
        %v1213 = vpop.f32.mrb[0].mxu0
        %v1214 = vadd.f32 0.0, %v1213
        %v1215 = vpop.f32.mrb[0].mxu0
        %1216 = vdwg.mxu0
        %v1217 = vadd.f32 %v782, %v1075
        %v1218 = vadd.f32 %v785, %v1078
        %v1219 = vadd.f32 %v790, %v1083
        %v1220 = vadd.f32 %v793, %v1086
        %v1221 = vadd.f32 %v798, %v1091
        %v1222 = vadd.f32 %v801, %v1094
        %v1223 = vadd.f32 %v806, %v1099
        %v1224 = vadd.f32 %v809, %v1102
        %v1225 = vadd.f32 %v814, %v1107
        %v1226 = vadd.f32 %v817, %v1110
        %v1227 = vadd.f32 %v822, %v1115
        %v1228 = vadd.f32 %v825, %v1118
        %v1229 = vadd.f32 %v830, %v1123
        %v1230 = vadd.f32 %v833, %v1126
        %v1231 = vadd.f32 %v838, %v1131
        %v1232 = vadd.f32 %v841, %v1134
        %v1233 = vadd.f32 %v846, %v1139
        %v1234 = vadd.f32 %v849, %v1142
        %v1235 = vadd.f32 %v854, %v1147
        %v1236 = vadd.f32 %v857, %v1150
        %v1237 = vadd.f32 %v862, %v1155
        %v1238 = vadd.f32 %v865, %v1158
        %v1239 = vadd.f32 %v870, %v1163
        %v1240 = vadd.f32 %v873, %v1166
        %v1241 = vadd.f32 %v878, %v1171
        %v1242 = vadd.f32 %v881, %v1174
        %v1243 = vadd.f32 %v886, %v1179
        %v1244 = vadd.f32 %v889, %v1182
        %v1245 = vadd.f32 %v894, %v1187
        %v1246 = vadd.f32 %v897, %v1190
        %v1247 = vadd.f32 %v902, %v1195
        %v1248 = vadd.f32 %v905, %v1198
        %v1249 = vadd.f32 %v910, %v1203
        %v1250 = vadd.f32 %v913, %v1206
        %v1251 = vadd.f32 %v918, %v1211
        %v1252 = vadd.f32 %v921, %v1214
        %v1253 = vpack.c.bf16 %v297, %v296
        %v1254 = vpack.c.bf16 %v298, %v298
        %s1255 = scalar_lea.vmem %s1, 12
        %v1256 = vld [vmem:[%s1255] sm:$0xf]
        %v1259 = vrot.slane %v1253, 1
        %v1260 = vsel %vm945, %v979, %v1259
        %v1261 = vrot.slane %v1254, 1
        %v1262 = vsel %vm945, %v1259, %v1261
        %v1264 = vsel %vm472, %v1260, 0
        %v1267 = vsel %vm472, %v1262, 0
        %v1270 = vsel %vm527, %v1256, 0
        %1272 = vmatprep.subr.bf16.mxu0 0
        %1273 = vmatpush1.bf16.msra.mxu0 %v1270
        %1274 = vmatprep.subr.bf16.mxu0 0
        %1275 = vmatpush1.bf16.msra.mxu0 0
        %1276 = vmatprep.subr.bf16.mxu0 0
        %1277 = vmatpush1.bf16.msra.mxu0 0
        %1278 = vmatprep.subr.bf16.mxu0 0
        %1279 = vmatpush1.bf16.msra.mxu0 0
        %1280 = vmatprep.subr.bf16.mxu0 0
        %1281 = vmatpush1.bf16.msra.mxu0 0
        %1282 = vmatprep.subr.bf16.mxu0 0
        %1283 = vmatpush1.bf16.msra.mxu0 0
        %1284 = vmatprep.subr.bf16.mxu0 0
        %1285 = vmatpush1.bf16.msra.mxu0 0
        %1286 = vmatprep.subr.bf16.mxu0 0
        %1287 = vmatpush1.bf16.msra.mxu0 0
        %1288 = vmatprep.subr.bf16.mxu0 0
        %1289 = vmatpush1.bf16.msra.mxu0 0
        %1290 = vmatprep.subr.bf16.mxu0 0
        %1291 = vmatpush1.bf16.msra.mxu0 0
        %1292 = vmatprep.subr.bf16.mxu0 0
        %1293 = vmatpush1.bf16.msra.mxu0 0
        %1294 = vmatprep.subr.bf16.mxu0 0
        %1295 = vmatpush1.bf16.msra.mxu0 0
        %1296 = vmatprep.subr.bf16.mxu0 0
        %1297 = vmatpush1.bf16.msra.mxu0 0
        %1298 = vmatprep.subr.bf16.mxu0 0
        %1299 = vmatpush1.bf16.msra.mxu0 0
        %1300 = vmatprep.subr.bf16.mxu0 0
        %1301 = vmatpush1.bf16.msra.mxu0 0
        %1302 = vmatprep.subr.bf16.mxu0 0
        %1303 = vmatpush1.bf16.msra.mxu0 0
        %1304 = vmatprep.mubr.bf16.mxu0 0
        %1305 = vmatmul.mubr.bf16.gmra.mrb[0].mxu0 %v987
        %v1306 = vpop.f32.mrb[0].mxu0
        %v1307 = vadd.f32 0.0, %v1306
        %v1308 = vpop.f32.mrb[0].mxu0
        %v1309 = vpop.f32.mrb[0].mxu0
        %v1310 = vadd.f32 0.0, %v1309
        %v1311 = vpop.f32.mrb[0].mxu0
        %1312 = vmatprep.mubr.bf16.mxu0 0
        %1313 = vmatmul.mubr.bf16.gmra.mrb[0].mxu0 %v990
        %v1314 = vpop.f32.mrb[0].mxu0
        %v1315 = vadd.f32 0.0, %v1314
        %v1316 = vpop.f32.mrb[0].mxu0
        %v1317 = vpop.f32.mrb[0].mxu0
        %v1318 = vadd.f32 0.0, %v1317
        %v1319 = vpop.f32.mrb[0].mxu0
        %1320 = vmatprep.mubr.bf16.mxu0 0
        %1321 = vmatmul.mubr.bf16.gmra.mrb[0].mxu0 %v993
        %v1322 = vpop.f32.mrb[0].mxu0
        %v1323 = vadd.f32 0.0, %v1322
        %v1324 = vpop.f32.mrb[0].mxu0
        %v1325 = vpop.f32.mrb[0].mxu0
        %v1326 = vadd.f32 0.0, %v1325
        %v1327 = vpop.f32.mrb[0].mxu0
        %1328 = vmatprep.mubr.bf16.mxu0 0
        %1329 = vmatmul.mubr.bf16.gmra.mrb[0].mxu0 %v996
        %v1330 = vpop.f32.mrb[0].mxu0
        %v1331 = vadd.f32 0.0, %v1330
        %v1332 = vpop.f32.mrb[0].mxu0
        %v1333 = vpop.f32.mrb[0].mxu0
        %v1334 = vadd.f32 0.0, %v1333
        %v1335 = vpop.f32.mrb[0].mxu0
        %1336 = vmatprep.mubr.bf16.mxu0 0
        %1337 = vmatmul.mubr.bf16.gmra.mrb[0].mxu0 %v999
        %v1338 = vpop.f32.mrb[0].mxu0
        %v1339 = vadd.f32 0.0, %v1338
        %v1340 = vpop.f32.mrb[0].mxu0
        %v1341 = vpop.f32.mrb[0].mxu0
        %v1342 = vadd.f32 0.0, %v1341
        %v1343 = vpop.f32.mrb[0].mxu0
        %1344 = vmatprep.mubr.bf16.mxu0 0
        %1345 = vmatmul.mubr.bf16.gmra.mrb[0].mxu0 %v1002
        %v1346 = vpop.f32.mrb[0].mxu0
        %v1347 = vadd.f32 0.0, %v1346
        %v1348 = vpop.f32.mrb[0].mxu0
        %v1349 = vpop.f32.mrb[0].mxu0
        %v1350 = vadd.f32 0.0, %v1349
        %v1351 = vpop.f32.mrb[0].mxu0
        %1352 = vmatprep.mubr.bf16.mxu0 0
        %1353 = vmatmul.mubr.bf16.gmra.mrb[0].mxu0 %v1005
        %v1354 = vpop.f32.mrb[0].mxu0
        %v1355 = vadd.f32 0.0, %v1354
        %v1356 = vpop.f32.mrb[0].mxu0
        %v1357 = vpop.f32.mrb[0].mxu0
        %v1358 = vadd.f32 0.0, %v1357
        %v1359 = vpop.f32.mrb[0].mxu0
        %1360 = vmatprep.mubr.bf16.mxu0 0
        %1361 = vmatmul.mubr.bf16.gmra.mrb[0].mxu0 %v1008
        %v1362 = vpop.f32.mrb[0].mxu0
        %v1363 = vadd.f32 0.0, %v1362
        %v1364 = vpop.f32.mrb[0].mxu0
        %v1365 = vpop.f32.mrb[0].mxu0
        %v1366 = vadd.f32 0.0, %v1365
        %v1367 = vpop.f32.mrb[0].mxu0
        %1368 = vmatprep.mubr.bf16.mxu0 0
        %1369 = vmatmul.mubr.bf16.gmra.mrb[0].mxu0 %v1011
        %v1370 = vpop.f32.mrb[0].mxu0
        %v1371 = vadd.f32 0.0, %v1370
        %v1372 = vpop.f32.mrb[0].mxu0
        %v1373 = vpop.f32.mrb[0].mxu0
        %v1374 = vadd.f32 0.0, %v1373
        %v1375 = vpop.f32.mrb[0].mxu0
        %1376 = vmatprep.mubr.bf16.mxu0 0
        %1377 = vmatmul.mubr.bf16.gmra.mrb[0].mxu0 %v1014
        %v1378 = vpop.f32.mrb[0].mxu0
        %v1379 = vadd.f32 0.0, %v1378
        %v1380 = vpop.f32.mrb[0].mxu0
        %v1381 = vpop.f32.mrb[0].mxu0
        %v1382 = vadd.f32 0.0, %v1381
        %v1383 = vpop.f32.mrb[0].mxu0
        %1384 = vmatprep.mubr.bf16.mxu0 0
        %1385 = vmatmul.mubr.bf16.gmra.mrb[0].mxu0 %v1017
        %v1386 = vpop.f32.mrb[0].mxu0
        %v1387 = vadd.f32 0.0, %v1386
        %v1388 = vpop.f32.mrb[0].mxu0
        %v1389 = vpop.f32.mrb[0].mxu0
        %v1390 = vadd.f32 0.0, %v1389
        %v1391 = vpop.f32.mrb[0].mxu0
        %1392 = vmatprep.mubr.bf16.mxu0 0
        %1393 = vmatmul.mubr.bf16.gmra.mrb[0].mxu0 %v1020
        %v1394 = vpop.f32.mrb[0].mxu0
        %v1395 = vadd.f32 0.0, %v1394
        %v1396 = vpop.f32.mrb[0].mxu0
        %v1397 = vpop.f32.mrb[0].mxu0
        %v1398 = vadd.f32 0.0, %v1397
        %v1399 = vpop.f32.mrb[0].mxu0
        %1400 = vmatprep.mubr.bf16.mxu0 0
        %1401 = vmatmul.mubr.bf16.gmra.mrb[0].mxu0 %v1023
        %v1402 = vpop.f32.mrb[0].mxu0
        %v1403 = vadd.f32 0.0, %v1402
        %v1404 = vpop.f32.mrb[0].mxu0
        %v1405 = vpop.f32.mrb[0].mxu0
        %v1406 = vadd.f32 0.0, %v1405
        %v1407 = vpop.f32.mrb[0].mxu0
        %1408 = vmatprep.mubr.bf16.mxu0 0
        %1409 = vmatmul.mubr.bf16.gmra.mrb[0].mxu0 %v1026
        %v1410 = vpop.f32.mrb[0].mxu0
        %v1411 = vadd.f32 0.0, %v1410
        %v1412 = vpop.f32.mrb[0].mxu0
        %v1413 = vpop.f32.mrb[0].mxu0
        %v1414 = vadd.f32 0.0, %v1413
        %v1415 = vpop.f32.mrb[0].mxu0
        %1416 = vmatprep.mubr.bf16.mxu0 0
        %1417 = vmatmul.mubr.bf16.gmra.mrb[0].mxu0 %v1029
        %v1418 = vpop.f32.mrb[0].mxu0
        %v1419 = vadd.f32 0.0, %v1418
        %v1420 = vpop.f32.mrb[0].mxu0
        %v1421 = vpop.f32.mrb[0].mxu0
        %v1422 = vadd.f32 0.0, %v1421
        %v1423 = vpop.f32.mrb[0].mxu0
        %1424 = vmatprep.mubr.bf16.mxu0 0
        %1425 = vmatmul.mubr.bf16.gmra.mrb[0].mxu0 %v1032
        %v1426 = vpop.f32.mrb[0].mxu0
        %v1427 = vadd.f32 0.0, %v1426
        %v1428 = vpop.f32.mrb[0].mxu0
        %v1429 = vpop.f32.mrb[0].mxu0
        %v1430 = vadd.f32 0.0, %v1429
        %v1431 = vpop.f32.mrb[0].mxu0
        %1432 = vmatprep.mubr.bf16.mxu0 0
        %1433 = vmatmul.mubr.bf16.gmra.mrb[0].mxu0 %v1264
        %v1434 = vpop.f32.mrb[0].mxu0
        %v1435 = vadd.f32 0.0, %v1434
        %v1436 = vpop.f32.mrb[0].mxu0
        %v1437 = vpop.f32.mrb[0].mxu0
        %v1438 = vadd.f32 0.0, %v1437
        %v1439 = vpop.f32.mrb[0].mxu0
        %1440 = vmatprep.mubr.bf16.mxu0 0
        %1441 = vmatmul.mubr.bf16.gmra.mrb[0].mxu0 %v1267
        %v1442 = vpop.f32.mrb[0].mxu0
        %v1443 = vadd.f32 0.0, %v1442
        %v1444 = vpop.f32.mrb[0].mxu0
        %v1445 = vpop.f32.mrb[0].mxu0
        %v1446 = vadd.f32 0.0, %v1445
        %v1447 = vpop.f32.mrb[0].mxu0
        %1448 = vdwg.mxu0
        %v1449 = vadd.f32 %v1217, %v1307
        %v1450 = vadd.f32 %v1218, %v1310
        %v1451 = vadd.f32 %v1219, %v1315
        %v1452 = vadd.f32 %v1220, %v1318
        %v1453 = vadd.f32 %v1221, %v1323
        %v1454 = vadd.f32 %v1222, %v1326
        %v1455 = vadd.f32 %v1223, %v1331
        %v1456 = vadd.f32 %v1224, %v1334
        %v1457 = vadd.f32 %v1225, %v1339
        %v1458 = vadd.f32 %v1226, %v1342
        %v1459 = vadd.f32 %v1227, %v1347
        %v1460 = vadd.f32 %v1228, %v1350
        %v1461 = vadd.f32 %v1229, %v1355
        %v1462 = vadd.f32 %v1230, %v1358
        %v1463 = vadd.f32 %v1231, %v1363
        %v1464 = vadd.f32 %v1232, %v1366
        %v1465 = vadd.f32 %v1233, %v1371
        %v1466 = vadd.f32 %v1234, %v1374
        %v1467 = vadd.f32 %v1235, %v1379
        %v1468 = vadd.f32 %v1236, %v1382
        %v1469 = vadd.f32 %v1237, %v1387
        %v1470 = vadd.f32 %v1238, %v1390
        %v1471 = vadd.f32 %v1239, %v1395
        %v1472 = vadd.f32 %v1240, %v1398
        %v1473 = vadd.f32 %v1241, %v1403
        %v1474 = vadd.f32 %v1242, %v1406
        %v1475 = vadd.f32 %v1243, %v1411
        %v1476 = vadd.f32 %v1244, %v1414
        %v1477 = vadd.f32 %v1245, %v1419
        %v1478 = vadd.f32 %v1246, %v1422
        %v1479 = vadd.f32 %v1247, %v1427
        %v1480 = vadd.f32 %v1248, %v1430
        %v1481 = vadd.f32 %v1249, %v1435
        %v1482 = vadd.f32 %v1250, %v1438
        %v1483 = vadd.f32 %v1251, %v1443
        %v1484 = vadd.f32 %v1252, %v1446
        %s1485 = scalar_lea.vmem %s1, 16
        %v1486 = vld [vmem:[%s1485] sm:$0xf]
        %vm1487 = vsmask.f32 6400
        %v1488 = vrot.slane %v336, 1
        %v1489 = vrot.slane %v332, 2
        %v1490 = vor.u32 %v1488, %v1489
        %v1491 = vrot.slane %v344, 1
        %v1492 = vrot.slane %v340, 2
        %v1493 = vor.u32 %v1491, %v1492
        %v1494 = vsel %vm1487, %v1490, %v1493
        %v1495 = vrot.slane %v352, 1
        %v1496 = vrot.slane %v348, 2
        %v1497 = vor.u32 %v1495, %v1496
        %v1498 = vsel %vm1487, %v1493, %v1497
        %v1499 = vrot.slane %v360, 1
        %v1500 = vrot.slane %v356, 2
        %v1501 = vor.u32 %v1499, %v1500
        %v1502 = vsel %vm1487, %v1497, %v1501
        %v1503 = vrot.slane %v368, 1
        %v1504 = vrot.slane %v364, 2
        %v1505 = vor.u32 %v1503, %v1504
        %v1506 = vsel %vm1487, %v1501, %v1505
        %v1507 = vrot.slane %v376, 1
        %v1508 = vrot.slane %v372, 2
        %v1509 = vor.u32 %v1507, %v1508
        %v1510 = vsel %vm1487, %v1505, %v1509
        %v1511 = vrot.slane %v384, 1
        %v1512 = vrot.slane %v380, 2
        %v1513 = vor.u32 %v1511, %v1512
        %v1514 = vsel %vm1487, %v1509, %v1513
        %v1515 = vrot.slane %v392, 1
        %v1516 = vrot.slane %v388, 2
        %v1517 = vor.u32 %v1515, %v1516
        %v1518 = vsel %vm1487, %v1513, %v1517
        %v1519 = vrot.slane %v400, 1
        %v1520 = vrot.slane %v396, 2
        %v1521 = vor.u32 %v1519, %v1520
        %v1522 = vsel %vm1487, %v1517, %v1521
        %v1523 = vrot.slane %v408, 1
        %v1524 = vrot.slane %v404, 2
        %v1525 = vor.u32 %v1523, %v1524
        %v1526 = vsel %vm1487, %v1521, %v1525
        %v1527 = vrot.slane %v416, 1
        %v1528 = vrot.slane %v412, 2
        %v1529 = vor.u32 %v1527, %v1528
        %v1530 = vsel %vm1487, %v1525, %v1529
        %v1531 = vrot.slane %v424, 1
        %v1532 = vrot.slane %v420, 2
        %v1533 = vor.u32 %v1531, %v1532
        %v1534 = vsel %vm1487, %v1529, %v1533
        %v1535 = vrot.slane %v432, 1
        %v1536 = vrot.slane %v428, 2
        %v1537 = vor.u32 %v1535, %v1536
        %v1538 = vsel %vm1487, %v1533, %v1537
        %v1539 = vrot.slane %v440, 1
        %v1540 = vrot.slane %v436, 2
        %v1541 = vor.u32 %v1539, %v1540
        %v1542 = vsel %vm1487, %v1537, %v1541
        %v1543 = vrot.slane %v448, 1
        %v1544 = vrot.slane %v444, 2
        %v1545 = vor.u32 %v1543, %v1544
        %v1546 = vsel %vm1487, %v1541, %v1545
        %v1547 = vrot.slane %v456, 1
        %v1548 = vrot.slane %v452, 2
        %v1549 = vor.u32 %v1547, %v1548
        %v1550 = vsel %vm1487, %v1545, %v1549
        %v1551 = vrot.slane %v464, 1
        %v1552 = vrot.slane %v460, 2
        %v1553 = vor.u32 %v1551, %v1552
        %v1554 = vsel %vm1487, %v1549, %v1553
        %v1556 = vshrl.u32 %v1253, 16
        %v1558 = vrot.slane %v1556, 1
        %v1559 = vshll.u32 %v1253, 16
        %v1561 = vrot.slane %v1559, 2
        %v1562 = vor.u32 %v1558, %v1561
        %v1563 = vsel %vm1487, %v1553, %v1562
        %v1565 = vshrl.u32 %v1254, 16
        %v1567 = vrot.slane %v1565, 1
        %v1568 = vshll.u32 %v1254, 16
        %v1570 = vrot.slane %v1568, 2
        %v1571 = vor.u32 %v1567, %v1570
        %v1572 = vsel %vm1487, %v1562, %v1571
        %v1574 = vsel %vm472, %v1494, 0
        %v1577 = vsel %vm472, %v1498, 0
        %v1580 = vsel %vm472, %v1502, 0
        %v1583 = vsel %vm472, %v1506, 0
        %v1586 = vsel %vm472, %v1510, 0
        %v1589 = vsel %vm472, %v1514, 0
        %v1592 = vsel %vm472, %v1518, 0
        %v1595 = vsel %vm472, %v1522, 0
        %v1598 = vsel %vm472, %v1526, 0
        %v1601 = vsel %vm472, %v1530, 0
        %v1604 = vsel %vm472, %v1534, 0
        %v1607 = vsel %vm472, %v1538, 0
        %v1610 = vsel %vm472, %v1542, 0
        %v1613 = vsel %vm472, %v1546, 0
        %v1616 = vsel %vm472, %v1550, 0
        %v1619 = vsel %vm472, %v1554, 0
        %v1622 = vsel %vm472, %v1563, 0
        %v1625 = vsel %vm472, %v1572, 0
        %v1628 = vsel %vm527, %v1486, 0
        %1630 = vmatprep.subr.bf16.mxu0 0
        %1631 = vmatpush1.bf16.msra.mxu0 %v1628
        %1632 = vmatprep.subr.bf16.mxu0 0
        %1633 = vmatpush1.bf16.msra.mxu0 0
        %1634 = vmatprep.subr.bf16.mxu0 0
        %1635 = vmatpush1.bf16.msra.mxu0 0
        %1636 = vmatprep.subr.bf16.mxu0 0
        %1637 = vmatpush1.bf16.msra.mxu0 0
        %1638 = vmatprep.subr.bf16.mxu0 0
        %1639 = vmatpush1.bf16.msra.mxu0 0
        %1640 = vmatprep.subr.bf16.mxu0 0
        %1641 = vmatpush1.bf16.msra.mxu0 0
        %1642 = vmatprep.subr.bf16.mxu0 0
        %1643 = vmatpush1.bf16.msra.mxu0 0
        %1644 = vmatprep.subr.bf16.mxu0 0
        %1645 = vmatpush1.bf16.msra.mxu0 0
        %1646 = vmatprep.subr.bf16.mxu0 0
        %1647 = vmatpush1.bf16.msra.mxu0 0
        %1648 = vmatprep.subr.bf16.mxu0 0
        %1649 = vmatpush1.bf16.msra.mxu0 0
        %1650 = vmatprep.subr.bf16.mxu0 0
        %1651 = vmatpush1.bf16.msra.mxu0 0
        %1652 = vmatprep.subr.bf16.mxu0 0
        %1653 = vmatpush1.bf16.msra.mxu0 0
        %1654 = vmatprep.subr.bf16.mxu0 0
        %1655 = vmatpush1.bf16.msra.mxu0 0
        %1656 = vmatprep.subr.bf16.mxu0 0
        %1657 = vmatpush1.bf16.msra.mxu0 0
        %1658 = vmatprep.subr.bf16.mxu0 0
        %1659 = vmatpush1.bf16.msra.mxu0 0
        %1660 = vmatprep.subr.bf16.mxu0 0
        %1661 = vmatpush1.bf16.msra.mxu0 0
        %1662 = vmatprep.mubr.bf16.mxu0 0
        %1663 = vmatmul.mubr.bf16.gmra.mrb[0].mxu0 %v1574
        %v1664 = vpop.f32.mrb[0].mxu0
        %v1665 = vadd.f32 0.0, %v1664
        %v1666 = vpop.f32.mrb[0].mxu0
        %v1667 = vpop.f32.mrb[0].mxu0
        %v1668 = vadd.f32 0.0, %v1667
        %v1669 = vpop.f32.mrb[0].mxu0
        %1670 = vmatprep.mubr.bf16.mxu0 0
        %1671 = vmatmul.mubr.bf16.gmra.mrb[0].mxu0 %v1577
        %v1672 = vpop.f32.mrb[0].mxu0
        %v1673 = vadd.f32 0.0, %v1672
        %v1674 = vpop.f32.mrb[0].mxu0
        %v1675 = vpop.f32.mrb[0].mxu0
        %v1676 = vadd.f32 0.0, %v1675
        %v1677 = vpop.f32.mrb[0].mxu0
        %1678 = vmatprep.mubr.bf16.mxu0 0
        %1679 = vmatmul.mubr.bf16.gmra.mrb[0].mxu0 %v1580
        %v1680 = vpop.f32.mrb[0].mxu0
        %v1681 = vadd.f32 0.0, %v1680
        %v1682 = vpop.f32.mrb[0].mxu0
        %v1683 = vpop.f32.mrb[0].mxu0
        %v1684 = vadd.f32 0.0, %v1683
        %v1685 = vpop.f32.mrb[0].mxu0
        %1686 = vmatprep.mubr.bf16.mxu0 0
        %1687 = vmatmul.mubr.bf16.gmra.mrb[0].mxu0 %v1583
        %v1688 = vpop.f32.mrb[0].mxu0
        %v1689 = vadd.f32 0.0, %v1688
        %v1690 = vpop.f32.mrb[0].mxu0
        %v1691 = vpop.f32.mrb[0].mxu0
        %v1692 = vadd.f32 0.0, %v1691
        %v1693 = vpop.f32.mrb[0].mxu0
        %1694 = vmatprep.mubr.bf16.mxu0 0
        %1695 = vmatmul.mubr.bf16.gmra.mrb[0].mxu0 %v1586
        %v1696 = vpop.f32.mrb[0].mxu0
        %v1697 = vadd.f32 0.0, %v1696
        %v1698 = vpop.f32.mrb[0].mxu0
        %v1699 = vpop.f32.mrb[0].mxu0
        %v1700 = vadd.f32 0.0, %v1699
        %v1701 = vpop.f32.mrb[0].mxu0
        %1702 = vmatprep.mubr.bf16.mxu0 0
        %1703 = vmatmul.mubr.bf16.gmra.mrb[0].mxu0 %v1589
        %v1704 = vpop.f32.mrb[0].mxu0
        %v1705 = vadd.f32 0.0, %v1704
        %v1706 = vpop.f32.mrb[0].mxu0
        %v1707 = vpop.f32.mrb[0].mxu0
        %v1708 = vadd.f32 0.0, %v1707
        %v1709 = vpop.f32.mrb[0].mxu0
        %1710 = vmatprep.mubr.bf16.mxu0 0
        %1711 = vmatmul.mubr.bf16.gmra.mrb[0].mxu0 %v1592
        %v1712 = vpop.f32.mrb[0].mxu0
        %v1713 = vadd.f32 0.0, %v1712
        %v1714 = vpop.f32.mrb[0].mxu0
        %v1715 = vpop.f32.mrb[0].mxu0
        %v1716 = vadd.f32 0.0, %v1715
        %v1717 = vpop.f32.mrb[0].mxu0
        %1718 = vmatprep.mubr.bf16.mxu0 0
        %1719 = vmatmul.mubr.bf16.gmra.mrb[0].mxu0 %v1595
        %v1720 = vpop.f32.mrb[0].mxu0
        %v1721 = vadd.f32 0.0, %v1720
        %v1722 = vpop.f32.mrb[0].mxu0
        %v1723 = vpop.f32.mrb[0].mxu0
        %v1724 = vadd.f32 0.0, %v1723
        %v1725 = vpop.f32.mrb[0].mxu0
        %1726 = vmatprep.mubr.bf16.mxu0 0
        %1727 = vmatmul.mubr.bf16.gmra.mrb[0].mxu0 %v1598
        %v1728 = vpop.f32.mrb[0].mxu0
        %v1729 = vadd.f32 0.0, %v1728
        %v1730 = vpop.f32.mrb[0].mxu0
        %v1731 = vpop.f32.mrb[0].mxu0
        %v1732 = vadd.f32 0.0, %v1731
        %v1733 = vpop.f32.mrb[0].mxu0
        %1734 = vmatprep.mubr.bf16.mxu0 0
        %1735 = vmatmul.mubr.bf16.gmra.mrb[0].mxu0 %v1601
        %v1736 = vpop.f32.mrb[0].mxu0
        %v1737 = vadd.f32 0.0, %v1736
        %v1738 = vpop.f32.mrb[0].mxu0
        %v1739 = vpop.f32.mrb[0].mxu0
        %v1740 = vadd.f32 0.0, %v1739
        %v1741 = vpop.f32.mrb[0].mxu0
        %1742 = vmatprep.mubr.bf16.mxu0 0
        %1743 = vmatmul.mubr.bf16.gmra.mrb[0].mxu0 %v1604
        %v1744 = vpop.f32.mrb[0].mxu0
        %v1745 = vadd.f32 0.0, %v1744
        %v1746 = vpop.f32.mrb[0].mxu0
        %v1747 = vpop.f32.mrb[0].mxu0
        %v1748 = vadd.f32 0.0, %v1747
        %v1749 = vpop.f32.mrb[0].mxu0
        %1750 = vmatprep.mubr.bf16.mxu0 0
        %1751 = vmatmul.mubr.bf16.gmra.mrb[0].mxu0 %v1607
        %v1752 = vpop.f32.mrb[0].mxu0
        %v1753 = vadd.f32 0.0, %v1752
        %v1754 = vpop.f32.mrb[0].mxu0
        %v1755 = vpop.f32.mrb[0].mxu0
        %v1756 = vadd.f32 0.0, %v1755
        %v1757 = vpop.f32.mrb[0].mxu0
        %1758 = vmatprep.mubr.bf16.mxu0 0
        %1759 = vmatmul.mubr.bf16.gmra.mrb[0].mxu0 %v1610
        %v1760 = vpop.f32.mrb[0].mxu0
        %v1761 = vadd.f32 0.0, %v1760
        %v1762 = vpop.f32.mrb[0].mxu0
        %v1763 = vpop.f32.mrb[0].mxu0
        %v1764 = vadd.f32 0.0, %v1763
        %v1765 = vpop.f32.mrb[0].mxu0
        %1766 = vmatprep.mubr.bf16.mxu0 0
        %1767 = vmatmul.mubr.bf16.gmra.mrb[0].mxu0 %v1613
        %v1768 = vpop.f32.mrb[0].mxu0
        %v1769 = vadd.f32 0.0, %v1768
        %v1770 = vpop.f32.mrb[0].mxu0
        %v1771 = vpop.f32.mrb[0].mxu0
        %v1772 = vadd.f32 0.0, %v1771
        %v1773 = vpop.f32.mrb[0].mxu0
        %1774 = vmatprep.mubr.bf16.mxu0 0
        %1775 = vmatmul.mubr.bf16.gmra.mrb[0].mxu0 %v1616
        %v1776 = vpop.f32.mrb[0].mxu0
        %v1777 = vadd.f32 0.0, %v1776
        %v1778 = vpop.f32.mrb[0].mxu0
        %v1779 = vpop.f32.mrb[0].mxu0
        %v1780 = vadd.f32 0.0, %v1779
        %v1781 = vpop.f32.mrb[0].mxu0
        %1782 = vmatprep.mubr.bf16.mxu0 0
        %1783 = vmatmul.mubr.bf16.gmra.mrb[0].mxu0 %v1619
        %v1784 = vpop.f32.mrb[0].mxu0
        %v1785 = vadd.f32 0.0, %v1784
        %v1786 = vpop.f32.mrb[0].mxu0
        %v1787 = vpop.f32.mrb[0].mxu0
        %v1788 = vadd.f32 0.0, %v1787
        %v1789 = vpop.f32.mrb[0].mxu0
        %1790 = vmatprep.mubr.bf16.mxu0 0
        %1791 = vmatmul.mubr.bf16.gmra.mrb[0].mxu0 %v1622
        %v1792 = vpop.f32.mrb[0].mxu0
        %v1793 = vadd.f32 0.0, %v1792
        %v1794 = vpop.f32.mrb[0].mxu0
        %v1795 = vpop.f32.mrb[0].mxu0
        %v1796 = vadd.f32 0.0, %v1795
        %v1797 = vpop.f32.mrb[0].mxu0
        %1798 = vmatprep.mubr.bf16.mxu0 0
        %1799 = vmatmul.mubr.bf16.gmra.mrb[0].mxu0 %v1625
        %v1800 = vpop.f32.mrb[0].mxu0
        %v1801 = vadd.f32 0.0, %v1800
        %v1802 = vpop.f32.mrb[0].mxu0
        %v1803 = vpop.f32.mrb[0].mxu0
        %v1804 = vadd.f32 0.0, %v1803
        %v1805 = vpop.f32.mrb[0].mxu0
        %1806 = vdwg.mxu0
        %v1807 = vadd.f32 %v1449, %v1665
        %v1808 = vadd.f32 %v1450, %v1668
        %v1809 = vadd.f32 %v1451, %v1673
        %v1810 = vadd.f32 %v1452, %v1676
        %v1811 = vadd.f32 %v1453, %v1681
        %v1812 = vadd.f32 %v1454, %v1684
        %v1813 = vadd.f32 %v1455, %v1689
        %v1814 = vadd.f32 %v1456, %v1692
        %v1815 = vadd.f32 %v1457, %v1697
        %v1816 = vadd.f32 %v1458, %v1700
        %v1817 = vadd.f32 %v1459, %v1705
        %v1818 = vadd.f32 %v1460, %v1708
        %v1819 = vadd.f32 %v1461, %v1713
        %v1820 = vadd.f32 %v1462, %v1716
        %v1821 = vadd.f32 %v1463, %v1721
        %v1822 = vadd.f32 %v1464, %v1724
        %v1823 = vadd.f32 %v1465, %v1729
        %v1824 = vadd.f32 %v1466, %v1732
        %v1825 = vadd.f32 %v1467, %v1737
        %v1826 = vadd.f32 %v1468, %v1740
        %v1827 = vadd.f32 %v1469, %v1745
        %v1828 = vadd.f32 %v1470, %v1748
        %v1829 = vadd.f32 %v1471, %v1753
        %v1830 = vadd.f32 %v1472, %v1756
        %v1831 = vadd.f32 %v1473, %v1761
        %v1832 = vadd.f32 %v1474, %v1764
        %v1833 = vadd.f32 %v1475, %v1769
        %v1834 = vadd.f32 %v1476, %v1772
        %v1835 = vadd.f32 %v1477, %v1777
        %v1836 = vadd.f32 %v1478, %v1780
        %v1837 = vadd.f32 %v1479, %v1785
        %v1838 = vadd.f32 %v1480, %v1788
        %v1839 = vadd.f32 %v1481, %v1793
        %v1840 = vadd.f32 %v1482, %v1796
        %v1841 = vadd.f32 %v1483, %v1801
        %v1842 = vadd.f32 %v1484, %v1804
        %s1843 = scalar_lea.vmem %s1, 20
        %v1844 = vld [vmem:[%s1843] sm:$0xf]
        %vm1845 = vcmask 1045504
        %v1846 = vrot.slane %v302, 2
        %v1847 = vrot.slane %v303, 2
        %v1848 = vsel %vm1845, %v1846, %v1847
        %v1849 = vrot.slane %v304, 2
        %v1850 = vsel %vm1845, %v1847, %v1849
        %v1851 = vrot.slane %v305, 2
        %v1852 = vsel %vm1845, %v1849, %v1851
        %v1853 = vrot.slane %v306, 2
        %v1854 = vsel %vm1845, %v1851, %v1853
        %v1855 = vrot.slane %v307, 2
        %v1856 = vsel %vm1845, %v1853, %v1855
        %v1857 = vrot.slane %v308, 2
        %v1858 = vsel %vm1845, %v1855, %v1857
        %v1859 = vrot.slane %v309, 2
        %v1860 = vsel %vm1845, %v1857, %v1859
        %v1861 = vrot.slane %v310, 2
        %v1862 = vsel %vm1845, %v1859, %v1861
        %v1863 = vrot.slane %v311, 2
        %v1864 = vsel %vm1845, %v1861, %v1863
        %v1865 = vrot.slane %v312, 2
        %v1866 = vsel %vm1845, %v1863, %v1865
        %v1867 = vrot.slane %v313, 2
        %v1868 = vsel %vm1845, %v1865, %v1867
        %v1869 = vrot.slane %v314, 2
        %v1870 = vsel %vm1845, %v1867, %v1869
        %v1871 = vrot.slane %v315, 2
        %v1872 = vsel %vm1845, %v1869, %v1871
        %v1873 = vrot.slane %v316, 2
        %v1874 = vsel %vm1845, %v1871, %v1873
        %v1875 = vrot.slane %v317, 2
        %v1876 = vsel %vm1845, %v1873, %v1875
        %v1877 = vrot.slane %v318, 2
        %v1878 = vsel %vm1845, %v1875, %v1877
        %v1879 = vrot.slane %v1253, 2
        %v1880 = vsel %vm1845, %v1877, %v1879
        %v1881 = vrot.slane %v1254, 2
        %v1882 = vsel %vm1845, %v1879, %v1881
        %v1884 = vsel %vm472, %v1848, 0
        %v1887 = vsel %vm472, %v1850, 0
        %v1890 = vsel %vm472, %v1852, 0
        %v1893 = vsel %vm472, %v1854, 0
        %v1896 = vsel %vm472, %v1856, 0
        %v1899 = vsel %vm472, %v1858, 0
        %v1902 = vsel %vm472, %v1860, 0
        %v1905 = vsel %vm472, %v1862, 0
        %v1908 = vsel %vm472, %v1864, 0
        %v1911 = vsel %vm472, %v1866, 0
        %v1914 = vsel %vm472, %v1868, 0
        %v1917 = vsel %vm472, %v1870, 0
        %v1920 = vsel %vm472, %v1872, 0
        %v1923 = vsel %vm472, %v1874, 0
        %v1926 = vsel %vm472, %v1876, 0
        %v1929 = vsel %vm472, %v1878, 0
        %v1932 = vsel %vm472, %v1880, 0
        %v1935 = vsel %vm472, %v1882, 0
        %v1938 = vsel %vm527, %v1844, 0
        %1940 = vmatprep.subr.bf16.mxu0 0
        %1941 = vmatpush1.bf16.msra.mxu0 %v1938
        %1942 = vmatprep.subr.bf16.mxu0 0
        %1943 = vmatpush1.bf16.msra.mxu0 0
        %1944 = vmatprep.subr.bf16.mxu0 0
        %1945 = vmatpush1.bf16.msra.mxu0 0
        %1946 = vmatprep.subr.bf16.mxu0 0
        %1947 = vmatpush1.bf16.msra.mxu0 0
        %1948 = vmatprep.subr.bf16.mxu0 0
        %1949 = vmatpush1.bf16.msra.mxu0 0
        %1950 = vmatprep.subr.bf16.mxu0 0
        %1951 = vmatpush1.bf16.msra.mxu0 0
        %1952 = vmatprep.subr.bf16.mxu0 0
        %1953 = vmatpush1.bf16.msra.mxu0 0
        %1954 = vmatprep.subr.bf16.mxu0 0
        %1955 = vmatpush1.bf16.msra.mxu0 0
        %1956 = vmatprep.subr.bf16.mxu0 0
        %1957 = vmatpush1.bf16.msra.mxu0 0
        %1958 = vmatprep.subr.bf16.mxu0 0
        %1959 = vmatpush1.bf16.msra.mxu0 0
        %1960 = vmatprep.subr.bf16.mxu0 0
        %1961 = vmatpush1.bf16.msra.mxu0 0
        %1962 = vmatprep.subr.bf16.mxu0 0
        %1963 = vmatpush1.bf16.msra.mxu0 0
        %1964 = vmatprep.subr.bf16.mxu0 0
        %1965 = vmatpush1.bf16.msra.mxu0 0
        %1966 = vmatprep.subr.bf16.mxu0 0
        %1967 = vmatpush1.bf16.msra.mxu0 0
        %1968 = vmatprep.subr.bf16.mxu0 0
        %1969 = vmatpush1.bf16.msra.mxu0 0
        %1970 = vmatprep.subr.bf16.mxu0 0
        %1971 = vmatpush1.bf16.msra.mxu0 0
        %1972 = vmatprep.mubr.bf16.mxu0 0
        %1973 = vmatmul.mubr.bf16.gmra.mrb[0].mxu0 %v1884
        %v1974 = vpop.f32.mrb[0].mxu0
        %v1975 = vadd.f32 0.0, %v1974
        %v1976 = vpop.f32.mrb[0].mxu0
        %v1977 = vpop.f32.mrb[0].mxu0
        %v1978 = vadd.f32 0.0, %v1977
        %v1979 = vpop.f32.mrb[0].mxu0
        %1980 = vmatprep.mubr.bf16.mxu0 0
        %1981 = vmatmul.mubr.bf16.gmra.mrb[0].mxu0 %v1887
        %v1982 = vpop.f32.mrb[0].mxu0
        %v1983 = vadd.f32 0.0, %v1982
        %v1984 = vpop.f32.mrb[0].mxu0
        %v1985 = vpop.f32.mrb[0].mxu0
        %v1986 = vadd.f32 0.0, %v1985
        %v1987 = vpop.f32.mrb[0].mxu0
        %1988 = vmatprep.mubr.bf16.mxu0 0
        %1989 = vmatmul.mubr.bf16.gmra.mrb[0].mxu0 %v1890
        %v1990 = vpop.f32.mrb[0].mxu0
        %v1991 = vadd.f32 0.0, %v1990
        %v1992 = vpop.f32.mrb[0].mxu0
        %v1993 = vpop.f32.mrb[0].mxu0
        %v1994 = vadd.f32 0.0, %v1993
        %v1995 = vpop.f32.mrb[0].mxu0
        %1996 = vmatprep.mubr.bf16.mxu0 0
        %1997 = vmatmul.mubr.bf16.gmra.mrb[0].mxu0 %v1893
        %v1998 = vpop.f32.mrb[0].mxu0
        %v1999 = vadd.f32 0.0, %v1998
        %v2000 = vpop.f32.mrb[0].mxu0
        %v2001 = vpop.f32.mrb[0].mxu0
        %v2002 = vadd.f32 0.0, %v2001
        %v2003 = vpop.f32.mrb[0].mxu0
        %2004 = vmatprep.mubr.bf16.mxu0 0
        %2005 = vmatmul.mubr.bf16.gmra.mrb[0].mxu0 %v1896
        %v2006 = vpop.f32.mrb[0].mxu0
        %v2007 = vadd.f32 0.0, %v2006
        %v2008 = vpop.f32.mrb[0].mxu0
        %v2009 = vpop.f32.mrb[0].mxu0
        %v2010 = vadd.f32 0.0, %v2009
        %v2011 = vpop.f32.mrb[0].mxu0
        %2012 = vmatprep.mubr.bf16.mxu0 0
        %2013 = vmatmul.mubr.bf16.gmra.mrb[0].mxu0 %v1899
        %v2014 = vpop.f32.mrb[0].mxu0
        %v2015 = vadd.f32 0.0, %v2014
        %v2016 = vpop.f32.mrb[0].mxu0
        %v2017 = vpop.f32.mrb[0].mxu0
        %v2018 = vadd.f32 0.0, %v2017
        %v2019 = vpop.f32.mrb[0].mxu0
        %2020 = vmatprep.mubr.bf16.mxu0 0
        %2021 = vmatmul.mubr.bf16.gmra.mrb[0].mxu0 %v1902
        %v2022 = vpop.f32.mrb[0].mxu0
        %v2023 = vadd.f32 0.0, %v2022
        %v2024 = vpop.f32.mrb[0].mxu0
        %v2025 = vpop.f32.mrb[0].mxu0
        %v2026 = vadd.f32 0.0, %v2025
        %v2027 = vpop.f32.mrb[0].mxu0
        %2028 = vmatprep.mubr.bf16.mxu0 0
        %2029 = vmatmul.mubr.bf16.gmra.mrb[0].mxu0 %v1905
        %v2030 = vpop.f32.mrb[0].mxu0
        %v2031 = vadd.f32 0.0, %v2030
        %v2032 = vpop.f32.mrb[0].mxu0
        %v2033 = vpop.f32.mrb[0].mxu0
        %v2034 = vadd.f32 0.0, %v2033
        %v2035 = vpop.f32.mrb[0].mxu0
        %2036 = vmatprep.mubr.bf16.mxu0 0
        %2037 = vmatmul.mubr.bf16.gmra.mrb[0].mxu0 %v1908
        %v2038 = vpop.f32.mrb[0].mxu0
        %v2039 = vadd.f32 0.0, %v2038
        %v2040 = vpop.f32.mrb[0].mxu0
        %v2041 = vpop.f32.mrb[0].mxu0
        %v2042 = vadd.f32 0.0, %v2041
        %v2043 = vpop.f32.mrb[0].mxu0
        %2044 = vmatprep.mubr.bf16.mxu0 0
        %2045 = vmatmul.mubr.bf16.gmra.mrb[0].mxu0 %v1911
        %v2046 = vpop.f32.mrb[0].mxu0
        %v2047 = vadd.f32 0.0, %v2046
        %v2048 = vpop.f32.mrb[0].mxu0
        %v2049 = vpop.f32.mrb[0].mxu0
        %v2050 = vadd.f32 0.0, %v2049
        %v2051 = vpop.f32.mrb[0].mxu0
        %2052 = vmatprep.mubr.bf16.mxu0 0
        %2053 = vmatmul.mubr.bf16.gmra.mrb[0].mxu0 %v1914
        %v2054 = vpop.f32.mrb[0].mxu0
        %v2055 = vadd.f32 0.0, %v2054
        %v2056 = vpop.f32.mrb[0].mxu0
        %v2057 = vpop.f32.mrb[0].mxu0
        %v2058 = vadd.f32 0.0, %v2057
        %v2059 = vpop.f32.mrb[0].mxu0
        %2060 = vmatprep.mubr.bf16.mxu0 0
        %2061 = vmatmul.mubr.bf16.gmra.mrb[0].mxu0 %v1917
        %v2062 = vpop.f32.mrb[0].mxu0
        %v2063 = vadd.f32 0.0, %v2062
        %v2064 = vpop.f32.mrb[0].mxu0
        %v2065 = vpop.f32.mrb[0].mxu0
        %v2066 = vadd.f32 0.0, %v2065
        %v2067 = vpop.f32.mrb[0].mxu0
        %2068 = vmatprep.mubr.bf16.mxu0 0
        %2069 = vmatmul.mubr.bf16.gmra.mrb[0].mxu0 %v1920
        %v2070 = vpop.f32.mrb[0].mxu0
        %v2071 = vadd.f32 0.0, %v2070
        %v2072 = vpop.f32.mrb[0].mxu0
        %v2073 = vpop.f32.mrb[0].mxu0
        %v2074 = vadd.f32 0.0, %v2073
        %v2075 = vpop.f32.mrb[0].mxu0
        %2076 = vmatprep.mubr.bf16.mxu0 0
        %2077 = vmatmul.mubr.bf16.gmra.mrb[0].mxu0 %v1923
        %v2078 = vpop.f32.mrb[0].mxu0
        %v2079 = vadd.f32 0.0, %v2078
        %v2080 = vpop.f32.mrb[0].mxu0
        %v2081 = vpop.f32.mrb[0].mxu0
        %v2082 = vadd.f32 0.0, %v2081
        %v2083 = vpop.f32.mrb[0].mxu0
        %2084 = vmatprep.mubr.bf16.mxu0 0
        %2085 = vmatmul.mubr.bf16.gmra.mrb[0].mxu0 %v1926
        %v2086 = vpop.f32.mrb[0].mxu0
        %v2087 = vadd.f32 0.0, %v2086
        %v2088 = vpop.f32.mrb[0].mxu0
        %v2089 = vpop.f32.mrb[0].mxu0
        %v2090 = vadd.f32 0.0, %v2089
        %v2091 = vpop.f32.mrb[0].mxu0
        %2092 = vmatprep.mubr.bf16.mxu0 0
        %2093 = vmatmul.mubr.bf16.gmra.mrb[0].mxu0 %v1929
        %v2094 = vpop.f32.mrb[0].mxu0
        %v2095 = vadd.f32 0.0, %v2094
        %v2096 = vpop.f32.mrb[0].mxu0
        %v2097 = vpop.f32.mrb[0].mxu0
        %v2098 = vadd.f32 0.0, %v2097
        %v2099 = vpop.f32.mrb[0].mxu0
        %2100 = vmatprep.mubr.bf16.mxu0 0
        %2101 = vmatmul.mubr.bf16.gmra.mrb[0].mxu0 %v1932
        %v2102 = vpop.f32.mrb[0].mxu0
        %v2103 = vadd.f32 0.0, %v2102
        %v2104 = vpop.f32.mrb[0].mxu0
        %v2105 = vpop.f32.mrb[0].mxu0
        %v2106 = vadd.f32 0.0, %v2105
        %v2107 = vpop.f32.mrb[0].mxu0
        %2108 = vmatprep.mubr.bf16.mxu0 0
        %2109 = vmatmul.mubr.bf16.gmra.mrb[0].mxu0 %v1935
        %v2110 = vpop.f32.mrb[0].mxu0
        %v2111 = vadd.f32 0.0, %v2110
        %v2112 = vpop.f32.mrb[0].mxu0
        %v2113 = vpop.f32.mrb[0].mxu0
        %v2114 = vadd.f32 0.0, %v2113
        %v2115 = vpop.f32.mrb[0].mxu0
        %2116 = vdwg.mxu0
        %v2117 = vadd.f32 %v1807, %v1975
        %v2118 = vadd.f32 %v1808, %v1978
        %v2119 = vadd.f32 %v1809, %v1983
        %v2120 = vadd.f32 %v1810, %v1986
        %v2121 = vadd.f32 %v1811, %v1991
        %v2122 = vadd.f32 %v1812, %v1994
        %v2123 = vadd.f32 %v1813, %v1999
        %v2124 = vadd.f32 %v1814, %v2002
        %v2125 = vadd.f32 %v1815, %v2007
        %v2126 = vadd.f32 %v1816, %v2010
        %v2127 = vadd.f32 %v1817, %v2015
        %v2128 = vadd.f32 %v1818, %v2018
        %v2129 = vadd.f32 %v1819, %v2023
        %v2130 = vadd.f32 %v1820, %v2026
        %v2131 = vadd.f32 %v1821, %v2031
        %v2132 = vadd.f32 %v1822, %v2034
        %v2133 = vadd.f32 %v1823, %v2039
        %v2134 = vadd.f32 %v1824, %v2042
        %v2135 = vadd.f32 %v1825, %v2047
        %v2136 = vadd.f32 %v1826, %v2050
        %v2137 = vadd.f32 %v1827, %v2055
        %v2138 = vadd.f32 %v1828, %v2058
        %v2139 = vadd.f32 %v1829, %v2063
        %v2140 = vadd.f32 %v1830, %v2066
        %v2141 = vadd.f32 %v1831, %v2071
        %v2142 = vadd.f32 %v1832, %v2074
        %v2143 = vadd.f32 %v1833, %v2079
        %v2144 = vadd.f32 %v1834, %v2082
        %v2145 = vadd.f32 %v1835, %v2087
        %v2146 = vadd.f32 %v1836, %v2090
        %v2147 = vadd.f32 %v1837, %v2095
        %v2148 = vadd.f32 %v1838, %v2098
        %v2149 = vadd.f32 %v1839, %v2103
        %v2150 = vadd.f32 %v1840, %v2106
        %v2151 = vadd.f32 %v1841, %v2111
        %v2152 = vadd.f32 %v1842, %v2114
        %v2153 = vpack.c.bf16 %v299, %v298
        %v2154 = vpack.c.bf16 %v300, %v300
        %s2155 = scalar_lea.vmem %s1, 24
        %v2156 = vld [vmem:[%s2155] sm:$0xf]
        %v2159 = vrot.slane %v2153, 2
        %v2160 = vsel %vm1845, %v1879, %v2159
        %v2161 = vrot.slane %v2154, 2
        %v2162 = vsel %vm1845, %v2159, %v2161
        %v2164 = vsel %vm472, %v2160, 0
        %v2167 = vsel %vm472, %v2162, 0
        %v2170 = vsel %vm527, %v2156, 0
        %2172 = vmatprep.subr.bf16.mxu0 0
        %2173 = vmatpush1.bf16.msra.mxu0 %v2170
        %2174 = vmatprep.subr.bf16.mxu0 0
        %2175 = vmatpush1.bf16.msra.mxu0 0
        %2176 = vmatprep.subr.bf16.mxu0 0
        %2177 = vmatpush1.bf16.msra.mxu0 0
        %2178 = vmatprep.subr.bf16.mxu0 0
        %2179 = vmatpush1.bf16.msra.mxu0 0
        %2180 = vmatprep.subr.bf16.mxu0 0
        %2181 = vmatpush1.bf16.msra.mxu0 0
        %2182 = vmatprep.subr.bf16.mxu0 0
        %2183 = vmatpush1.bf16.msra.mxu0 0
        %2184 = vmatprep.subr.bf16.mxu0 0
        %2185 = vmatpush1.bf16.msra.mxu0 0
        %2186 = vmatprep.subr.bf16.mxu0 0
        %2187 = vmatpush1.bf16.msra.mxu0 0
        %2188 = vmatprep.subr.bf16.mxu0 0
        %2189 = vmatpush1.bf16.msra.mxu0 0
        %2190 = vmatprep.subr.bf16.mxu0 0
        %2191 = vmatpush1.bf16.msra.mxu0 0
        %2192 = vmatprep.subr.bf16.mxu0 0
        %2193 = vmatpush1.bf16.msra.mxu0 0
        %2194 = vmatprep.subr.bf16.mxu0 0
        %2195 = vmatpush1.bf16.msra.mxu0 0
        %2196 = vmatprep.subr.bf16.mxu0 0
        %2197 = vmatpush1.bf16.msra.mxu0 0
        %2198 = vmatprep.subr.bf16.mxu0 0
        %2199 = vmatpush1.bf16.msra.mxu0 0
        %2200 = vmatprep.subr.bf16.mxu0 0
        %2201 = vmatpush1.bf16.msra.mxu0 0
        %2202 = vmatprep.subr.bf16.mxu0 0
        %2203 = vmatpush1.bf16.msra.mxu0 0
        %2204 = vmatprep.mubr.bf16.mxu0 0
        %2205 = vmatmul.mubr.bf16.gmra.mrb[0].mxu0 %v1887
        %v2206 = vpop.f32.mrb[0].mxu0
        %v2207 = vadd.f32 0.0, %v2206
        %v2208 = vpop.f32.mrb[0].mxu0
        %v2209 = vpop.f32.mrb[0].mxu0
        %v2210 = vadd.f32 0.0, %v2209
        %v2211 = vpop.f32.mrb[0].mxu0
        %2212 = vmatprep.mubr.bf16.mxu0 0
        %2213 = vmatmul.mubr.bf16.gmra.mrb[0].mxu0 %v1890
        %v2214 = vpop.f32.mrb[0].mxu0
        %v2215 = vadd.f32 0.0, %v2214
        %v2216 = vpop.f32.mrb[0].mxu0
        %v2217 = vpop.f32.mrb[0].mxu0
        %v2218 = vadd.f32 0.0, %v2217
        %v2219 = vpop.f32.mrb[0].mxu0
        %2220 = vmatprep.mubr.bf16.mxu0 0
        %2221 = vmatmul.mubr.bf16.gmra.mrb[0].mxu0 %v1893
        %v2222 = vpop.f32.mrb[0].mxu0
        %v2223 = vadd.f32 0.0, %v2222
        %v2224 = vpop.f32.mrb[0].mxu0
        %v2225 = vpop.f32.mrb[0].mxu0
        %v2226 = vadd.f32 0.0, %v2225
        %v2227 = vpop.f32.mrb[0].mxu0
        %2228 = vmatprep.mubr.bf16.mxu0 0
        %2229 = vmatmul.mubr.bf16.gmra.mrb[0].mxu0 %v1896
        %v2230 = vpop.f32.mrb[0].mxu0
        %v2231 = vadd.f32 0.0, %v2230
        %v2232 = vpop.f32.mrb[0].mxu0
        %v2233 = vpop.f32.mrb[0].mxu0
        %v2234 = vadd.f32 0.0, %v2233
        %v2235 = vpop.f32.mrb[0].mxu0
        %2236 = vmatprep.mubr.bf16.mxu0 0
        %2237 = vmatmul.mubr.bf16.gmra.mrb[0].mxu0 %v1899
        %v2238 = vpop.f32.mrb[0].mxu0
        %v2239 = vadd.f32 0.0, %v2238
        %v2240 = vpop.f32.mrb[0].mxu0
        %v2241 = vpop.f32.mrb[0].mxu0
        %v2242 = vadd.f32 0.0, %v2241
        %v2243 = vpop.f32.mrb[0].mxu0
        %2244 = vmatprep.mubr.bf16.mxu0 0
        %2245 = vmatmul.mubr.bf16.gmra.mrb[0].mxu0 %v1902
        %v2246 = vpop.f32.mrb[0].mxu0
        %v2247 = vadd.f32 0.0, %v2246
        %v2248 = vpop.f32.mrb[0].mxu0
        %v2249 = vpop.f32.mrb[0].mxu0
        %v2250 = vadd.f32 0.0, %v2249
        %v2251 = vpop.f32.mrb[0].mxu0
        %2252 = vmatprep.mubr.bf16.mxu0 0
        %2253 = vmatmul.mubr.bf16.gmra.mrb[0].mxu0 %v1905
        %v2254 = vpop.f32.mrb[0].mxu0
        %v2255 = vadd.f32 0.0, %v2254
        %v2256 = vpop.f32.mrb[0].mxu0
        %v2257 = vpop.f32.mrb[0].mxu0
        %v2258 = vadd.f32 0.0, %v2257
        %v2259 = vpop.f32.mrb[0].mxu0
        %2260 = vmatprep.mubr.bf16.mxu0 0
        %2261 = vmatmul.mubr.bf16.gmra.mrb[0].mxu0 %v1908
        %v2262 = vpop.f32.mrb[0].mxu0
        %v2263 = vadd.f32 0.0, %v2262
        %v2264 = vpop.f32.mrb[0].mxu0
        %v2265 = vpop.f32.mrb[0].mxu0
        %v2266 = vadd.f32 0.0, %v2265
        %v2267 = vpop.f32.mrb[0].mxu0
        %2268 = vmatprep.mubr.bf16.mxu0 0
        %2269 = vmatmul.mubr.bf16.gmra.mrb[0].mxu0 %v1911
        %v2270 = vpop.f32.mrb[0].mxu0
        %v2271 = vadd.f32 0.0, %v2270
        %v2272 = vpop.f32.mrb[0].mxu0
        %v2273 = vpop.f32.mrb[0].mxu0
        %v2274 = vadd.f32 0.0, %v2273
        %v2275 = vpop.f32.mrb[0].mxu0
        %2276 = vmatprep.mubr.bf16.mxu0 0
        %2277 = vmatmul.mubr.bf16.gmra.mrb[0].mxu0 %v1914
        %v2278 = vpop.f32.mrb[0].mxu0
        %v2279 = vadd.f32 0.0, %v2278
        %v2280 = vpop.f32.mrb[0].mxu0
        %v2281 = vpop.f32.mrb[0].mxu0
        %v2282 = vadd.f32 0.0, %v2281
        %v2283 = vpop.f32.mrb[0].mxu0
        %2284 = vmatprep.mubr.bf16.mxu0 0
        %2285 = vmatmul.mubr.bf16.gmra.mrb[0].mxu0 %v1917
        %v2286 = vpop.f32.mrb[0].mxu0
        %v2287 = vadd.f32 0.0, %v2286
        %v2288 = vpop.f32.mrb[0].mxu0
        %v2289 = vpop.f32.mrb[0].mxu0
        %v2290 = vadd.f32 0.0, %v2289
        %v2291 = vpop.f32.mrb[0].mxu0
        %2292 = vmatprep.mubr.bf16.mxu0 0
        %2293 = vmatmul.mubr.bf16.gmra.mrb[0].mxu0 %v1920
        %v2294 = vpop.f32.mrb[0].mxu0
        %v2295 = vadd.f32 0.0, %v2294
        %v2296 = vpop.f32.mrb[0].mxu0
        %v2297 = vpop.f32.mrb[0].mxu0
        %v2298 = vadd.f32 0.0, %v2297
        %v2299 = vpop.f32.mrb[0].mxu0
        %2300 = vmatprep.mubr.bf16.mxu0 0
        %2301 = vmatmul.mubr.bf16.gmra.mrb[0].mxu0 %v1923
        %v2302 = vpop.f32.mrb[0].mxu0
        %v2303 = vadd.f32 0.0, %v2302
        %v2304 = vpop.f32.mrb[0].mxu0
        %v2305 = vpop.f32.mrb[0].mxu0
        %v2306 = vadd.f32 0.0, %v2305
        %v2307 = vpop.f32.mrb[0].mxu0
        %2308 = vmatprep.mubr.bf16.mxu0 0
        %2309 = vmatmul.mubr.bf16.gmra.mrb[0].mxu0 %v1926
        %v2310 = vpop.f32.mrb[0].mxu0
        %v2311 = vadd.f32 0.0, %v2310
        %v2312 = vpop.f32.mrb[0].mxu0
        %v2313 = vpop.f32.mrb[0].mxu0
        %v2314 = vadd.f32 0.0, %v2313
        %v2315 = vpop.f32.mrb[0].mxu0
        %2316 = vmatprep.mubr.bf16.mxu0 0
        %2317 = vmatmul.mubr.bf16.gmra.mrb[0].mxu0 %v1929
        %v2318 = vpop.f32.mrb[0].mxu0
        %v2319 = vadd.f32 0.0, %v2318
        %v2320 = vpop.f32.mrb[0].mxu0
        %v2321 = vpop.f32.mrb[0].mxu0
        %v2322 = vadd.f32 0.0, %v2321
        %v2323 = vpop.f32.mrb[0].mxu0
        %2324 = vmatprep.mubr.bf16.mxu0 0
        %2325 = vmatmul.mubr.bf16.gmra.mrb[0].mxu0 %v1932
        %v2326 = vpop.f32.mrb[0].mxu0
        %v2327 = vadd.f32 0.0, %v2326
        %v2328 = vpop.f32.mrb[0].mxu0
        %v2329 = vpop.f32.mrb[0].mxu0
        %v2330 = vadd.f32 0.0, %v2329
        %v2331 = vpop.f32.mrb[0].mxu0
        %2332 = vmatprep.mubr.bf16.mxu0 0
        %2333 = vmatmul.mubr.bf16.gmra.mrb[0].mxu0 %v2164
        %v2334 = vpop.f32.mrb[0].mxu0
        %v2335 = vadd.f32 0.0, %v2334
        %v2336 = vpop.f32.mrb[0].mxu0
        %v2337 = vpop.f32.mrb[0].mxu0
        %v2338 = vadd.f32 0.0, %v2337
        %v2339 = vpop.f32.mrb[0].mxu0
        %2340 = vmatprep.mubr.bf16.mxu0 0
        %2341 = vmatmul.mubr.bf16.gmra.mrb[0].mxu0 %v2167
        %v2342 = vpop.f32.mrb[0].mxu0
        %v2343 = vadd.f32 0.0, %v2342
        %v2344 = vpop.f32.mrb[0].mxu0
        %v2345 = vpop.f32.mrb[0].mxu0
        %v2346 = vadd.f32 0.0, %v2345
        %v2347 = vpop.f32.mrb[0].mxu0
        %2348 = vdwg.mxu0
        %v2349 = vadd.f32 %v2117, %v2207
        %v2350 = vadd.f32 %v2118, %v2210
        %v2351 = vadd.f32 %v2119, %v2215
        %v2352 = vadd.f32 %v2120, %v2218
        %v2353 = vadd.f32 %v2121, %v2223
        %v2354 = vadd.f32 %v2122, %v2226
        %v2355 = vadd.f32 %v2123, %v2231
        %v2356 = vadd.f32 %v2124, %v2234
        %v2357 = vadd.f32 %v2125, %v2239
        %v2358 = vadd.f32 %v2126, %v2242
        %v2359 = vadd.f32 %v2127, %v2247
        %v2360 = vadd.f32 %v2128, %v2250
        %v2361 = vadd.f32 %v2129, %v2255
        %v2362 = vadd.f32 %v2130, %v2258
        %v2363 = vadd.f32 %v2131, %v2263
        %v2364 = vadd.f32 %v2132, %v2266
        %v2365 = vadd.f32 %v2133, %v2271
        %v2366 = vadd.f32 %v2134, %v2274
        %v2367 = vadd.f32 %v2135, %v2279
        %v2368 = vadd.f32 %v2136, %v2282
        %v2369 = vadd.f32 %v2137, %v2287
        %v2370 = vadd.f32 %v2138, %v2290
        %v2371 = vadd.f32 %v2139, %v2295
        %v2372 = vadd.f32 %v2140, %v2298
        %v2373 = vadd.f32 %v2141, %v2303
        %v2374 = vadd.f32 %v2142, %v2306
        %v2375 = vadd.f32 %v2143, %v2311
        %v2376 = vadd.f32 %v2144, %v2314
        %v2377 = vadd.f32 %v2145, %v2319
        %v2378 = vadd.f32 %v2146, %v2322
        %v2379 = vadd.f32 %v2147, %v2327
        %v2380 = vadd.f32 %v2148, %v2330
        %v2381 = vadd.f32 %v2149, %v2335
        %v2382 = vadd.f32 %v2150, %v2338
        %v2383 = vadd.f32 %v2151, %v2343
        %v2384 = vadd.f32 %v2152, %v2346
        %s2385 = scalar_lea.vmem %s1, 28
        %v2386 = vld [vmem:[%s2385] sm:$0xf]
        %vm2387 = vsmask.f32 5376
        %v2388 = vrot.slane %v344, 2
        %v2389 = vrot.slane %v340, 3
        %v2390 = vor.u32 %v2388, %v2389
        %v2391 = vrot.slane %v352, 2
        %v2392 = vrot.slane %v348, 3
        %v2393 = vor.u32 %v2391, %v2392
        %v2394 = vsel %vm2387, %v2390, %v2393
        %v2395 = vrot.slane %v360, 2
        %v2396 = vrot.slane %v356, 3
        %v2397 = vor.u32 %v2395, %v2396
        %v2398 = vsel %vm2387, %v2393, %v2397
        %v2399 = vrot.slane %v368, 2
        %v2400 = vrot.slane %v364, 3
        %v2401 = vor.u32 %v2399, %v2400
        %v2402 = vsel %vm2387, %v2397, %v2401
        %v2403 = vrot.slane %v376, 2
        %v2404 = vrot.slane %v372, 3
        %v2405 = vor.u32 %v2403, %v2404
        %v2406 = vsel %vm2387, %v2401, %v2405
        %v2407 = vrot.slane %v384, 2
        %v2408 = vrot.slane %v380, 3
        %v2409 = vor.u32 %v2407, %v2408
        %v2410 = vsel %vm2387, %v2405, %v2409
        %v2411 = vrot.slane %v392, 2
        %v2412 = vrot.slane %v388, 3
        %v2413 = vor.u32 %v2411, %v2412
        %v2414 = vsel %vm2387, %v2409, %v2413
        %v2415 = vrot.slane %v400, 2
        %v2416 = vrot.slane %v396, 3
        %v2417 = vor.u32 %v2415, %v2416
        %v2418 = vsel %vm2387, %v2413, %v2417
        %v2419 = vrot.slane %v408, 2
        %v2420 = vrot.slane %v404, 3
        %v2421 = vor.u32 %v2419, %v2420
        %v2422 = vsel %vm2387, %v2417, %v2421
        %v2423 = vrot.slane %v416, 2
        %v2424 = vrot.slane %v412, 3
        %v2425 = vor.u32 %v2423, %v2424
        %v2426 = vsel %vm2387, %v2421, %v2425
        %v2427 = vrot.slane %v424, 2
        %v2428 = vrot.slane %v420, 3
        %v2429 = vor.u32 %v2427, %v2428
        %v2430 = vsel %vm2387, %v2425, %v2429
        %v2431 = vrot.slane %v432, 2
        %v2432 = vrot.slane %v428, 3
        %v2433 = vor.u32 %v2431, %v2432
        %v2434 = vsel %vm2387, %v2429, %v2433
        %v2435 = vrot.slane %v440, 2
        %v2436 = vrot.slane %v436, 3
        %v2437 = vor.u32 %v2435, %v2436
        %v2438 = vsel %vm2387, %v2433, %v2437
        %v2439 = vrot.slane %v448, 2
        %v2440 = vrot.slane %v444, 3
        %v2441 = vor.u32 %v2439, %v2440
        %v2442 = vsel %vm2387, %v2437, %v2441
        %v2443 = vrot.slane %v456, 2
        %v2444 = vrot.slane %v452, 3
        %v2445 = vor.u32 %v2443, %v2444
        %v2446 = vsel %vm2387, %v2441, %v2445
        %v2447 = vrot.slane %v464, 2
        %v2448 = vrot.slane %v460, 3
        %v2449 = vor.u32 %v2447, %v2448
        %v2450 = vsel %vm2387, %v2445, %v2449
        %v2451 = vrot.slane %v1556, 2
        %v2452 = vrot.slane %v1559, 3
        %v2453 = vor.u32 %v2451, %v2452
        %v2454 = vsel %vm2387, %v2449, %v2453
        %v2456 = vshrl.u32 %v2153, 16
        %v2458 = vrot.slane %v2456, 2
        %v2459 = vshll.u32 %v2153, 16
        %v2461 = vrot.slane %v2459, 3
        %v2462 = vor.u32 %v2458, %v2461
        %v2463 = vsel %vm2387, %v2453, %v2462
        %v2465 = vshrl.u32 %v2154, 16
        %v2467 = vrot.slane %v2465, 2
        %v2468 = vshll.u32 %v2154, 16
        %v2470 = vrot.slane %v2468, 3
        %v2471 = vor.u32 %v2467, %v2470
        %v2472 = vsel %vm2387, %v2462, %v2471
        %v2474 = vsel %vm472, %v2394, 0
        %v2477 = vsel %vm472, %v2398, 0
        %v2480 = vsel %vm472, %v2402, 0
        %v2483 = vsel %vm472, %v2406, 0
        %v2486 = vsel %vm472, %v2410, 0
        %v2489 = vsel %vm472, %v2414, 0
        %v2492 = vsel %vm472, %v2418, 0
        %v2495 = vsel %vm472, %v2422, 0
        %v2498 = vsel %vm472, %v2426, 0
        %v2501 = vsel %vm472, %v2430, 0
        %v2504 = vsel %vm472, %v2434, 0
        %v2507 = vsel %vm472, %v2438, 0
        %v2510 = vsel %vm472, %v2442, 0
        %v2513 = vsel %vm472, %v2446, 0
        %v2516 = vsel %vm472, %v2450, 0
        %v2519 = vsel %vm472, %v2454, 0
        %v2522 = vsel %vm472, %v2463, 0
        %v2525 = vsel %vm472, %v2472, 0
        %v2528 = vsel %vm527, %v2386, 0
        %2530 = vmatprep.subr.bf16.mxu0 0
        %2531 = vmatpush1.bf16.msra.mxu0 %v2528
        %2532 = vmatprep.subr.bf16.mxu0 0
        %2533 = vmatpush1.bf16.msra.mxu0 0
        %2534 = vmatprep.subr.bf16.mxu0 0
        %2535 = vmatpush1.bf16.msra.mxu0 0
        %2536 = vmatprep.subr.bf16.mxu0 0
        %2537 = vmatpush1.bf16.msra.mxu0 0
        %2538 = vmatprep.subr.bf16.mxu0 0
        %2539 = vmatpush1.bf16.msra.mxu0 0
        %2540 = vmatprep.subr.bf16.mxu0 0
        %2541 = vmatpush1.bf16.msra.mxu0 0
        %2542 = vmatprep.subr.bf16.mxu0 0
        %2543 = vmatpush1.bf16.msra.mxu0 0
        %2544 = vmatprep.subr.bf16.mxu0 0
        %2545 = vmatpush1.bf16.msra.mxu0 0
        %2546 = vmatprep.subr.bf16.mxu0 0
        %2547 = vmatpush1.bf16.msra.mxu0 0
        %2548 = vmatprep.subr.bf16.mxu0 0
        %2549 = vmatpush1.bf16.msra.mxu0 0
        %2550 = vmatprep.subr.bf16.mxu0 0
        %2551 = vmatpush1.bf16.msra.mxu0 0
        %2552 = vmatprep.subr.bf16.mxu0 0
        %2553 = vmatpush1.bf16.msra.mxu0 0
        %2554 = vmatprep.subr.bf16.mxu0 0
        %2555 = vmatpush1.bf16.msra.mxu0 0
        %2556 = vmatprep.subr.bf16.mxu0 0
        %2557 = vmatpush1.bf16.msra.mxu0 0
        %2558 = vmatprep.subr.bf16.mxu0 0
        %2559 = vmatpush1.bf16.msra.mxu0 0
        %2560 = vmatprep.subr.bf16.mxu0 0
        %2561 = vmatpush1.bf16.msra.mxu0 0
        %2562 = vmatprep.mubr.bf16.mxu0 0
        %2563 = vmatmul.mubr.bf16.gmra.mrb[0].mxu0 %v2474
        %v2564 = vpop.f32.mrb[0].mxu0
        %v2565 = vadd.f32 0.0, %v2564
        %v2566 = vpop.f32.mrb[0].mxu0
        %v2567 = vpop.f32.mrb[0].mxu0
        %v2568 = vadd.f32 0.0, %v2567
        %v2569 = vpop.f32.mrb[0].mxu0
        %2570 = vmatprep.mubr.bf16.mxu0 0
        %2571 = vmatmul.mubr.bf16.gmra.mrb[0].mxu0 %v2477
        %v2572 = vpop.f32.mrb[0].mxu0
        %v2573 = vadd.f32 0.0, %v2572
        %v2574 = vpop.f32.mrb[0].mxu0
        %v2575 = vpop.f32.mrb[0].mxu0
        %v2576 = vadd.f32 0.0, %v2575
        %v2577 = vpop.f32.mrb[0].mxu0
        %2578 = vmatprep.mubr.bf16.mxu0 0
        %2579 = vmatmul.mubr.bf16.gmra.mrb[0].mxu0 %v2480
        %v2580 = vpop.f32.mrb[0].mxu0
        %v2581 = vadd.f32 0.0, %v2580
        %v2582 = vpop.f32.mrb[0].mxu0
        %v2583 = vpop.f32.mrb[0].mxu0
        %v2584 = vadd.f32 0.0, %v2583
        %v2585 = vpop.f32.mrb[0].mxu0
        %2586 = vmatprep.mubr.bf16.mxu0 0
        %2587 = vmatmul.mubr.bf16.gmra.mrb[0].mxu0 %v2483
        %v2588 = vpop.f32.mrb[0].mxu0
        %v2589 = vadd.f32 0.0, %v2588
        %v2590 = vpop.f32.mrb[0].mxu0
        %v2591 = vpop.f32.mrb[0].mxu0
        %v2592 = vadd.f32 0.0, %v2591
        %v2593 = vpop.f32.mrb[0].mxu0
        %2594 = vmatprep.mubr.bf16.mxu0 0
        %2595 = vmatmul.mubr.bf16.gmra.mrb[0].mxu0 %v2486
        %v2596 = vpop.f32.mrb[0].mxu0
        %v2597 = vadd.f32 0.0, %v2596
        %v2598 = vpop.f32.mrb[0].mxu0
        %v2599 = vpop.f32.mrb[0].mxu0
        %v2600 = vadd.f32 0.0, %v2599
        %v2601 = vpop.f32.mrb[0].mxu0
        %2602 = vmatprep.mubr.bf16.mxu0 0
        %2603 = vmatmul.mubr.bf16.gmra.mrb[0].mxu0 %v2489
        %v2604 = vpop.f32.mrb[0].mxu0
        %v2605 = vadd.f32 0.0, %v2604
        %v2606 = vpop.f32.mrb[0].mxu0
        %v2607 = vpop.f32.mrb[0].mxu0
        %v2608 = vadd.f32 0.0, %v2607
        %v2609 = vpop.f32.mrb[0].mxu0
        %2610 = vmatprep.mubr.bf16.mxu0 0
        %2611 = vmatmul.mubr.bf16.gmra.mrb[0].mxu0 %v2492
        %v2612 = vpop.f32.mrb[0].mxu0
        %v2613 = vadd.f32 0.0, %v2612
        %v2614 = vpop.f32.mrb[0].mxu0
        %v2615 = vpop.f32.mrb[0].mxu0
        %v2616 = vadd.f32 0.0, %v2615
        %v2617 = vpop.f32.mrb[0].mxu0
        %2618 = vmatprep.mubr.bf16.mxu0 0
        %2619 = vmatmul.mubr.bf16.gmra.mrb[0].mxu0 %v2495
        %v2620 = vpop.f32.mrb[0].mxu0
        %v2621 = vadd.f32 0.0, %v2620
        %v2622 = vpop.f32.mrb[0].mxu0
        %v2623 = vpop.f32.mrb[0].mxu0
        %v2624 = vadd.f32 0.0, %v2623
        %v2625 = vpop.f32.mrb[0].mxu0
        %2626 = vmatprep.mubr.bf16.mxu0 0
        %2627 = vmatmul.mubr.bf16.gmra.mrb[0].mxu0 %v2498
        %v2628 = vpop.f32.mrb[0].mxu0
        %v2629 = vadd.f32 0.0, %v2628
        %v2630 = vpop.f32.mrb[0].mxu0
        %v2631 = vpop.f32.mrb[0].mxu0
        %v2632 = vadd.f32 0.0, %v2631
        %v2633 = vpop.f32.mrb[0].mxu0
        %2634 = vmatprep.mubr.bf16.mxu0 0
        %2635 = vmatmul.mubr.bf16.gmra.mrb[0].mxu0 %v2501
        %v2636 = vpop.f32.mrb[0].mxu0
        %v2637 = vadd.f32 0.0, %v2636
        %v2638 = vpop.f32.mrb[0].mxu0
        %v2639 = vpop.f32.mrb[0].mxu0
        %v2640 = vadd.f32 0.0, %v2639
        %v2641 = vpop.f32.mrb[0].mxu0
        %2642 = vmatprep.mubr.bf16.mxu0 0
        %2643 = vmatmul.mubr.bf16.gmra.mrb[0].mxu0 %v2504
        %v2644 = vpop.f32.mrb[0].mxu0
        %v2645 = vadd.f32 0.0, %v2644
        %v2646 = vpop.f32.mrb[0].mxu0
        %v2647 = vpop.f32.mrb[0].mxu0
        %v2648 = vadd.f32 0.0, %v2647
        %v2649 = vpop.f32.mrb[0].mxu0
        %2650 = vmatprep.mubr.bf16.mxu0 0
        %2651 = vmatmul.mubr.bf16.gmra.mrb[0].mxu0 %v2507
        %v2652 = vpop.f32.mrb[0].mxu0
        %v2653 = vadd.f32 0.0, %v2652
        %v2654 = vpop.f32.mrb[0].mxu0
        %v2655 = vpop.f32.mrb[0].mxu0
        %v2656 = vadd.f32 0.0, %v2655
        %v2657 = vpop.f32.mrb[0].mxu0
        %2658 = vmatprep.mubr.bf16.mxu0 0
        %2659 = vmatmul.mubr.bf16.gmra.mrb[0].mxu0 %v2510
        %v2660 = vpop.f32.mrb[0].mxu0
        %v2661 = vadd.f32 0.0, %v2660
        %v2662 = vpop.f32.mrb[0].mxu0
        %v2663 = vpop.f32.mrb[0].mxu0
        %v2664 = vadd.f32 0.0, %v2663
        %v2665 = vpop.f32.mrb[0].mxu0
        %2666 = vmatprep.mubr.bf16.mxu0 0
        %2667 = vmatmul.mubr.bf16.gmra.mrb[0].mxu0 %v2513
        %v2668 = vpop.f32.mrb[0].mxu0
        %v2669 = vadd.f32 0.0, %v2668
        %v2670 = vpop.f32.mrb[0].mxu0
        %v2671 = vpop.f32.mrb[0].mxu0
        %v2672 = vadd.f32 0.0, %v2671
        %v2673 = vpop.f32.mrb[0].mxu0
        %2674 = vmatprep.mubr.bf16.mxu0 0
        %2675 = vmatmul.mubr.bf16.gmra.mrb[0].mxu0 %v2516
        %v2676 = vpop.f32.mrb[0].mxu0
        %v2677 = vadd.f32 0.0, %v2676
        %v2678 = vpop.f32.mrb[0].mxu0
        %v2679 = vpop.f32.mrb[0].mxu0
        %v2680 = vadd.f32 0.0, %v2679
        %v2681 = vpop.f32.mrb[0].mxu0
        %2682 = vmatprep.mubr.bf16.mxu0 0
        %2683 = vmatmul.mubr.bf16.gmra.mrb[0].mxu0 %v2519
        %v2684 = vpop.f32.mrb[0].mxu0
        %v2685 = vadd.f32 0.0, %v2684
        %v2686 = vpop.f32.mrb[0].mxu0
        %v2687 = vpop.f32.mrb[0].mxu0
        %v2688 = vadd.f32 0.0, %v2687
        %v2689 = vpop.f32.mrb[0].mxu0
        %2690 = vmatprep.mubr.bf16.mxu0 0
        %2691 = vmatmul.mubr.bf16.gmra.mrb[0].mxu0 %v2522
        %v2692 = vpop.f32.mrb[0].mxu0
        %v2693 = vadd.f32 0.0, %v2692
        %v2694 = vpop.f32.mrb[0].mxu0
        %v2695 = vpop.f32.mrb[0].mxu0
        %v2696 = vadd.f32 0.0, %v2695
        %v2697 = vpop.f32.mrb[0].mxu0
        %2698 = vmatprep.mubr.bf16.mxu0 0
        %2699 = vmatmul.mubr.bf16.gmra.mrb[0].mxu0 %v2525
        %v2700 = vpop.f32.mrb[0].mxu0
        %v2701 = vadd.f32 0.0, %v2700
        %v2702 = vpop.f32.mrb[0].mxu0
        %v2703 = vpop.f32.mrb[0].mxu0
        %v2704 = vadd.f32 0.0, %v2703
        %v2705 = vpop.f32.mrb[0].mxu0
        %2706 = vdwg.mxu0
        %v2707 = vadd.f32 %v2349, %v2565
        %v2708 = vadd.f32 %v2350, %v2568
        %v2709 = vadd.f32 %v2351, %v2573
        %v2710 = vadd.f32 %v2352, %v2576
        %v2711 = vadd.f32 %v2353, %v2581
        %v2712 = vadd.f32 %v2354, %v2584
        %v2713 = vadd.f32 %v2355, %v2589
        %v2714 = vadd.f32 %v2356, %v2592
        %v2715 = vadd.f32 %v2357, %v2597
        %v2716 = vadd.f32 %v2358, %v2600
        %v2717 = vadd.f32 %v2359, %v2605
        %v2718 = vadd.f32 %v2360, %v2608
        %v2719 = vadd.f32 %v2361, %v2613
        %v2720 = vadd.f32 %v2362, %v2616
        %v2721 = vadd.f32 %v2363, %v2621
        %v2722 = vadd.f32 %v2364, %v2624
        %v2723 = vadd.f32 %v2365, %v2629
        %v2724 = vadd.f32 %v2366, %v2632
        %v2725 = vadd.f32 %v2367, %v2637
        %v2726 = vadd.f32 %v2368, %v2640
        %v2727 = vadd.f32 %v2369, %v2645
        %v2728 = vadd.f32 %v2370, %v2648
        %v2729 = vadd.f32 %v2371, %v2653
        %v2730 = vadd.f32 %v2372, %v2656
        %v2731 = vadd.f32 %v2373, %v2661
        %v2732 = vadd.f32 %v2374, %v2664
        %v2733 = vadd.f32 %v2375, %v2669
        %v2734 = vadd.f32 %v2376, %v2672
        %v2735 = vadd.f32 %v2377, %v2677
        %v2736 = vadd.f32 %v2378, %v2680
        %v2737 = vadd.f32 %v2379, %v2685
        %v2738 = vadd.f32 %v2380, %v2688
        %v2739 = vadd.f32 %v2381, %v2693
        %v2740 = vadd.f32 %v2382, %v2696
        %v2741 = vadd.f32 %v2383, %v2701
        %v2742 = vadd.f32 %v2384, %v2704
        %s2743 = scalar_lea.vmem %s1, 32
        %v2744 = vld [vmem:[%s2743] sm:$0xf]
        %vm2745 = vcmask 1044480
        %v2746 = vrot.slane %v303, 3
        %v2747 = vrot.slane %v304, 3
        %v2748 = vsel %vm2745, %v2746, %v2747
        %v2749 = vrot.slane %v305, 3
        %v2750 = vsel %vm2745, %v2747, %v2749
        %v2751 = vrot.slane %v306, 3
        %v2752 = vsel %vm2745, %v2749, %v2751
        %v2753 = vrot.slane %v307, 3
        %v2754 = vsel %vm2745, %v2751, %v2753
        %v2755 = vrot.slane %v308, 3
        %v2756 = vsel %vm2745, %v2753, %v2755
        %v2757 = vrot.slane %v309, 3
        %v2758 = vsel %vm2745, %v2755, %v2757
        %v2759 = vrot.slane %v310, 3
        %v2760 = vsel %vm2745, %v2757, %v2759
        %v2761 = vrot.slane %v311, 3
        %v2762 = vsel %vm2745, %v2759, %v2761
        %v2763 = vrot.slane %v312, 3
        %v2764 = vsel %vm2745, %v2761, %v2763
        %v2765 = vrot.slane %v313, 3
        %v2766 = vsel %vm2745, %v2763, %v2765
        %v2767 = vrot.slane %v314, 3
        %v2768 = vsel %vm2745, %v2765, %v2767
        %v2769 = vrot.slane %v315, 3
        %v2770 = vsel %vm2745, %v2767, %v2769
        %v2771 = vrot.slane %v316, 3
        %v2772 = vsel %vm2745, %v2769, %v2771
        %v2773 = vrot.slane %v317, 3
        %v2774 = vsel %vm2745, %v2771, %v2773
        %v2775 = vrot.slane %v318, 3
        %v2776 = vsel %vm2745, %v2773, %v2775
        %v2777 = vrot.slane %v1253, 3
        %v2778 = vsel %vm2745, %v2775, %v2777
        %v2779 = vrot.slane %v2153, 3
        %v2780 = vsel %vm2745, %v2777, %v2779
        %v2781 = vrot.slane %v2154, 3
        %v2782 = vsel %vm2745, %v2779, %v2781
        %v2784 = vsel %vm472, %v2748, 0
        %v2787 = vsel %vm472, %v2750, 0
        %v2790 = vsel %vm472, %v2752, 0
        %v2793 = vsel %vm472, %v2754, 0
        %v2796 = vsel %vm472, %v2756, 0
        %v2799 = vsel %vm472, %v2758, 0
        %v2802 = vsel %vm472, %v2760, 0
        %v2805 = vsel %vm472, %v2762, 0
        %v2808 = vsel %vm472, %v2764, 0
        %v2811 = vsel %vm472, %v2766, 0
        %v2814 = vsel %vm472, %v2768, 0
        %v2817 = vsel %vm472, %v2770, 0
        %v2820 = vsel %vm472, %v2772, 0
        %v2823 = vsel %vm472, %v2774, 0
        %v2826 = vsel %vm472, %v2776, 0
        %v2829 = vsel %vm472, %v2778, 0
        %v2832 = vsel %vm472, %v2780, 0
        %v2835 = vsel %vm472, %v2782, 0
        %v2838 = vsel %vm527, %v2744, 0
        %2840 = vmatprep.subr.bf16.mxu0 0
        %2841 = vmatpush1.bf16.msra.mxu0 %v2838
        %2842 = vmatprep.subr.bf16.mxu0 0
        %2843 = vmatpush1.bf16.msra.mxu0 0
        %2844 = vmatprep.subr.bf16.mxu0 0
        %2845 = vmatpush1.bf16.msra.mxu0 0
        %2846 = vmatprep.subr.bf16.mxu0 0
        %2847 = vmatpush1.bf16.msra.mxu0 0
        %2848 = vmatprep.subr.bf16.mxu0 0
        %2849 = vmatpush1.bf16.msra.mxu0 0
        %2850 = vmatprep.subr.bf16.mxu0 0
        %2851 = vmatpush1.bf16.msra.mxu0 0
        %2852 = vmatprep.subr.bf16.mxu0 0
        %2853 = vmatpush1.bf16.msra.mxu0 0
        %2854 = vmatprep.subr.bf16.mxu0 0
        %2855 = vmatpush1.bf16.msra.mxu0 0
        %2856 = vmatprep.subr.bf16.mxu0 0
        %2857 = vmatpush1.bf16.msra.mxu0 0
        %2858 = vmatprep.subr.bf16.mxu0 0
        %2859 = vmatpush1.bf16.msra.mxu0 0
        %2860 = vmatprep.subr.bf16.mxu0 0
        %2861 = vmatpush1.bf16.msra.mxu0 0
        %2862 = vmatprep.subr.bf16.mxu0 0
        %2863 = vmatpush1.bf16.msra.mxu0 0
        %2864 = vmatprep.subr.bf16.mxu0 0
        %2865 = vmatpush1.bf16.msra.mxu0 0
        %2866 = vmatprep.subr.bf16.mxu0 0
        %2867 = vmatpush1.bf16.msra.mxu0 0
        %2868 = vmatprep.subr.bf16.mxu0 0
        %2869 = vmatpush1.bf16.msra.mxu0 0
        %2870 = vmatprep.subr.bf16.mxu0 0
        %2871 = vmatpush1.bf16.msra.mxu0 0
        %2872 = vmatprep.mubr.bf16.mxu0 0
        %2873 = vmatmul.mubr.bf16.gmra.mrb[0].mxu0 %v2784
        %v2874 = vpop.f32.mrb[0].mxu0
        %v2875 = vadd.f32 0.0, %v2874
        %v2876 = vpop.f32.mrb[0].mxu0
        %v2877 = vpop.f32.mrb[0].mxu0
        %v2878 = vadd.f32 0.0, %v2877
        %v2879 = vpop.f32.mrb[0].mxu0
        %2880 = vmatprep.mubr.bf16.mxu0 0
        %2881 = vmatmul.mubr.bf16.gmra.mrb[0].mxu0 %v2787
        %v2882 = vpop.f32.mrb[0].mxu0
        %v2883 = vadd.f32 0.0, %v2882
        %v2884 = vpop.f32.mrb[0].mxu0
        %v2885 = vpop.f32.mrb[0].mxu0
        %v2886 = vadd.f32 0.0, %v2885
        %v2887 = vpop.f32.mrb[0].mxu0
        %2888 = vmatprep.mubr.bf16.mxu0 0
        %2889 = vmatmul.mubr.bf16.gmra.mrb[0].mxu0 %v2790
        %v2890 = vpop.f32.mrb[0].mxu0
        %v2891 = vadd.f32 0.0, %v2890
        %v2892 = vpop.f32.mrb[0].mxu0
        %v2893 = vpop.f32.mrb[0].mxu0
        %v2894 = vadd.f32 0.0, %v2893
        %v2895 = vpop.f32.mrb[0].mxu0
        %2896 = vmatprep.mubr.bf16.mxu0 0
        %2897 = vmatmul.mubr.bf16.gmra.mrb[0].mxu0 %v2793
        %v2898 = vpop.f32.mrb[0].mxu0
        %v2899 = vadd.f32 0.0, %v2898
        %v2900 = vpop.f32.mrb[0].mxu0
        %v2901 = vpop.f32.mrb[0].mxu0
        %v2902 = vadd.f32 0.0, %v2901
        %v2903 = vpop.f32.mrb[0].mxu0
        %2904 = vmatprep.mubr.bf16.mxu0 0
        %2905 = vmatmul.mubr.bf16.gmra.mrb[0].mxu0 %v2796
        %v2906 = vpop.f32.mrb[0].mxu0
        %v2907 = vadd.f32 0.0, %v2906
        %v2908 = vpop.f32.mrb[0].mxu0
        %v2909 = vpop.f32.mrb[0].mxu0
        %v2910 = vadd.f32 0.0, %v2909
        %v2911 = vpop.f32.mrb[0].mxu0
        %2912 = vmatprep.mubr.bf16.mxu0 0
        %2913 = vmatmul.mubr.bf16.gmra.mrb[0].mxu0 %v2799
        %v2914 = vpop.f32.mrb[0].mxu0
        %v2915 = vadd.f32 0.0, %v2914
        %v2916 = vpop.f32.mrb[0].mxu0
        %v2917 = vpop.f32.mrb[0].mxu0
        %v2918 = vadd.f32 0.0, %v2917
        %v2919 = vpop.f32.mrb[0].mxu0
        %2920 = vmatprep.mubr.bf16.mxu0 0
        %2921 = vmatmul.mubr.bf16.gmra.mrb[0].mxu0 %v2802
        %v2922 = vpop.f32.mrb[0].mxu0
        %v2923 = vadd.f32 0.0, %v2922
        %v2924 = vpop.f32.mrb[0].mxu0
        %v2925 = vpop.f32.mrb[0].mxu0
        %v2926 = vadd.f32 0.0, %v2925
        %v2927 = vpop.f32.mrb[0].mxu0
        %2928 = vmatprep.mubr.bf16.mxu0 0
        %2929 = vmatmul.mubr.bf16.gmra.mrb[0].mxu0 %v2805
        %v2930 = vpop.f32.mrb[0].mxu0
        %v2931 = vadd.f32 0.0, %v2930
        %v2932 = vpop.f32.mrb[0].mxu0
        %v2933 = vpop.f32.mrb[0].mxu0
        %v2934 = vadd.f32 0.0, %v2933
        %v2935 = vpop.f32.mrb[0].mxu0
        %2936 = vmatprep.mubr.bf16.mxu0 0
        %2937 = vmatmul.mubr.bf16.gmra.mrb[0].mxu0 %v2808
        %v2938 = vpop.f32.mrb[0].mxu0
        %v2939 = vadd.f32 0.0, %v2938
        %v2940 = vpop.f32.mrb[0].mxu0
        %v2941 = vpop.f32.mrb[0].mxu0
        %v2942 = vadd.f32 0.0, %v2941
        %v2943 = vpop.f32.mrb[0].mxu0
        %2944 = vmatprep.mubr.bf16.mxu0 0
        %2945 = vmatmul.mubr.bf16.gmra.mrb[0].mxu0 %v2811
        %v2946 = vpop.f32.mrb[0].mxu0
        %v2947 = vadd.f32 0.0, %v2946
        %v2948 = vpop.f32.mrb[0].mxu0
        %v2949 = vpop.f32.mrb[0].mxu0
        %v2950 = vadd.f32 0.0, %v2949
        %v2951 = vpop.f32.mrb[0].mxu0
        %2952 = vmatprep.mubr.bf16.mxu0 0
        %2953 = vmatmul.mubr.bf16.gmra.mrb[0].mxu0 %v2814
        %v2954 = vpop.f32.mrb[0].mxu0
        %v2955 = vadd.f32 0.0, %v2954
        %v2956 = vpop.f32.mrb[0].mxu0
        %v2957 = vpop.f32.mrb[0].mxu0
        %v2958 = vadd.f32 0.0, %v2957
        %v2959 = vpop.f32.mrb[0].mxu0
        %2960 = vmatprep.mubr.bf16.mxu0 0
        %2961 = vmatmul.mubr.bf16.gmra.mrb[0].mxu0 %v2817
        %v2962 = vpop.f32.mrb[0].mxu0
        %v2963 = vadd.f32 0.0, %v2962
        %v2964 = vpop.f32.mrb[0].mxu0
        %v2965 = vpop.f32.mrb[0].mxu0
        %v2966 = vadd.f32 0.0, %v2965
        %v2967 = vpop.f32.mrb[0].mxu0
        %2968 = vmatprep.mubr.bf16.mxu0 0
        %2969 = vmatmul.mubr.bf16.gmra.mrb[0].mxu0 %v2820
        %v2970 = vpop.f32.mrb[0].mxu0
        %v2971 = vadd.f32 0.0, %v2970
        %v2972 = vpop.f32.mrb[0].mxu0
        %v2973 = vpop.f32.mrb[0].mxu0
        %v2974 = vadd.f32 0.0, %v2973
        %v2975 = vpop.f32.mrb[0].mxu0
        %2976 = vmatprep.mubr.bf16.mxu0 0
        %2977 = vmatmul.mubr.bf16.gmra.mrb[0].mxu0 %v2823
        %v2978 = vpop.f32.mrb[0].mxu0
        %v2979 = vadd.f32 0.0, %v2978
        %v2980 = vpop.f32.mrb[0].mxu0
        %v2981 = vpop.f32.mrb[0].mxu0
        %v2982 = vadd.f32 0.0, %v2981
        %v2983 = vpop.f32.mrb[0].mxu0
        %2984 = vmatprep.mubr.bf16.mxu0 0
        %2985 = vmatmul.mubr.bf16.gmra.mrb[0].mxu0 %v2826
        %v2986 = vpop.f32.mrb[0].mxu0
        %v2987 = vadd.f32 0.0, %v2986
        %v2988 = vpop.f32.mrb[0].mxu0
        %v2989 = vpop.f32.mrb[0].mxu0
        %v2990 = vadd.f32 0.0, %v2989
        %v2991 = vpop.f32.mrb[0].mxu0
        %2992 = vmatprep.mubr.bf16.mxu0 0
        %2993 = vmatmul.mubr.bf16.gmra.mrb[0].mxu0 %v2829
        %v2994 = vpop.f32.mrb[0].mxu0
        %v2995 = vadd.f32 0.0, %v2994
        %v2996 = vpop.f32.mrb[0].mxu0
        %v2997 = vpop.f32.mrb[0].mxu0
        %v2998 = vadd.f32 0.0, %v2997
        %v2999 = vpop.f32.mrb[0].mxu0
        %3000 = vmatprep.mubr.bf16.mxu0 0
        %3001 = vmatmul.mubr.bf16.gmra.mrb[0].mxu0 %v2832
        %v3002 = vpop.f32.mrb[0].mxu0
        %v3003 = vadd.f32 0.0, %v3002
        %v3004 = vpop.f32.mrb[0].mxu0
        %v3005 = vpop.f32.mrb[0].mxu0
        %v3006 = vadd.f32 0.0, %v3005
        %v3007 = vpop.f32.mrb[0].mxu0
        %3008 = vmatprep.mubr.bf16.mxu0 0
        %3009 = vmatmul.mubr.bf16.gmra.mrb[0].mxu0 %v2835
        %v3010 = vpop.f32.mrb[0].mxu0
        %v3011 = vadd.f32 0.0, %v3010
        %v3012 = vpop.f32.mrb[0].mxu0
        %v3013 = vpop.f32.mrb[0].mxu0
        %v3014 = vadd.f32 0.0, %v3013
        %v3015 = vpop.f32.mrb[0].mxu0
        %3016 = vdwg.mxu0
        %v3017 = vadd.f32 %v2707, %v2875
        %v3018 = vadd.f32 %v2708, %v2878
        %v3019 = vadd.f32 %v2709, %v2883
        %v3020 = vadd.f32 %v2710, %v2886
        %v3021 = vadd.f32 %v2711, %v2891
        %v3022 = vadd.f32 %v2712, %v2894
        %v3023 = vadd.f32 %v2713, %v2899
        %v3024 = vadd.f32 %v2714, %v2902
        %v3025 = vadd.f32 %v2715, %v2907
        %v3026 = vadd.f32 %v2716, %v2910
        %v3027 = vadd.f32 %v2717, %v2915
        %v3028 = vadd.f32 %v2718, %v2918
        %v3029 = vadd.f32 %v2719, %v2923
        %v3030 = vadd.f32 %v2720, %v2926
        %v3031 = vadd.f32 %v2721, %v2931
        %v3032 = vadd.f32 %v2722, %v2934
        %v3033 = vadd.f32 %v2723, %v2939
        %v3034 = vadd.f32 %v2724, %v2942
        %v3035 = vadd.f32 %v2725, %v2947
        %v3036 = vadd.f32 %v2726, %v2950
        %v3037 = vadd.f32 %v2727, %v2955
        %v3038 = vadd.f32 %v2728, %v2958
        %v3039 = vadd.f32 %v2729, %v2963
        %v3040 = vadd.f32 %v2730, %v2966
        %v3041 = vadd.f32 %v2731, %v2971
        %v3042 = vadd.f32 %v2732, %v2974
        %v3043 = vadd.f32 %v2733, %v2979
        %v3044 = vadd.f32 %v2734, %v2982
        %v3045 = vadd.f32 %v2735, %v2987
        %v3046 = vadd.f32 %v2736, %v2990
        %v3047 = vadd.f32 %v2737, %v2995
        %v3048 = vadd.f32 %v2738, %v2998
        %v3049 = vadd.f32 %v2739, %v3003
        %v3050 = vadd.f32 %v2740, %v3006
        %v3051 = vadd.f32 %v2741, %v3011
        %v3052 = vadd.f32 %v2742, %v3014
        %v3053 = vld [vmem:[%s2] sm:$0x1]
        %v3055 = vlaneseq
        %v3056 = vshrl.u32 %v3055, 7
        %v3057 = vsub.s32 0, %v3056
        %v3058 = vrot.slane %v3053, %v3057
        %v3060 = vadd.f32 %v3017, %v3058
        %v3061 = vadd.f32 %v3018, %v3058
        %v3062 = vadd.f32 %v3019, %v3058
        %v3063 = vadd.f32 %v3020, %v3058
        %v3064 = vadd.f32 %v3021, %v3058
        %v3065 = vadd.f32 %v3022, %v3058
        %v3066 = vadd.f32 %v3023, %v3058
        %v3067 = vadd.f32 %v3024, %v3058
        %v3068 = vadd.f32 %v3025, %v3058
        %v3069 = vadd.f32 %v3026, %v3058
        %v3070 = vadd.f32 %v3027, %v3058
        %v3071 = vadd.f32 %v3028, %v3058
        %v3072 = vadd.f32 %v3029, %v3058
        %v3073 = vadd.f32 %v3030, %v3058
        %v3074 = vadd.f32 %v3031, %v3058
        %v3075 = vadd.f32 %v3032, %v3058
        %v3076 = vadd.f32 %v3033, %v3058
        %v3077 = vadd.f32 %v3034, %v3058
        %v3078 = vadd.f32 %v3035, %v3058
        %v3079 = vadd.f32 %v3036, %v3058
        %v3080 = vadd.f32 %v3037, %v3058
        %v3081 = vadd.f32 %v3038, %v3058
        %v3082 = vadd.f32 %v3039, %v3058
        %v3083 = vadd.f32 %v3040, %v3058
        %v3084 = vadd.f32 %v3041, %v3058
        %v3085 = vadd.f32 %v3042, %v3058
        %v3086 = vadd.f32 %v3043, %v3058
        %v3087 = vadd.f32 %v3044, %v3058
        %v3088 = vadd.f32 %v3045, %v3058
        %v3089 = vadd.f32 %v3046, %v3058
        %v3090 = vadd.f32 %v3047, %v3058
        %v3091 = vadd.f32 %v3048, %v3058
        %v3092 = vadd.f32 %v3049, %v3058
        %v3093 = vadd.f32 %v3050, %v3058
        %v3094 = vadd.f32 %v3051, %v3058
        %v3095 = vadd.f32 %v3052, %v3058
        %v3096 = vmax.f32 %v3060, 0.0
        %v3097 = vmax.f32 %v3061, 0.0
        %v3098 = vmax.f32 %v3062, 0.0
        %v3099 = vmax.f32 %v3063, 0.0
        %v3100 = vmax.f32 %v3064, 0.0
        %v3101 = vmax.f32 %v3065, 0.0
        %v3102 = vmax.f32 %v3066, 0.0
        %v3103 = vmax.f32 %v3067, 0.0
        %v3104 = vmax.f32 %v3068, 0.0
        %v3105 = vmax.f32 %v3069, 0.0
        %v3106 = vmax.f32 %v3070, 0.0
        %v3107 = vmax.f32 %v3071, 0.0
        %v3108 = vmax.f32 %v3072, 0.0
        %v3109 = vmax.f32 %v3073, 0.0
        %v3110 = vmax.f32 %v3074, 0.0
        %v3111 = vmax.f32 %v3075, 0.0
        %v3112 = vmax.f32 %v3076, 0.0
        %v3113 = vmax.f32 %v3077, 0.0
        %v3114 = vmax.f32 %v3078, 0.0
        %v3115 = vmax.f32 %v3079, 0.0
        %v3116 = vmax.f32 %v3080, 0.0
        %v3117 = vmax.f32 %v3081, 0.0
        %v3118 = vmax.f32 %v3082, 0.0
        %v3119 = vmax.f32 %v3083, 0.0
        %v3120 = vmax.f32 %v3084, 0.0
        %v3121 = vmax.f32 %v3085, 0.0
        %v3122 = vmax.f32 %v3086, 0.0
        %v3123 = vmax.f32 %v3087, 0.0
        %v3124 = vmax.f32 %v3088, 0.0
        %v3125 = vmax.f32 %v3089, 0.0
        %v3126 = vmax.f32 %v3090, 0.0
        %v3127 = vmax.f32 %v3091, 0.0
        %v3128 = vmax.f32 %v3092, 0.0
        %v3129 = vmax.f32 %v3093, 0.0
        %v3130 = vmax.f32 %v3094, 0.0
        %v3131 = vmax.f32 %v3095, 0.0
        %v3132 = vlaneseq
        %v3133 = vshrl.u32 %v3132, 7
        %v3134 = vadd.s32 %v3133, 8
        %v3135 = vadd.s32 %v3133, 16
        %v3136 = vadd.s32 %v3133, 24
        %v3137 = vadd.s32 %v3133, 32
        %v3138 = vadd.s32 %v3133, 40
        %v3139 = vadd.s32 %v3133, 48
        %v3140 = vadd.s32 %v3133, 56
        %v3141 = vadd.s32 %v3133, 64
        %v3142 = vadd.s32 %v3133, 72
        %v3143 = vadd.s32 %v3133, 80
        %v3144 = vadd.s32 %v3133, 88
        %v3145 = vadd.s32 %v3133, 96
        %v3146 = vadd.s32 %v3133, 104
        %v3147 = vadd.s32 %v3133, 112
        %v3148 = vadd.s32 %v3133, 120
        %v3149 = vadd.s32 %v3133, 128
        %v3150 = vadd.s32 %v3133, 136
        %v3151 = vadd.s32 %v3133, 144
        %v3152 = vadd.s32 %v3133, 152
        %v3153 = vadd.s32 %v3133, 160
        %v3154 = vadd.s32 %v3133, 168
        %v3155 = vadd.s32 %v3133, 176
        %v3156 = vadd.s32 %v3133, 184
        %v3157 = vadd.s32 %v3133, 192
        %v3158 = vadd.s32 %v3133, 200
        %v3159 = vadd.s32 %v3133, 208
        %v3160 = vadd.s32 %v3133, 216
        %v3161 = vadd.s32 %v3133, 224
        %v3162 = vadd.s32 %v3133, 232
        %v3163 = vadd.s32 %v3133, 240
        %v3164 = vadd.s32 %v3133, 248
        %v3165 = vadd.s32 %v3133, 256
        %v3166 = vadd.s32 %v3133, 264
        %v3167 = vadd.s32 %v3133, 272
        %v3168 = vadd.s32 %v3133, 280
        %vm3169 = vcmp.lt.s32.totalorder %v3133, 0
        %v3170 = vsub.s32 0, %v3133
        %v3171 = vsel %vm3169, %v3170, %v3133
        %v3172 = vmul.u32.u64.compose %v3171, 3817748708
        %v3173 = vextract.low.u32 %v3172
        %v3174 = vextract.high.u32 %v3172
        %v3175 = vshrl.u32 %v3174, 4
        %v3176 = vmul.u32 %v3175, 18
        %v3177 = vsub.s32 %v3171, %v3176
        %v3178 = vsub.s32 0, %v3177
        %v3179 = vsel %vm3169, %v3178, %v3177
        %vm3180 = vcmp.lt.s32.totalorder %v3134, 0
        %v3181 = vsub.s32 0, %v3134
        %v3182 = vsel %vm3180, %v3181, %v3134
        %v3183 = vmul.u32.u64.compose %v3182, 3817748708
        %v3184 = vextract.low.u32 %v3183
        %v3185 = vextract.high.u32 %v3183
        %v3186 = vshrl.u32 %v3185, 4
        %v3187 = vmul.u32 %v3186, 18
        %v3188 = vsub.s32 %v3182, %v3187
        %v3189 = vsub.s32 0, %v3188
        %v3190 = vsel %vm3180, %v3189, %v3188
        %vm3191 = vcmp.lt.s32.totalorder %v3135, 0
        %v3192 = vsub.s32 0, %v3135
        %v3193 = vsel %vm3191, %v3192, %v3135
        %v3194 = vmul.u32.u64.compose %v3193, 3817748708
        %v3195 = vextract.low.u32 %v3194
        %v3196 = vextract.high.u32 %v3194
        %v3197 = vshrl.u32 %v3196, 4
        %v3198 = vmul.u32 %v3197, 18
        %v3199 = vsub.s32 %v3193, %v3198
        %v3200 = vsub.s32 0, %v3199
        %v3201 = vsel %vm3191, %v3200, %v3199
        %vm3202 = vcmp.lt.s32.totalorder %v3136, 0
        %v3203 = vsub.s32 0, %v3136
        %v3204 = vsel %vm3202, %v3203, %v3136
        %v3205 = vmul.u32.u64.compose %v3204, 3817748708
        %v3206 = vextract.low.u32 %v3205
        %v3207 = vextract.high.u32 %v3205
        %v3208 = vshrl.u32 %v3207, 4
        %v3209 = vmul.u32 %v3208, 18
        %v3210 = vsub.s32 %v3204, %v3209
        %v3211 = vsub.s32 0, %v3210
        %v3212 = vsel %vm3202, %v3211, %v3210
        %vm3213 = vcmp.lt.s32.totalorder %v3137, 0
        %v3214 = vsub.s32 0, %v3137
        %v3215 = vsel %vm3213, %v3214, %v3137
        %v3216 = vmul.u32.u64.compose %v3215, 3817748708
        %v3217 = vextract.low.u32 %v3216
        %v3218 = vextract.high.u32 %v3216
        %v3219 = vshrl.u32 %v3218, 4
        %v3220 = vmul.u32 %v3219, 18
        %v3221 = vsub.s32 %v3215, %v3220
        %v3222 = vsub.s32 0, %v3221
        %v3223 = vsel %vm3213, %v3222, %v3221
        %vm3224 = vcmp.lt.s32.totalorder %v3138, 0
        %v3225 = vsub.s32 0, %v3138
        %v3226 = vsel %vm3224, %v3225, %v3138
        %v3227 = vmul.u32.u64.compose %v3226, 3817748708
        %v3228 = vextract.low.u32 %v3227
        %v3229 = vextract.high.u32 %v3227
        %v3230 = vshrl.u32 %v3229, 4
        %v3231 = vmul.u32 %v3230, 18
        %v3232 = vsub.s32 %v3226, %v3231
        %v3233 = vsub.s32 0, %v3232
        %v3234 = vsel %vm3224, %v3233, %v3232
        %vm3235 = vcmp.lt.s32.totalorder %v3139, 0
        %v3236 = vsub.s32 0, %v3139
        %v3237 = vsel %vm3235, %v3236, %v3139
        %v3238 = vmul.u32.u64.compose %v3237, 3817748708
        %v3239 = vextract.low.u32 %v3238
        %v3240 = vextract.high.u32 %v3238
        %v3241 = vshrl.u32 %v3240, 4
        %v3242 = vmul.u32 %v3241, 18
        %v3243 = vsub.s32 %v3237, %v3242
        %v3244 = vsub.s32 0, %v3243
        %v3245 = vsel %vm3235, %v3244, %v3243
        %vm3246 = vcmp.lt.s32.totalorder %v3140, 0
        %v3247 = vsub.s32 0, %v3140
        %v3248 = vsel %vm3246, %v3247, %v3140
        %v3249 = vmul.u32.u64.compose %v3248, 3817748708
        %v3250 = vextract.low.u32 %v3249
        %v3251 = vextract.high.u32 %v3249
        %v3252 = vshrl.u32 %v3251, 4
        %v3253 = vmul.u32 %v3252, 18
        %v3254 = vsub.s32 %v3248, %v3253
        %v3255 = vsub.s32 0, %v3254
        %v3256 = vsel %vm3246, %v3255, %v3254
        %vm3257 = vcmp.lt.s32.totalorder %v3141, 0
        %v3258 = vsub.s32 0, %v3141
        %v3259 = vsel %vm3257, %v3258, %v3141
        %v3260 = vmul.u32.u64.compose %v3259, 3817748708
        %v3261 = vextract.low.u32 %v3260
        %v3262 = vextract.high.u32 %v3260
        %v3263 = vshrl.u32 %v3262, 4
        %v3264 = vmul.u32 %v3263, 18
        %v3265 = vsub.s32 %v3259, %v3264
        %v3266 = vsub.s32 0, %v3265
        %v3267 = vsel %vm3257, %v3266, %v3265
        %vm3268 = vcmp.lt.s32.totalorder %v3142, 0
        %v3269 = vsub.s32 0, %v3142
        %v3270 = vsel %vm3268, %v3269, %v3142
        %v3271 = vmul.u32.u64.compose %v3270, 3817748708
        %v3272 = vextract.low.u32 %v3271
        %v3273 = vextract.high.u32 %v3271
        %v3274 = vshrl.u32 %v3273, 4
        %v3275 = vmul.u32 %v3274, 18
        %v3276 = vsub.s32 %v3270, %v3275
        %v3277 = vsub.s32 0, %v3276
        %v3278 = vsel %vm3268, %v3277, %v3276
        %vm3279 = vcmp.lt.s32.totalorder %v3143, 0
        %v3280 = vsub.s32 0, %v3143
        %v3281 = vsel %vm3279, %v3280, %v3143
        %v3282 = vmul.u32.u64.compose %v3281, 3817748708
        %v3283 = vextract.low.u32 %v3282
        %v3284 = vextract.high.u32 %v3282
        %v3285 = vshrl.u32 %v3284, 4
        %v3286 = vmul.u32 %v3285, 18
        %v3287 = vsub.s32 %v3281, %v3286
        %v3288 = vsub.s32 0, %v3287
        %v3289 = vsel %vm3279, %v3288, %v3287
        %vm3290 = vcmp.lt.s32.totalorder %v3144, 0
        %v3291 = vsub.s32 0, %v3144
        %v3292 = vsel %vm3290, %v3291, %v3144
        %v3293 = vmul.u32.u64.compose %v3292, 3817748708
        %v3294 = vextract.low.u32 %v3293
        %v3295 = vextract.high.u32 %v3293
        %v3296 = vshrl.u32 %v3295, 4
        %v3297 = vmul.u32 %v3296, 18
        %v3298 = vsub.s32 %v3292, %v3297
        %v3299 = vsub.s32 0, %v3298
        %v3300 = vsel %vm3290, %v3299, %v3298
        %vm3301 = vcmp.lt.s32.totalorder %v3145, 0
        %v3302 = vsub.s32 0, %v3145
        %v3303 = vsel %vm3301, %v3302, %v3145
        %v3304 = vmul.u32.u64.compose %v3303, 3817748708
        %v3305 = vextract.low.u32 %v3304
        %v3306 = vextract.high.u32 %v3304
        %v3307 = vshrl.u32 %v3306, 4
        %v3308 = vmul.u32 %v3307, 18
        %v3309 = vsub.s32 %v3303, %v3308
        %v3310 = vsub.s32 0, %v3309
        %v3311 = vsel %vm3301, %v3310, %v3309
        %vm3312 = vcmp.lt.s32.totalorder %v3146, 0
        %v3313 = vsub.s32 0, %v3146
        %v3314 = vsel %vm3312, %v3313, %v3146
        %v3315 = vmul.u32.u64.compose %v3314, 3817748708
        %v3316 = vextract.low.u32 %v3315
        %v3317 = vextract.high.u32 %v3315
        %v3318 = vshrl.u32 %v3317, 4
        %v3319 = vmul.u32 %v3318, 18
        %v3320 = vsub.s32 %v3314, %v3319
        %v3321 = vsub.s32 0, %v3320
        %v3322 = vsel %vm3312, %v3321, %v3320
        %vm3323 = vcmp.lt.s32.totalorder %v3147, 0
        %v3324 = vsub.s32 0, %v3147
        %v3325 = vsel %vm3323, %v3324, %v3147
        %v3326 = vmul.u32.u64.compose %v3325, 3817748708
        %v3327 = vextract.low.u32 %v3326
        %v3328 = vextract.high.u32 %v3326
        %v3329 = vshrl.u32 %v3328, 4
        %v3330 = vmul.u32 %v3329, 18
        %v3331 = vsub.s32 %v3325, %v3330
        %v3332 = vsub.s32 0, %v3331
        %v3333 = vsel %vm3323, %v3332, %v3331
        %vm3334 = vcmp.lt.s32.totalorder %v3148, 0
        %v3335 = vsub.s32 0, %v3148
        %v3336 = vsel %vm3334, %v3335, %v3148
        %v3337 = vmul.u32.u64.compose %v3336, 3817748708
        %v3338 = vextract.low.u32 %v3337
        %v3339 = vextract.high.u32 %v3337
        %v3340 = vshrl.u32 %v3339, 4
        %v3341 = vmul.u32 %v3340, 18
        %v3342 = vsub.s32 %v3336, %v3341
        %v3343 = vsub.s32 0, %v3342
        %v3344 = vsel %vm3334, %v3343, %v3342
        %vm3345 = vcmp.lt.s32.totalorder %v3149, 0
        %v3346 = vsub.s32 0, %v3149
        %v3347 = vsel %vm3345, %v3346, %v3149
        %v3348 = vmul.u32.u64.compose %v3347, 3817748708
        %v3349 = vextract.low.u32 %v3348
        %v3350 = vextract.high.u32 %v3348
        %v3351 = vshrl.u32 %v3350, 4
        %v3352 = vmul.u32 %v3351, 18
        %v3353 = vsub.s32 %v3347, %v3352
        %v3354 = vsub.s32 0, %v3353
        %v3355 = vsel %vm3345, %v3354, %v3353
        %vm3356 = vcmp.lt.s32.totalorder %v3150, 0
        %v3357 = vsub.s32 0, %v3150
        %v3358 = vsel %vm3356, %v3357, %v3150
        %v3359 = vmul.u32.u64.compose %v3358, 3817748708
        %v3360 = vextract.low.u32 %v3359
        %v3361 = vextract.high.u32 %v3359
        %v3362 = vshrl.u32 %v3361, 4
        %v3363 = vmul.u32 %v3362, 18
        %v3364 = vsub.s32 %v3358, %v3363
        %v3365 = vsub.s32 0, %v3364
        %v3366 = vsel %vm3356, %v3365, %v3364
        %vm3367 = vcmp.lt.s32.totalorder %v3151, 0
        %v3368 = vsub.s32 0, %v3151
        %v3369 = vsel %vm3367, %v3368, %v3151
        %v3370 = vmul.u32.u64.compose %v3369, 3817748708
        %v3371 = vextract.low.u32 %v3370
        %v3372 = vextract.high.u32 %v3370
        %v3373 = vshrl.u32 %v3372, 4
        %v3374 = vmul.u32 %v3373, 18
        %v3375 = vsub.s32 %v3369, %v3374
        %v3376 = vsub.s32 0, %v3375
        %v3377 = vsel %vm3367, %v3376, %v3375
        %vm3378 = vcmp.lt.s32.totalorder %v3152, 0
        %v3379 = vsub.s32 0, %v3152
        %v3380 = vsel %vm3378, %v3379, %v3152
        %v3381 = vmul.u32.u64.compose %v3380, 3817748708
        %v3382 = vextract.low.u32 %v3381
        %v3383 = vextract.high.u32 %v3381
        %v3384 = vshrl.u32 %v3383, 4
        %v3385 = vmul.u32 %v3384, 18
        %v3386 = vsub.s32 %v3380, %v3385
        %v3387 = vsub.s32 0, %v3386
        %v3388 = vsel %vm3378, %v3387, %v3386
        %vm3389 = vcmp.lt.s32.totalorder %v3153, 0
        %v3390 = vsub.s32 0, %v3153
        %v3391 = vsel %vm3389, %v3390, %v3153
        %v3392 = vmul.u32.u64.compose %v3391, 3817748708
        %v3393 = vextract.low.u32 %v3392
        %v3394 = vextract.high.u32 %v3392
        %v3395 = vshrl.u32 %v3394, 4
        %v3396 = vmul.u32 %v3395, 18
        %v3397 = vsub.s32 %v3391, %v3396
        %v3398 = vsub.s32 0, %v3397
        %v3399 = vsel %vm3389, %v3398, %v3397
        %vm3400 = vcmp.lt.s32.totalorder %v3154, 0
        %v3401 = vsub.s32 0, %v3154
        %v3402 = vsel %vm3400, %v3401, %v3154
        %v3403 = vmul.u32.u64.compose %v3402, 3817748708
        %v3404 = vextract.low.u32 %v3403
        %v3405 = vextract.high.u32 %v3403
        %v3406 = vshrl.u32 %v3405, 4
        %v3407 = vmul.u32 %v3406, 18
        %v3408 = vsub.s32 %v3402, %v3407
        %v3409 = vsub.s32 0, %v3408
        %v3410 = vsel %vm3400, %v3409, %v3408
        %vm3411 = vcmp.lt.s32.totalorder %v3155, 0
        %v3412 = vsub.s32 0, %v3155
        %v3413 = vsel %vm3411, %v3412, %v3155
        %v3414 = vmul.u32.u64.compose %v3413, 3817748708
        %v3415 = vextract.low.u32 %v3414
        %v3416 = vextract.high.u32 %v3414
        %v3417 = vshrl.u32 %v3416, 4
        %v3418 = vmul.u32 %v3417, 18
        %v3419 = vsub.s32 %v3413, %v3418
        %v3420 = vsub.s32 0, %v3419
        %v3421 = vsel %vm3411, %v3420, %v3419
        %vm3422 = vcmp.lt.s32.totalorder %v3156, 0
        %v3423 = vsub.s32 0, %v3156
        %v3424 = vsel %vm3422, %v3423, %v3156
        %v3425 = vmul.u32.u64.compose %v3424, 3817748708
        %v3426 = vextract.low.u32 %v3425
        %v3427 = vextract.high.u32 %v3425
        %v3428 = vshrl.u32 %v3427, 4
        %v3429 = vmul.u32 %v3428, 18
        %v3430 = vsub.s32 %v3424, %v3429
        %v3431 = vsub.s32 0, %v3430
        %v3432 = vsel %vm3422, %v3431, %v3430
        %vm3433 = vcmp.lt.s32.totalorder %v3157, 0
        %v3434 = vsub.s32 0, %v3157
        %v3435 = vsel %vm3433, %v3434, %v3157
        %v3436 = vmul.u32.u64.compose %v3435, 3817748708
        %v3437 = vextract.low.u32 %v3436
        %v3438 = vextract.high.u32 %v3436
        %v3439 = vshrl.u32 %v3438, 4
        %v3440 = vmul.u32 %v3439, 18
        %v3441 = vsub.s32 %v3435, %v3440
        %v3442 = vsub.s32 0, %v3441
        %v3443 = vsel %vm3433, %v3442, %v3441
        %vm3444 = vcmp.lt.s32.totalorder %v3158, 0
        %v3445 = vsub.s32 0, %v3158
        %v3446 = vsel %vm3444, %v3445, %v3158
        %v3447 = vmul.u32.u64.compose %v3446, 3817748708
        %v3448 = vextract.low.u32 %v3447
        %v3449 = vextract.high.u32 %v3447
        %v3450 = vshrl.u32 %v3449, 4
        %v3451 = vmul.u32 %v3450, 18
        %v3452 = vsub.s32 %v3446, %v3451
        %v3453 = vsub.s32 0, %v3452
        %v3454 = vsel %vm3444, %v3453, %v3452
        %vm3455 = vcmp.lt.s32.totalorder %v3159, 0
        %v3456 = vsub.s32 0, %v3159
        %v3457 = vsel %vm3455, %v3456, %v3159
        %v3458 = vmul.u32.u64.compose %v3457, 3817748708
        %v3459 = vextract.low.u32 %v3458
        %v3460 = vextract.high.u32 %v3458
        %v3461 = vshrl.u32 %v3460, 4
        %v3462 = vmul.u32 %v3461, 18
        %v3463 = vsub.s32 %v3457, %v3462
        %v3464 = vsub.s32 0, %v3463
        %v3465 = vsel %vm3455, %v3464, %v3463
        %vm3466 = vcmp.lt.s32.totalorder %v3160, 0
        %v3467 = vsub.s32 0, %v3160
        %v3468 = vsel %vm3466, %v3467, %v3160
        %v3469 = vmul.u32.u64.compose %v3468, 3817748708
        %v3470 = vextract.low.u32 %v3469
        %v3471 = vextract.high.u32 %v3469
        %v3472 = vshrl.u32 %v3471, 4
        %v3473 = vmul.u32 %v3472, 18
        %v3474 = vsub.s32 %v3468, %v3473
        %v3475 = vsub.s32 0, %v3474
        %v3476 = vsel %vm3466, %v3475, %v3474
        %vm3477 = vcmp.lt.s32.totalorder %v3161, 0
        %v3478 = vsub.s32 0, %v3161
        %v3479 = vsel %vm3477, %v3478, %v3161
        %v3480 = vmul.u32.u64.compose %v3479, 3817748708
        %v3481 = vextract.low.u32 %v3480
        %v3482 = vextract.high.u32 %v3480
        %v3483 = vshrl.u32 %v3482, 4
        %v3484 = vmul.u32 %v3483, 18
        %v3485 = vsub.s32 %v3479, %v3484
        %v3486 = vsub.s32 0, %v3485
        %v3487 = vsel %vm3477, %v3486, %v3485
        %vm3488 = vcmp.lt.s32.totalorder %v3162, 0
        %v3489 = vsub.s32 0, %v3162
        %v3490 = vsel %vm3488, %v3489, %v3162
        %v3491 = vmul.u32.u64.compose %v3490, 3817748708
        %v3492 = vextract.low.u32 %v3491
        %v3493 = vextract.high.u32 %v3491
        %v3494 = vshrl.u32 %v3493, 4
        %v3495 = vmul.u32 %v3494, 18
        %v3496 = vsub.s32 %v3490, %v3495
        %v3497 = vsub.s32 0, %v3496
        %v3498 = vsel %vm3488, %v3497, %v3496
        %vm3499 = vcmp.lt.s32.totalorder %v3163, 0
        %v3500 = vsub.s32 0, %v3163
        %v3501 = vsel %vm3499, %v3500, %v3163
        %v3502 = vmul.u32.u64.compose %v3501, 3817748708
        %v3503 = vextract.low.u32 %v3502
        %v3504 = vextract.high.u32 %v3502
        %v3505 = vshrl.u32 %v3504, 4
        %v3506 = vmul.u32 %v3505, 18
        %v3507 = vsub.s32 %v3501, %v3506
        %v3508 = vsub.s32 0, %v3507
        %v3509 = vsel %vm3499, %v3508, %v3507
        %vm3510 = vcmp.lt.s32.totalorder %v3164, 0
        %v3511 = vsub.s32 0, %v3164
        %v3512 = vsel %vm3510, %v3511, %v3164
        %v3513 = vmul.u32.u64.compose %v3512, 3817748708
        %v3514 = vextract.low.u32 %v3513
        %v3515 = vextract.high.u32 %v3513
        %v3516 = vshrl.u32 %v3515, 4
        %v3517 = vmul.u32 %v3516, 18
        %v3518 = vsub.s32 %v3512, %v3517
        %v3519 = vsub.s32 0, %v3518
        %v3520 = vsel %vm3510, %v3519, %v3518
        %vm3521 = vcmp.lt.s32.totalorder %v3165, 0
        %v3522 = vsub.s32 0, %v3165
        %v3523 = vsel %vm3521, %v3522, %v3165
        %v3524 = vmul.u32.u64.compose %v3523, 3817748708
        %v3525 = vextract.low.u32 %v3524
        %v3526 = vextract.high.u32 %v3524
        %v3527 = vshrl.u32 %v3526, 4
        %v3528 = vmul.u32 %v3527, 18
        %v3529 = vsub.s32 %v3523, %v3528
        %v3530 = vsub.s32 0, %v3529
        %v3531 = vsel %vm3521, %v3530, %v3529
        %vm3532 = vcmp.lt.s32.totalorder %v3166, 0
        %v3533 = vsub.s32 0, %v3166
        %v3534 = vsel %vm3532, %v3533, %v3166
        %v3535 = vmul.u32.u64.compose %v3534, 3817748708
        %v3536 = vextract.low.u32 %v3535
        %v3537 = vextract.high.u32 %v3535
        %v3538 = vshrl.u32 %v3537, 4
        %v3539 = vmul.u32 %v3538, 18
        %v3540 = vsub.s32 %v3534, %v3539
        %v3541 = vsub.s32 0, %v3540
        %v3542 = vsel %vm3532, %v3541, %v3540
        %vm3543 = vcmp.lt.s32.totalorder %v3167, 0
        %v3544 = vsub.s32 0, %v3167
        %v3545 = vsel %vm3543, %v3544, %v3167
        %v3546 = vmul.u32.u64.compose %v3545, 3817748708
        %v3547 = vextract.low.u32 %v3546
        %v3548 = vextract.high.u32 %v3546
        %v3549 = vshrl.u32 %v3548, 4
        %v3550 = vmul.u32 %v3549, 18
        %v3551 = vsub.s32 %v3545, %v3550
        %v3552 = vsub.s32 0, %v3551
        %v3553 = vsel %vm3543, %v3552, %v3551
        %vm3554 = vcmp.lt.s32.totalorder %v3168, 0
        %v3555 = vsub.s32 0, %v3168
        %v3556 = vsel %vm3554, %v3555, %v3168
        %v3557 = vmul.u32.u64.compose %v3556, 3817748708
        %v3558 = vextract.low.u32 %v3557
        %v3559 = vextract.high.u32 %v3557
        %v3560 = vshrl.u32 %v3559, 4
        %v3561 = vmul.u32 %v3560, 18
        %v3562 = vsub.s32 %v3556, %v3561
        %v3563 = vsub.s32 0, %v3562
        %v3564 = vsel %vm3554, %v3563, %v3562
        %vm3565 = vcmp.ne.s32.totalorder %v3179, 0
        %vm3566 = vcmp.ne.s32.totalorder %v3190, 0
        %vm3567 = vcmp.ne.s32.totalorder %v3201, 0
        %vm3568 = vcmp.ne.s32.totalorder %v3212, 0
        %vm3569 = vcmp.ne.s32.totalorder %v3223, 0
        %vm3570 = vcmp.ne.s32.totalorder %v3234, 0
        %vm3571 = vcmp.ne.s32.totalorder %v3245, 0
        %vm3572 = vcmp.ne.s32.totalorder %v3256, 0
        %vm3573 = vcmp.ne.s32.totalorder %v3267, 0
        %vm3574 = vcmp.ne.s32.totalorder %v3278, 0
        %vm3575 = vcmp.ne.s32.totalorder %v3289, 0
        %vm3576 = vcmp.ne.s32.totalorder %v3300, 0
        %vm3577 = vcmp.ne.s32.totalorder %v3311, 0
        %vm3578 = vcmp.ne.s32.totalorder %v3322, 0
        %vm3579 = vcmp.ne.s32.totalorder %v3333, 0
        %vm3580 = vcmp.ne.s32.totalorder %v3344, 0
        %vm3581 = vcmp.ne.s32.totalorder %v3355, 0
        %vm3582 = vcmp.ne.s32.totalorder %v3366, 0
        %vm3583 = vcmp.ne.s32.totalorder %v3377, 0
        %vm3584 = vcmp.ne.s32.totalorder %v3388, 0
        %vm3585 = vcmp.ne.s32.totalorder %v3399, 0
        %vm3586 = vcmp.ne.s32.totalorder %v3410, 0
        %vm3587 = vcmp.ne.s32.totalorder %v3421, 0
        %vm3588 = vcmp.ne.s32.totalorder %v3432, 0
        %vm3589 = vcmp.ne.s32.totalorder %v3443, 0
        %vm3590 = vcmp.ne.s32.totalorder %v3454, 0
        %vm3591 = vcmp.ne.s32.totalorder %v3465, 0
        %vm3592 = vcmp.ne.s32.totalorder %v3476, 0
        %vm3593 = vcmp.ne.s32.totalorder %v3487, 0
        %vm3594 = vcmp.ne.s32.totalorder %v3498, 0
        %vm3595 = vcmp.ne.s32.totalorder %v3509, 0
        %vm3596 = vcmp.ne.s32.totalorder %v3520, 0
        %vm3597 = vcmp.ne.s32.totalorder %v3531, 0
        %vm3598 = vcmp.ne.s32.totalorder %v3542, 0
        %vm3599 = vcmp.ne.s32.totalorder %v3553, 0
        %vm3600 = vcmp.ne.s32.totalorder %v3564, 0
        %vm3601 = vcmp.lt.s32.totalorder %v3179, 0
        %vm3602 = vcmp.lt.s32.totalorder %v3190, 0
        %vm3603 = vcmp.lt.s32.totalorder %v3201, 0
        %vm3604 = vcmp.lt.s32.totalorder %v3212, 0
        %vm3605 = vcmp.lt.s32.totalorder %v3223, 0
        %vm3606 = vcmp.lt.s32.totalorder %v3234, 0
        %vm3607 = vcmp.lt.s32.totalorder %v3245, 0
        %vm3608 = vcmp.lt.s32.totalorder %v3256, 0
        %vm3609 = vcmp.lt.s32.totalorder %v3267, 0
        %vm3610 = vcmp.lt.s32.totalorder %v3278, 0
        %vm3611 = vcmp.lt.s32.totalorder %v3289, 0
        %vm3612 = vcmp.lt.s32.totalorder %v3300, 0
        %vm3613 = vcmp.lt.s32.totalorder %v3311, 0
        %vm3614 = vcmp.lt.s32.totalorder %v3322, 0
        %vm3615 = vcmp.lt.s32.totalorder %v3333, 0
        %vm3616 = vcmp.lt.s32.totalorder %v3344, 0
        %vm3617 = vcmp.lt.s32.totalorder %v3355, 0
        %vm3618 = vcmp.lt.s32.totalorder %v3366, 0
        %vm3619 = vcmp.lt.s32.totalorder %v3377, 0
        %vm3620 = vcmp.lt.s32.totalorder %v3388, 0
        %vm3621 = vcmp.lt.s32.totalorder %v3399, 0
        %vm3622 = vcmp.lt.s32.totalorder %v3410, 0
        %vm3623 = vcmp.lt.s32.totalorder %v3421, 0
        %vm3624 = vcmp.lt.s32.totalorder %v3432, 0
        %vm3625 = vcmp.lt.s32.totalorder %v3443, 0
        %vm3626 = vcmp.lt.s32.totalorder %v3454, 0
        %vm3627 = vcmp.lt.s32.totalorder %v3465, 0
        %vm3628 = vcmp.lt.s32.totalorder %v3476, 0
        %vm3629 = vcmp.lt.s32.totalorder %v3487, 0
        %vm3630 = vcmp.lt.s32.totalorder %v3498, 0
        %vm3631 = vcmp.lt.s32.totalorder %v3509, 0
        %vm3632 = vcmp.lt.s32.totalorder %v3520, 0
        %vm3633 = vcmp.lt.s32.totalorder %v3531, 0
        %vm3634 = vcmp.lt.s32.totalorder %v3542, 0
        %vm3635 = vcmp.lt.s32.totalorder %v3553, 0
        %vm3636 = vcmp.lt.s32.totalorder %v3564, 0
        %vm3637 = vmand %vm3601, %vm3565
        %vm3638 = vmand %vm3602, %vm3566
        %vm3639 = vmand %vm3603, %vm3567
        %vm3640 = vmand %vm3604, %vm3568
        %vm3641 = vmand %vm3605, %vm3569
        %vm3642 = vmand %vm3606, %vm3570
        %vm3643 = vmand %vm3607, %vm3571
        %vm3644 = vmand %vm3608, %vm3572
        %vm3645 = vmand %vm3609, %vm3573
        %vm3646 = vmand %vm3610, %vm3574
        %vm3647 = vmand %vm3611, %vm3575
        %vm3648 = vmand %vm3612, %vm3576
        %vm3649 = vmand %vm3613, %vm3577
        %vm3650 = vmand %vm3614, %vm3578
        %vm3651 = vmand %vm3615, %vm3579
        %vm3652 = vmand %vm3616, %vm3580
        %vm3653 = vmand %vm3617, %vm3581
        %vm3654 = vmand %vm3618, %vm3582
        %vm3655 = vmand %vm3619, %vm3583
        %vm3656 = vmand %vm3620, %vm3584
        %vm3657 = vmand %vm3621, %vm3585
        %vm3658 = vmand %vm3622, %vm3586
        %vm3659 = vmand %vm3623, %vm3587
        %vm3660 = vmand %vm3624, %vm3588
        %vm3661 = vmand %vm3625, %vm3589
        %vm3662 = vmand %vm3626, %vm3590
        %vm3663 = vmand %vm3627, %vm3591
        %vm3664 = vmand %vm3628, %vm3592
        %vm3665 = vmand %vm3629, %vm3593
        %vm3666 = vmand %vm3630, %vm3594
        %vm3667 = vmand %vm3631, %vm3595
        %vm3668 = vmand %vm3632, %vm3596
        %vm3669 = vmand %vm3633, %vm3597
        %vm3670 = vmand %vm3634, %vm3598
        %vm3671 = vmand %vm3635, %vm3599
        %vm3672 = vmand %vm3636, %vm3600
        %v3673 = vadd.s32 %v3179, 18
        %v3674 = vadd.s32 %v3190, 18
        %v3675 = vadd.s32 %v3201, 18
        %v3676 = vadd.s32 %v3212, 18
        %v3677 = vadd.s32 %v3223, 18
        %v3678 = vadd.s32 %v3234, 18
        %v3679 = vadd.s32 %v3245, 18
        %v3680 = vadd.s32 %v3256, 18
        %v3681 = vadd.s32 %v3267, 18
        %v3682 = vadd.s32 %v3278, 18
        %v3683 = vadd.s32 %v3289, 18
        %v3684 = vadd.s32 %v3300, 18
        %v3685 = vadd.s32 %v3311, 18
        %v3686 = vadd.s32 %v3322, 18
        %v3687 = vadd.s32 %v3333, 18
        %v3688 = vadd.s32 %v3344, 18
        %v3689 = vadd.s32 %v3355, 18
        %v3690 = vadd.s32 %v3366, 18
        %v3691 = vadd.s32 %v3377, 18
        %v3692 = vadd.s32 %v3388, 18
        %v3693 = vadd.s32 %v3399, 18
        %v3694 = vadd.s32 %v3410, 18
        %v3695 = vadd.s32 %v3421, 18
        %v3696 = vadd.s32 %v3432, 18
        %v3697 = vadd.s32 %v3443, 18
        %v3698 = vadd.s32 %v3454, 18
        %v3699 = vadd.s32 %v3465, 18
        %v3700 = vadd.s32 %v3476, 18
        %v3701 = vadd.s32 %v3487, 18
        %v3702 = vadd.s32 %v3498, 18
        %v3703 = vadd.s32 %v3509, 18
        %v3704 = vadd.s32 %v3520, 18
        %v3705 = vadd.s32 %v3531, 18
        %v3706 = vadd.s32 %v3542, 18
        %v3707 = vadd.s32 %v3553, 18
        %v3708 = vadd.s32 %v3564, 18
        %v3709 = vsel %vm3637, %v3673, %v3179
        %v3710 = vsel %vm3638, %v3674, %v3190
        %v3711 = vsel %vm3639, %v3675, %v3201
        %v3712 = vsel %vm3640, %v3676, %v3212
        %v3713 = vsel %vm3641, %v3677, %v3223
        %v3714 = vsel %vm3642, %v3678, %v3234
        %v3715 = vsel %vm3643, %v3679, %v3245
        %v3716 = vsel %vm3644, %v3680, %v3256
        %v3717 = vsel %vm3645, %v3681, %v3267
        %v3718 = vsel %vm3646, %v3682, %v3278
        %v3719 = vsel %vm3647, %v3683, %v3289
        %v3720 = vsel %vm3648, %v3684, %v3300
        %v3721 = vsel %vm3649, %v3685, %v3311
        %v3722 = vsel %vm3650, %v3686, %v3322
        %v3723 = vsel %vm3651, %v3687, %v3333
        %v3724 = vsel %vm3652, %v3688, %v3344
        %v3725 = vsel %vm3653, %v3689, %v3355
        %v3726 = vsel %vm3654, %v3690, %v3366
        %v3727 = vsel %vm3655, %v3691, %v3377
        %v3728 = vsel %vm3656, %v3692, %v3388
        %v3729 = vsel %vm3657, %v3693, %v3399
        %v3730 = vsel %vm3658, %v3694, %v3410
        %v3731 = vsel %vm3659, %v3695, %v3421
        %v3732 = vsel %vm3660, %v3696, %v3432
        %v3733 = vsel %vm3661, %v3697, %v3443
        %v3734 = vsel %vm3662, %v3698, %v3454
        %v3735 = vsel %vm3663, %v3699, %v3465
        %v3736 = vsel %vm3664, %v3700, %v3476
        %v3737 = vsel %vm3665, %v3701, %v3487
        %v3738 = vsel %vm3666, %v3702, %v3498
        %v3739 = vsel %vm3667, %v3703, %v3509
        %v3740 = vsel %vm3668, %v3704, %v3520
        %v3741 = vsel %vm3669, %v3705, %v3531
        %v3742 = vsel %vm3670, %v3706, %v3542
        %v3743 = vsel %vm3671, %v3707, %v3553
        %v3744 = vsel %vm3672, %v3708, %v3564
        %vm3745 = vcmp.lt.s32.totalorder %v3709, 16
        %vm3746 = vcmp.lt.s32.totalorder %v3710, 16
        %vm3747 = vcmp.lt.s32.totalorder %v3711, 16
        %vm3748 = vcmp.lt.s32.totalorder %v3712, 16
        %vm3749 = vcmp.lt.s32.totalorder %v3713, 16
        %vm3750 = vcmp.lt.s32.totalorder %v3714, 16
        %vm3751 = vcmp.lt.s32.totalorder %v3715, 16
        %vm3752 = vcmp.lt.s32.totalorder %v3716, 16
        %vm3753 = vcmp.lt.s32.totalorder %v3717, 16
        %vm3754 = vcmp.lt.s32.totalorder %v3718, 16
        %vm3755 = vcmp.lt.s32.totalorder %v3719, 16
        %vm3756 = vcmp.lt.s32.totalorder %v3720, 16
        %vm3757 = vcmp.lt.s32.totalorder %v3721, 16
        %vm3758 = vcmp.lt.s32.totalorder %v3722, 16
        %vm3759 = vcmp.lt.s32.totalorder %v3723, 16
        %vm3760 = vcmp.lt.s32.totalorder %v3724, 16
        %vm3761 = vcmp.lt.s32.totalorder %v3725, 16
        %vm3762 = vcmp.lt.s32.totalorder %v3726, 16
        %vm3763 = vcmp.lt.s32.totalorder %v3727, 16
        %vm3764 = vcmp.lt.s32.totalorder %v3728, 16
        %vm3765 = vcmp.lt.s32.totalorder %v3729, 16
        %vm3766 = vcmp.lt.s32.totalorder %v3730, 16
        %vm3767 = vcmp.lt.s32.totalorder %v3731, 16
        %vm3768 = vcmp.lt.s32.totalorder %v3732, 16
        %vm3769 = vcmp.lt.s32.totalorder %v3733, 16
        %vm3770 = vcmp.lt.s32.totalorder %v3734, 16
        %vm3771 = vcmp.lt.s32.totalorder %v3735, 16
        %vm3772 = vcmp.lt.s32.totalorder %v3736, 16
        %vm3773 = vcmp.lt.s32.totalorder %v3737, 16
        %vm3774 = vcmp.lt.s32.totalorder %v3738, 16
        %vm3775 = vcmp.lt.s32.totalorder %v3739, 16
        %vm3776 = vcmp.lt.s32.totalorder %v3740, 16
        %vm3777 = vcmp.lt.s32.totalorder %v3741, 16
        %vm3778 = vcmp.lt.s32.totalorder %v3742, 16
        %vm3779 = vcmp.lt.s32.totalorder %v3743, 16
        %vm3780 = vcmp.lt.s32.totalorder %v3744, 16
        %v3781 = vsel %vm3745, %v3096, 0.0
        %v3782 = vsel %vm3746, %v3097, 0.0
        %v3783 = vsel %vm3747, %v3098, 0.0
        %v3784 = vsel %vm3748, %v3099, 0.0
        %v3785 = vsel %vm3749, %v3100, 0.0
        %v3786 = vsel %vm3750, %v3101, 0.0
        %v3787 = vsel %vm3751, %v3102, 0.0
        %v3788 = vsel %vm3752, %v3103, 0.0
        %v3789 = vsel %vm3753, %v3104, 0.0
        %v3790 = vsel %vm3754, %v3105, 0.0
        %v3791 = vsel %vm3755, %v3106, 0.0
        %v3792 = vsel %vm3756, %v3107, 0.0
        %v3793 = vsel %vm3757, %v3108, 0.0
        %v3794 = vsel %vm3758, %v3109, 0.0
        %v3795 = vsel %vm3759, %v3110, 0.0
        %v3796 = vsel %vm3760, %v3111, 0.0
        %v3797 = vsel %vm3761, %v3112, 0.0
        %v3798 = vsel %vm3762, %v3113, 0.0
        %v3799 = vsel %vm3763, %v3114, 0.0
        %v3800 = vsel %vm3764, %v3115, 0.0
        %v3801 = vsel %vm3765, %v3116, 0.0
        %v3802 = vsel %vm3766, %v3117, 0.0
        %v3803 = vsel %vm3767, %v3118, 0.0
        %v3804 = vsel %vm3768, %v3119, 0.0
        %v3805 = vsel %vm3769, %v3120, 0.0
        %v3806 = vsel %vm3770, %v3121, 0.0
        %v3807 = vsel %vm3771, %v3122, 0.0
        %v3808 = vsel %vm3772, %v3123, 0.0
        %v3809 = vsel %vm3773, %v3124, 0.0
        %v3810 = vsel %vm3774, %v3125, 0.0
        %v3811 = vsel %vm3775, %v3126, 0.0
        %v3812 = vsel %vm3776, %v3127, 0.0
        %v3813 = vsel %vm3777, %v3128, 0.0
        %v3814 = vsel %vm3778, %v3129, 0.0
        %v3815 = vsel %vm3779, %v3130, 0.0
        %v3816 = vsel %vm3780, %v3131, 0.0
        %v3817 = vadd.f32 %v3781, %v3782
        %v3818 = vadd.f32 %v3817, %v3783
        %v3819 = vadd.f32 %v3818, %v3784
        %v3820 = vadd.f32 %v3819, %v3785
        %v3821 = vadd.f32 %v3820, %v3786
        %v3822 = vadd.f32 %v3821, %v3787
        %v3823 = vadd.f32 %v3822, %v3788
        %v3824 = vadd.f32 %v3823, %v3789
        %v3825 = vadd.f32 %v3824, %v3790
        %v3826 = vadd.f32 %v3825, %v3791
        %v3827 = vadd.f32 %v3826, %v3792
        %v3828 = vadd.f32 %v3827, %v3793
        %v3829 = vadd.f32 %v3828, %v3794
        %v3830 = vadd.f32 %v3829, %v3795
        %v3831 = vadd.f32 %v3830, %v3796
        %v3832 = vadd.f32 %v3831, %v3797
        %v3833 = vadd.f32 %v3832, %v3798
        %v3834 = vadd.f32 %v3833, %v3799
        %v3835 = vadd.f32 %v3834, %v3800
        %v3836 = vadd.f32 %v3835, %v3801
        %v3837 = vadd.f32 %v3836, %v3802
        %v3838 = vadd.f32 %v3837, %v3803
        %v3839 = vadd.f32 %v3838, %v3804
        %v3840 = vadd.f32 %v3839, %v3805
        %v3841 = vadd.f32 %v3840, %v3806
        %v3842 = vadd.f32 %v3841, %v3807
        %v3843 = vadd.f32 %v3842, %v3808
        %v3844 = vadd.f32 %v3843, %v3809
        %v3845 = vadd.f32 %v3844, %v3810
        %v3846 = vadd.f32 %v3845, %v3811
        %v3847 = vadd.f32 %v3846, %v3812
        %v3848 = vadd.f32 %v3847, %v3813
        %v3849 = vadd.f32 %v3848, %v3814
        %v3850 = vadd.f32 %v3849, %v3815
        %v3851 = vadd.f32 %v3850, %v3816
        %v3852 = vrot.slane %v3851, 4
        %v3853 = vadd.f32 %v3851, %v3852
        %v3854 = vrot.slane %v3853, 2
        %v3855 = vadd.f32 %v3853, %v3854
        %v3856 = vrot.slane %v3855, 1
        %v3857 = vadd.f32 %v3855, %v3856
        %v3858 = vmul.f32 %v3857, 0.00390625
        %3859 = vst [vmem:[%s247] sm:$0x1] %v3858
        %v3860 = vpack.c.bf16 %v3858, %v3858
        %v3861 = vld [vmem:[%s3] sm:$0xf]
        %v3862 = vld [vmem:[%s3 + $0x4] sm:$0xf]
        %v3863 = vld [vmem:[%s3 + $0x8] sm:$0xf]
        %v3864 = vld [vmem:[%s3 + $0xc] sm:$0xf]
        %v3865 = vld [vmem:[%s3 + $0x10] sm:$0xf]
        %v3866 = vld [vmem:[%s3 + $0x14] sm:$0xf]
        %v3867 = vld [vmem:[%s3 + $0x18] sm:$0xf]
        %v3868 = vld [vmem:[%s3 + $0x1c] sm:$0xf]
        %v3869 = vld [vmem:[%s3 + $0x20] sm:$0xf]
        %v3870 = vld [vmem:[%s3 + $0x24] sm:$0xf]
        %v3871 = vld [vmem:[%s3 + $0x28] sm:$0xf]
        %v3872 = vld [vmem:[%s3 + $0x2c] sm:$0xf]
        %v3873 = vld [vmem:[%s3 + $0x30] sm:$0xf]
        %v3874 = vld [vmem:[%s3 + $0x34] sm:$0xf]
        %v3875 = vld [vmem:[%s3 + $0x38] sm:$0xf]
        %v3876 = vld [vmem:[%s3 + $0x3c] sm:$0xf]
        %v3877 = vld [vmem:[%s4] sm:$0x1]
        %v3894 = vunpack.c.l.b16 %v3861
        %v3895 = vunpack.c.l.b16 %v3862
        %v3896 = vunpack.c.l.b16 %v3863
        %v3897 = vunpack.c.l.b16 %v3864
        %v3898 = vunpack.c.l.b16 %v3865
        %v3899 = vunpack.c.l.b16 %v3866
        %v3900 = vunpack.c.l.b16 %v3867
        %v3901 = vunpack.c.l.b16 %v3868
        %v3902 = vunpack.c.l.b16 %v3869
        %v3903 = vunpack.c.l.b16 %v3870
        %v3904 = vunpack.c.l.b16 %v3871
        %v3905 = vunpack.c.l.b16 %v3872
        %v3906 = vunpack.c.l.b16 %v3873
        %v3907 = vunpack.c.l.b16 %v3874
        %v3908 = vunpack.c.l.b16 %v3875
        %v3909 = vunpack.c.l.b16 %v3876
        %v3910 = vpack.c.b16 %v3895, %v3894
        %v3911 = vpack.c.b16 %v3897, %v3896
        %v3912 = vpack.c.b16 %v3899, %v3898
        %v3913 = vpack.c.b16 %v3901, %v3900
        %v3914 = vpack.c.b16 %v3903, %v3902
        %v3915 = vpack.c.b16 %v3905, %v3904
        %v3916 = vpack.c.b16 %v3907, %v3906
        %v3917 = vpack.c.b16 %v3909, %v3908
        %3926 = vmatprep.subr.bf16.mxu0 0
        %3927 = vmatpush1.bf16.msra.mxu0 %v3910
        %3928 = vmatprep.subr.bf16.mxu0 0
        %3929 = vmatpush1.bf16.msra.mxu0 %v3911
        %3930 = vmatprep.subr.bf16.mxu0 0
        %3931 = vmatpush1.bf16.msra.mxu0 %v3912
        %3932 = vmatprep.subr.bf16.mxu0 0
        %3933 = vmatpush1.bf16.msra.mxu0 %v3913
        %3934 = vmatprep.subr.bf16.mxu0 0
        %3935 = vmatpush1.bf16.msra.mxu0 %v3914
        %3936 = vmatprep.subr.bf16.mxu0 0
        %3937 = vmatpush1.bf16.msra.mxu0 %v3915
        %3938 = vmatprep.subr.bf16.mxu0 0
        %3939 = vmatpush1.bf16.msra.mxu0 %v3916
        %3940 = vmatprep.subr.bf16.mxu0 0
        %3941 = vmatpush1.bf16.msra.mxu0 %v3917
        %3942 = vmatprep.subr.bf16.mxu0 0
        %3943 = vmatpush1.bf16.msra.mxu0 0
        %3944 = vmatprep.subr.bf16.mxu0 0
        %3945 = vmatpush1.bf16.msra.mxu0 0
        %3946 = vmatprep.subr.bf16.mxu0 0
        %3947 = vmatpush1.bf16.msra.mxu0 0
        %3948 = vmatprep.subr.bf16.mxu0 0
        %3949 = vmatpush1.bf16.msra.mxu0 0
        %3950 = vmatprep.subr.bf16.mxu0 0
        %3951 = vmatpush1.bf16.msra.mxu0 0
        %3952 = vmatprep.subr.bf16.mxu0 0
        %3953 = vmatpush1.bf16.msra.mxu0 0
        %3954 = vmatprep.subr.bf16.mxu0 0
        %3955 = vmatpush1.bf16.msra.mxu0 0
        %3956 = vmatprep.subr.bf16.mxu0 0
        %3957 = vmatpush1.bf16.msra.mxu0 0
        %3958 = vmatprep.mubr.bf16.mxu0 0
        %3959 = vmatmul.mubr.bf16.gmra.mrb[0].mxu0 %v3860
        %v3960 = vpop.f32.mrb[0].mxu0
        %v3961 = vadd.f32 %v3877, %v3960
        %v3962 = vpop.f32.mrb[0].mxu0
        %v3963 = vpop.f32.mrb[0].mxu0
        %v3964 = vpop.f32.mrb[0].mxu0
        %3965 = vdwg.mxu0
        %3966 = vst [vmem:[%s253] sm:$0x1] %v3961
        %s3967 = sand.u32 %s142, 1
        %s3968 = scalar_lea.sflag [#allocation3], %s3967
        %s3969 = sand.u32 %s142, 1
        %s3970 = scalar_lea.vmem [#allocation2], %s3969
        %s3971 = sand.u32 %s168, 1
        %s3972 = scalar_lea.sflag [#allocation5], %s3971
        %s3973 = sand.u32 %s168, 1
        %s3974 = scalar_lea.vmem [#allocation4], %s3973
        // Predicated region
        $region41: #{iclassifier_forward.1} parent=39 // pred_check
          %p3975 = pneg %p152
        $region42: #{iclassifier_forward.1} parent=39 // pred_check_branch
          %3977 = sbr.rel (%p3975) target = $region44
        $region43: #{iclassifier_forward.1} parent=39 // pred_region
          %s3979 = ssub.s32 16, 16
          %3980 = vsyncadd %s3968, %s3979
          %s3981 = smul.addr %s24, 16
          %s3982 = scalar_lea.hbm %s5, %s3981
          %s3984 = sshll.u32 %s3970, 4
          %s3985 = int_to_ptr.vmem [resolvable:$true] %s3984
          %3987 = dma.vmem_to_hbm [thread:$0]  %s3985, 16, %s3982, %s3968
        $region44: #{iclassifier_forward.1} parent=39 // pred_fallthru
          _
        // Predicated region
        $region45: #{iclassifier_forward.1} parent=39 // pred_check
          %p3988 = pneg %p178
        $region46: #{iclassifier_forward.1} parent=39 // pred_check_branch
          %3990 = sbr.rel (%p3988) target = $region48
        $region47: #{iclassifier_forward.1} parent=39 // pred_region
          %s3992 = ssub.s32 16, 16
          %3993 = vsyncadd %s3972, %s3992
          %s3994 = smul.addr %s24, 16
          %s3995 = scalar_lea.hbm %s6, %s3994
          %s3997 = sshll.u32 %s3974, 4
          %s3998 = int_to_ptr.vmem [resolvable:$true] %s3997
          %4000 = dma.vmem_to_hbm [thread:$0]  %s3998, 16, %s3995, %s3972
        $region48: #{iclassifier_forward.1} parent=39 // pred_fallthru
          _
      $region40: #{iclassifier_forward.1} parent=5 // pred_fallthru
        _
      %p4001 = scmp.le.s32.totalorder 2, %s19
      // Predicated region
      $region49: #{iclassifier_forward.1} parent=5 // pred_check
        %p4002 = pneg %p4001
      $region50: #{iclassifier_forward.1} parent=5 // pred_check_branch
        %4004 = sbr.rel (%p4002) target = $region52
      $region51: #{iclassifier_forward.1} parent=5 // pred_region
        %s4005 = ssub.s32 %s19, 2
        // Predicated region
        $region53: #{iclassifier_forward.1} parent=51 // pred_check
          %p4006 = pneg %p158
        $region54: #{iclassifier_forward.1} parent=51 // pred_check_branch
          %4008 = sbr.rel (%p4006) target = $region56
        $region55: #{iclassifier_forward.1} parent=51 // pred_region
          %s4009 = sand.u32 %s143, 1
          %s4010 = scalar_lea.sflag [#allocation3], %s4009
          %s4011 = sand.u32 %s143, 1
          %s4012 = scalar_lea.vmem [#allocation2], %s4011
          %4013 = dma.done %s4010, 16
        $region56: #{iclassifier_forward.1} parent=51 // pred_fallthru
          _
        // Predicated region
        $region57: #{iclassifier_forward.1} parent=51 // pred_check
          %p4014 = pneg %p184
        $region58: #{iclassifier_forward.1} parent=51 // pred_check_branch
          %4016 = sbr.rel (%p4014) target = $region60
        $region59: #{iclassifier_forward.1} parent=51 // pred_region
          %s4017 = sand.u32 %s169, 1
          %s4018 = scalar_lea.sflag [#allocation5], %s4017
          %s4019 = sand.u32 %s169, 1
          %s4020 = scalar_lea.vmem [#allocation4], %s4019
          %4021 = dma.done %s4018, 16
        $region60: #{iclassifier_forward.1} parent=51 // pred_fallthru
          _
      $region52: #{iclassifier_forward.1} parent=5 // pred_fallthru
        _
    $region6: #{iclassifier_forward.1} parent=1 // loop_footer
      %s23 = sadd.s32 1, %s19
    $region7: #{iclassifier_forward.1} parent=1 // loop_footer_branch
      %18 = sbr.rel target = $region3
    $region8: #{iclassifier_forward.1} parent=1 // loop_exit
      _
    %4022 = vsyncpa [#allocation3], 1
    %s4023 = scalar_lea.sflag [#allocation3], 1
    %4024 = vsyncpa %s4023, 1
    %4025 = vsyncpa [#allocation5], 1
    %s4026 = scalar_lea.sflag [#allocation5], 1
    %4027 = vsyncpa %s4026, 1

</llo_original>
